<compile_context>
chip_gen: v7x
topology: tpu7x:2x2x1
jax: 0.10.0
libtpu: 0.0.40
codegen_flags: <defaults>
</compile_context>

<pallas_src>
import functools

import jax
import jax.numpy as jnp
from jax.experimental import pallas as pl
from jax.experimental.pallas import tpu as pltpu


# ----------------------------- kernel helpers ------------------------------ #

def _layernorm(x, w, b, eps=1e-5):
    mu = jnp.mean(x, axis=-1, keepdims=True)
    xc = x - mu
    var = jnp.mean(xc * xc, axis=-1, keepdims=True)
    return xc * jax.lax.rsqrt(var + eps) * w + b


def _gelu(x):
    # TODO(synk): timm nn.GELU defaults to exact erf; tanh approximation is
    # used here (and in the reference) since erf lowering is not guaranteed.
    return jax.nn.gelu(x, approximate=True)


# ----------------------------- fused kernel -------------------------------- #

def fused_encoder_kernel(h_ref,
                         ln1_w_ref, ln1_b_ref,
                         qkv_w_ref,
                         proj_w_ref, proj_b_ref,
                         ln2_w_ref, ln2_b_ref,
                         fc1_w_ref, fc1_b_ref,
                         fc2_w_ref, fc2_b_ref,
                         out_ref, res_ref,
                         *, n_head, head_dim, q_len):
    """Applies block `layer = program_id(1)` to a (Bt, S, D) batch block whose
    f32 residual lives in `res_ref` (VMEM scratch) across the depth axis."""
    layer = pl.program_id(1)
    Bt, S, D = res_ref.shape
    H, d = n_head, head_dim

    # Layer 0 of each batch block: pull the activation tile into the resident
    # f32 residual scratch.
    @pl.when(layer == 0)
    def _():
        res_ref[...] = h_ref[...].astype(jnp.float32)

    x = res_ref[...].reshape(Bt * S, D)              # flat rows for linear layers

    # ---------------- attention branch (pre-LN) ----------------
    xn = _layernorm(x, ln1_w_ref[0], ln1_b_ref[0])
    # scale (head_dim**-0.5) is pre-folded into the q columns of qkv_w.
    qkv = jnp.dot(xn.astype(jnp.bfloat16), qkv_w_ref[0],
                  preferred_element_type=jnp.float32)          # (Bt*S, 3D) f32
    q = qkv[:, 0 * D:1 * D].astype(jnp.bfloat16)
    k = qkv[:, 1 * D:2 * D].astype(jnp.bfloat16)
    v = qkv[:, 2 * D:3 * D].astype(jnp.bfloat16)

    # Per-sample attention; all heads in one batched MXU einsum (single leading
    # batch dim = documented-supported dot_general form). Bt is a small static
    # int, so the Python loop fully unrolls.
    # TODO(synk): fold the head transposes / head-merge directly into the
    # einsums ('qhd,khd->hqk', 'hqd,hdn->qn') once Mosaic dot_general support
    # for non-leading batch / multi-contracting dims is verified; that removes
    # 3-4 XLU relayouts per layer.
    outs = []
    for b in range(Bt):
        rows = slice(b * S, (b + 1) * S)
        qb = jnp.transpose(q[rows].reshape(S, H, d), (1, 0, 2))   # (H, S, d)
        kb = jnp.transpose(k[rows].reshape(S, H, d), (1, 0, 2))
        vb = jnp.transpose(v[rows].reshape(S, H, d), (1, 0, 2))
        s = jnp.einsum('hqd,hkd->hqk', qb, kb,
                       preferred_element_type=jnp.float32)        # (H, S, S)
        s = s - jnp.max(s, axis=-1, keepdims=True)
        e = jnp.exp(s)
        # approx reciprocal -> EUP slot; ~1e-3 relative error (inference).
        a = e * pl.reciprocal(jnp.sum(e, axis=-1, keepdims=True), approx=True)
        ob = jnp.einsum('hqk,hkd->hqd', a.astype(jnp.bfloat16), vb,
                        preferred_element_type=jnp.float32)       # (H, S, d)
        outs.append(jnp.transpose(ob, (1, 0, 2)).reshape(S, D))
    # TODO(synk): for S >> ViT scale, tile the key axis flash-style instead of
    # materializing the full (H, S, S) f32 score tensor.
    attn = jnp.concatenate(outs, axis=0) if Bt > 1 else outs[0]   # (Bt*S, D)

    attn = jnp.dot(attn.astype(jnp.bfloat16), proj_w_ref[0],
                   preferred_element_type=jnp.float32) + proj_b_ref[0]
    x = x + attn

    # ---------------- MLP branch (pre-LN, ratio 4) ----------------
    # TODO(synk): on v7x / ViT-Large scale, stream fc1/fc2 over the 4*D hidden
    # dim (emit_pipeline or Buffered(1) specs) instead of holding them in VMEM.
    xn2 = _layernorm(x, ln2_w_ref[0], ln2_b_ref[0])
    hdn = jnp.dot(xn2.astype(jnp.bfloat16), fc1_w_ref[0],
                  preferred_element_type=jnp.float32) + fc1_b_ref[0]
    hdn = _gelu(hdn)
    mlp = jnp.dot(hdn.astype(jnp.bfloat16), fc2_w_ref[0],
                  preferred_element_type=jnp.float32) + fc2_b_ref[0]
    x = x + mlp

    res_ref[...] = x.reshape(Bt, S, D)

    # Final layer: emit only the query rows; the context rows are discarded by
    # the module, so skipping them cuts output HBM writeback by (S-q_len)/S.
    @pl.when(layer == pl.num_programs(1) - 1)
    def _():
        out_ref[...] = x.reshape(Bt, S, D)[:, S - q_len:, :].astype(out_ref.dtype)


# ----------------------------- wrapper -------------------------------------- #

def _stack_params(params, dim, head_dim, matmul_dtype=jnp.bfloat16):
    """Stack per-layer params with a leading depth axis; matmul weights bf16;
    attention scale folded into the q columns of qkv_w."""
    def stack(name):
        return jnp.stack([p[name] for p in params], axis=0)
    qkv_w = stack("qkv_w")
    qkv_w = qkv_w.at[:, :, :dim].multiply(head_dim ** -0.5)   # fold q scale
    return {
        "ln1_w": stack("ln1_w"), "ln1_b": stack("ln1_b"),
        "qkv_w": qkv_w.astype(matmul_dtype),
        "proj_w": stack("proj_w").astype(matmul_dtype), "proj_b": stack("proj_b"),
        "ln2_w": stack("ln2_w"), "ln2_b": stack("ln2_b"),
        "fc1_w": stack("fc1_w").astype(matmul_dtype), "fc1_b": stack("fc1_b"),
        "fc2_w": stack("fc2_w").astype(matmul_dtype), "fc2_b": stack("fc2_b"),
    }


def _pick_batch_block(batch, requested=None):
    if requested is not None:
        assert batch % requested == 0, (batch, requested)
        return requested
    # Amortize weight DMA over Bt samples while keeping >= 2 batch blocks so
    # the "parallel" axis can shard across v7x's two TensorCores.
    for bt in (8, 4, 2):
        if batch % bt == 0 and batch // bt >= 2:
            return bt
    return 1


def _pick_vmem_limit_bytes():
    # Explicit scoped-VMEM limit: the double-buffered bf16 per-layer weight set
    # (~28 MiB at ViT-Base) exceeds the defaults (16 MiB v5e / 32 MiB v6e,v7x).
    try:
        cap = int(pltpu.get_tpu_info().vmem_capacity_bytes)
    except Exception:
        cap = 128 * 1024 * 1024
    return max(32 << 20, min(cap - (8 << 20), 112 << 20))


def transformer_encoder_parallel(context, query, params, *, n_head, head_dim,
                                 batch_block=None, mlp_buffers=None):
    """Mirrors TransformerEncoderParallel.forward (all blocks in one kernel)."""
    qlen = query.shape[1]
    h = jnp.concatenate([context, query], axis=1)        # (B, S, D)
    B, S, D = h.shape
    assert n_head * head_dim == D, (n_head, head_dim, D)
    depth = len(params)
    Bt = _pick_batch_block(B, batch_block)
    sp = _stack_params(params, D, head_dim)

    kern = functools.partial(fused_encoder_kernel, n_head=n_head,
                             head_dim=head_dim, q_len=qlen)

    def wspec(arr, buffers=None):
        # Per-layer weight block: index changes along the depth axis, so the
        # pipeline multi-buffers it (next layer's DMA overlaps this layer).
        kwargs = {}
        if buffers is not None:
            kwargs["pipeline_mode"] = pl.Buffered(buffers)
        return pl.BlockSpec((1,) + tuple(arr.shape[1:]),
                            lambda b, l: (l, 0, 0), **kwargs)

    in_specs = [
        pl.BlockSpec((Bt, S, D), lambda b, l: (b, 0, 0)),   # h (read at layer 0)
        wspec(sp["ln1_w"]), wspec(sp["ln1_b"]),             # ln1 w, b
        wspec(sp["qkv_w"]),                                 # qkv weight (no bias)
        wspec(sp["proj_w"]), wspec(sp["proj_b"]),           # proj w, b
        wspec(sp["ln2_w"]), wspec(sp["ln2_b"]),             # ln2 w, b
        wspec(sp["fc1_w"], mlp_buffers), wspec(sp["fc1_b"]),
        wspec(sp["fc2_w"], mlp_buffers), wspec(sp["fc2_b"]),
    ]

    out = pl.pallas_call(
        kern,
        out_shape=jax.ShapeDtypeStruct((B, qlen, D), h.dtype),
        grid=(B // Bt, depth),
        in_specs=in_specs,
        # Same block index across depth => output block only written back once
        # per batch block (and only the query rows exist at all).
        out_specs=pl.BlockSpec((Bt, qlen, D), lambda b, l: (b, 0, 0)),
        scratch_shapes=[pltpu.VMEM((Bt, S, D), jnp.float32)],   # resident residual
        compiler_params=pltpu.CompilerParams(
            dimension_semantics=("parallel", "arbitrary"),
            vmem_limit_bytes=_pick_vmem_limit_bytes()),
    )(h, sp["ln1_w"], sp["ln1_b"], sp["qkv_w"], sp["proj_w"], sp["proj_b"],
      sp["ln2_w"], sp["ln2_b"], sp["fc1_w"], sp["fc1_b"], sp["fc2_w"],
      sp["fc2_b"])
    return out


# ----------------------------- params / reference -------------------------- #

def init_params(key, dim, depth):
    params = []
    for _ in range(depth):
        key, k0, k1, k2, k3 = jax.random.split(key, 5)
        params.append({
            "ln1_w": jnp.ones((1, dim), jnp.float32),
            "ln1_b": jnp.zeros((1, dim), jnp.float32),
            "qkv_w": 0.02 * jax.random.normal(k0, (dim, 3 * dim), jnp.float32),
            "proj_w": 0.02 * jax.random.normal(k1, (dim, dim), jnp.float32),
            "proj_b": jnp.zeros((1, dim), jnp.float32),
            "ln2_w": jnp.ones((1, dim), jnp.float32),
            "ln2_b": jnp.zeros((1, dim), jnp.float32),
            "fc1_w": 0.02 * jax.random.normal(k2, (dim, 4 * dim), jnp.float32),
            "fc1_b": jnp.zeros((1, 4 * dim), jnp.float32),
            "fc2_w": 0.02 * jax.random.normal(k3, (4 * dim, dim), jnp.float32),
            "fc2_b": jnp.zeros((1, dim), jnp.float32),
        })
    return params


def reference_forward(context, query, params, *, n_head, head_dim):
    """Pure-JAX f32 reference matching the PyTorch forward (qkv_bias=False)."""
    qlen = query.shape[1]
    h = jnp.concatenate([context, query], axis=1)
    B, S, D = h.shape
    scale = head_dim ** -0.5
    for p in params:
        xn = _layernorm(h, p["ln1_w"][0], p["ln1_b"][0])
        qkv = xn @ p["qkv_w"]                                   # (B,S,3D)
        q, k, v = jnp.split(qkv, 3, axis=-1)
        q = q.reshape(B, S, n_head, head_dim).transpose(0, 2, 1, 3) * scale
        k = k.reshape(B, S, n_head, head_dim).transpose(0, 2, 1, 3)
        v = v.reshape(B, S, n_head, head_dim).transpose(0, 2, 1, 3)
        s = jnp.einsum("bhqd,bhkd->bhqk", q, k)
        a = jax.nn.softmax(s, axis=-1)
        o = jnp.einsum("bhqk,bhkd->bhqd", a, v)
        o = o.transpose(0, 2, 1, 3).reshape(B, S, D)
        h = h + o @ p["proj_w"] + p["proj_b"][0]
        xn2 = _layernorm(h, p["ln2_w"][0], p["ln2_b"][0])
        m = _gelu(xn2 @ p["fc1_w"] + p["fc1_b"][0]) @ p["fc2_w"] + p["fc2_b"][0]
        h = h + m
    return h[:, -qlen:, :]


# ----------------------------- main ---------------------------------------- #

if __name__ == "__main__":
    # NOTE: these toy shapes are for correctness only; tune/benchmark at real
    # ViT shapes (D=768+, S~197, head_dim=64) — toy shapes are fully padded.
    dim, depth, n_head, head_dim = 32, 2, 4, 8
    batch, ctx_len, qry_len = 4, 8, 8

    key = jax.random.PRNGKey(0)
    kp, kc, kq = jax.random.split(key, 3)
    params = init_params(kp, dim, depth)
    context = jax.random.normal(kc, (batch, ctx_len, dim), jnp.float32)
    query = jax.random.normal(kq, (batch, qry_len, dim), jnp.float32)

    out = transformer_encoder_parallel(context, query, params,
                                       n_head=n_head, head_dim=head_dim,
                                       batch_block=2)
    out = jax.block_until_ready(out)

    ref = reference_forward(context, query, params,
                            n_head=n_head, head_dim=head_dim)
    assert out.shape == (batch, qry_len, dim), out.shape
    # Kernel uses bf16 matmul operands (f32 accumulation) + approx reciprocal,
    # so compare against the f32 reference with a mixed-precision tolerance.
    max_err = float(jnp.max(jnp.abs(out - ref)))
    assert max_err < 2e-2, max_err

    print("KERNEL_OK")
</pallas_src>

<mosaic_0001>
module attributes {stable_mosaic.version = 11 : i64} {
  func.func @fused_encoder_kernel(%arg0: i32, %arg1: i32, %arg2: memref<2x16x32xf32, #tpu.memory_space<vmem>>, %arg3: memref<1x1x32xf32, #tpu.memory_space<vmem>>, %arg4: memref<1x1x32xf32, #tpu.memory_space<vmem>>, %arg5: memref<1x32x96xbf16, #tpu.memory_space<vmem>>, %arg6: memref<1x32x32xbf16, #tpu.memory_space<vmem>>, %arg7: memref<1x1x32xf32, #tpu.memory_space<vmem>>, %arg8: memref<1x1x32xf32, #tpu.memory_space<vmem>>, %arg9: memref<1x1x32xf32, #tpu.memory_space<vmem>>, %arg10: memref<1x32x128xbf16, #tpu.memory_space<vmem>>, %arg11: memref<1x1x128xf32, #tpu.memory_space<vmem>>, %arg12: memref<1x128x32xbf16, #tpu.memory_space<vmem>>, %arg13: memref<1x1x32xf32, #tpu.memory_space<vmem>>, %arg14: memref<2x8x32xf32, #tpu.memory_space<vmem>>, %arg15: memref<2x16x32xf32, #tpu.memory_space<vmem>>) attributes {dimension_semantics = [#tpu.dimension_semantics<parallel>, #tpu.dimension_semantics<arbitrary>], iteration_bounds = array<i64: 2, 2>, scalar_prefetch = 0 : i64, scratch_operands = 1 : i64, tpu.core_type = #tpu.core_type<tc>, window_params = [{transform_indices = @transform_0, window_bounds = array<i64: 2, 16, 32>}, {transform_indices = @transform_1, window_bounds = array<i64: 1, 1, 32>}, {transform_indices = @transform_2, window_bounds = array<i64: 1, 1, 32>}, {transform_indices = @transform_3, window_bounds = array<i64: 1, 32, 96>}, {transform_indices = @transform_4, window_bounds = array<i64: 1, 32, 32>}, {transform_indices = @transform_5, window_bounds = array<i64: 1, 1, 32>}, {transform_indices = @transform_6, window_bounds = array<i64: 1, 1, 32>}, {transform_indices = @transform_7, window_bounds = array<i64: 1, 1, 32>}, {transform_indices = @transform_8, window_bounds = array<i64: 1, 32, 128>}, {transform_indices = @transform_9, window_bounds = array<i64: 1, 1, 128>}, {transform_indices = @transform_10, window_bounds = array<i64: 1, 128, 32>}, {transform_indices = @transform_11, window_bounds = array<i64: 1, 1, 32>}, {transform_indices = @transform_12, window_bounds = array<i64: 2, 8, 32>}]} {
    %c0_i32 = arith.constant 0 : i32
    %0 = arith.cmpi eq, %arg1, %c0_i32 : i32
    %1 = arith.extui %0 : i1 to i32
    %c0_i32_0 = arith.constant 0 : i32
    %2 = arith.cmpi ne, %1, %c0_i32_0 : i32
    scf.if %2 {
      %c0_65 = arith.constant 0 : index
      %c0_66 = arith.constant 0 : index
      %c0_67 = arith.constant 0 : index
      %156 = vector.load %arg2[%c0_65, %c0_66, %c0_67] : memref<2x16x32xf32, #tpu.memory_space<vmem>>, vector<2x16x32xf32>
      %c0_68 = arith.constant 0 : index
      %c0_69 = arith.constant 0 : index
      %c0_70 = arith.constant 0 : index
      %157 = vector.load %arg15[%c0_68, %c0_69, %c0_70] : memref<2x16x32xf32, #tpu.memory_space<vmem>>, vector<2x16x32xf32>
      tpu.vector_store %arg15[%c0_68, %c0_69, %c0_70], %156 {strides = array<i32>} : memref<2x16x32xf32, #tpu.memory_space<vmem>>, vector<2x16x32xf32>,
    } else {
    }
    %c0 = arith.constant 0 : index
    %c0_1 = arith.constant 0 : index
    %c0_2 = arith.constant 0 : index
    %3 = vector.load %arg15[%c0, %c0_1, %c0_2] : memref<2x16x32xf32, #tpu.memory_space<vmem>>, vector<2x16x32xf32>
    %4 = vector.shape_cast %3 : vector<2x16x32xf32> to vector<32x32xf32>
    %c0_3 = arith.constant 0 : index
    %c0_4 = arith.constant 0 : index
    %c0_5 = arith.constant 0 : index
    %5 = vector.load %arg3[%c0_3, %c0_4, %c0_5] : memref<1x1x32xf32, #tpu.memory_space<vmem>>, vector<1x1x32xf32>
    %6 = vector.shape_cast %5 : vector<1x1x32xf32> to vector<1x32xf32>
    %c0_6 = arith.constant 0 : index
    %c0_7 = arith.constant 0 : index
    %c0_8 = arith.constant 0 : index
    %7 = vector.load %arg4[%c0_6, %c0_7, %c0_8] : memref<1x1x32xf32, #tpu.memory_space<vmem>>, vector<1x1x32xf32>
    %8 = vector.shape_cast %7 : vector<1x1x32xf32> to vector<1x32xf32>
    %cst = arith.constant dense<0.000000e+00> : vector<32xf32>
    %9 = vector.multi_reduction <add>, %4, %cst [1] : vector<32x32xf32> to vector<32xf32>
    %10 = vector.shape_cast %9 : vector<32xf32> to vector<32x1xf32>
    %cst_9 = arith.constant 3.200000e+01 : f32
    %11 = vector.broadcast %cst_9 : f32 to vector<32x1xf32>
    %12 = arith.divf %10, %11 : vector<32x1xf32>
    %13 = vector.broadcast %12 : vector<32x1xf32> to vector<32x32xf32>
    %14 = arith.subf %4, %13 : vector<32x32xf32>
    %15 = arith.mulf %14, %14 : vector<32x32xf32>
    %cst_10 = arith.constant dense<0.000000e+00> : vector<32xf32>
    %16 = vector.multi_reduction <add>, %15, %cst_10 [1] : vector<32x32xf32> to vector<32xf32>
    %17 = vector.shape_cast %16 : vector<32xf32> to vector<32x1xf32>
    %cst_11 = arith.constant 3.200000e+01 : f32
    %18 = vector.broadcast %cst_11 : f32 to vector<32x1xf32>
    %19 = arith.divf %17, %18 : vector<32x1xf32>
    %cst_12 = arith.constant 9.99999974E-6 : f32
    %20 = vector.broadcast %cst_12 : f32 to vector<32x1xf32>
    %21 = arith.addf %19, %20 : vector<32x1xf32>
    %22 = math.rsqrt %21 : vector<32x1xf32>
    %23 = vector.broadcast %22 : vector<32x1xf32> to vector<32x32xf32>
    %24 = arith.mulf %14, %23 : vector<32x32xf32>
    %25 = vector.broadcast %6 : vector<1x32xf32> to vector<32x32xf32>
    %26 = arith.mulf %24, %25 : vector<32x32xf32>
    %27 = vector.broadcast %8 : vector<1x32xf32> to vector<32x32xf32>
    %28 = arith.addf %26, %27 : vector<32x32xf32>
    %29 = arith.truncf %28 : vector<32x32xf32> to vector<32x32xbf16>
    %c0_13 = arith.constant 0 : index
    %c0_14 = arith.constant 0 : index
    %c0_15 = arith.constant 0 : index
    %30 = vector.load %arg5[%c0_13, %c0_14, %c0_15] : memref<1x32x96xbf16, #tpu.memory_space<vmem>>, vector<1x32x96xbf16>
    %31 = vector.shape_cast %30 : vector<1x32x96xbf16> to vector<32x96xbf16>
    %cst_16 = arith.constant dense<0.000000e+00> : vector<32x96xf32>
    %32 = tpu.matmul %29, %31, %cst_16 {dimension_numbers = #tpu.dot_dimension_numbers<[1], [0], [0], [1], [0, 0, 1, 1], [], []>} : vector<32x32xbf16>, vector<32x96xbf16>, vector<32x96xf32> -> vector<32x96xf32>
    %33 = vector.extract_strided_slice %32 {offsets = [0, 0], sizes = [32, 32], strides = [1, 1]} : vector<32x96xf32> to vector<32x32xf32>
    %34 = arith.truncf %33 : vector<32x32xf32> to vector<32x32xbf16>
    %35 = vector.extract_strided_slice %32 {offsets = [0, 32], sizes = [32, 32], strides = [1, 1]} : vector<32x96xf32> to vector<32x32xf32>
    %36 = arith.truncf %35 : vector<32x32xf32> to vector<32x32xbf16>
    %37 = vector.extract_strided_slice %32 {offsets = [0, 64], sizes = [32, 32], strides = [1, 1]} : vector<32x96xf32> to vector<32x32xf32>
    %38 = arith.truncf %37 : vector<32x32xf32> to vector<32x32xbf16>
    %39 = vector.extract_strided_slice %34 {offsets = [0, 0], sizes = [16, 32], strides = [1, 1]} : vector<32x32xbf16> to vector<16x32xbf16>
    %40 = vector.shape_cast %39 : vector<16x32xbf16> to vector<16x4x8xbf16>
    %41 = tpu.transpose %40, [1, 0, 2] : vector<16x4x8xbf16> -> vector<4x16x8xbf16>
    %42 = vector.extract_strided_slice %36 {offsets = [0, 0], sizes = [16, 32], strides = [1, 1]} : vector<32x32xbf16> to vector<16x32xbf16>
    %43 = vector.shape_cast %42 : vector<16x32xbf16> to vector<16x4x8xbf16>
    %44 = tpu.transpose %43, [1, 0, 2] : vector<16x4x8xbf16> -> vector<4x16x8xbf16>
    %45 = vector.extract_strided_slice %38 {offsets = [0, 0], sizes = [16, 32], strides = [1, 1]} : vector<32x32xbf16> to vector<16x32xbf16>
    %46 = vector.shape_cast %45 : vector<16x32xbf16> to vector<16x4x8xbf16>
    %47 = tpu.transpose %46, [1, 0, 2] : vector<16x4x8xbf16> -> vector<4x16x8xbf16>
    "tpu.trace_start"() <{level = 10 : i32, message = "hqd,hkd->hqk"}> : () -> ()
    %cst_17 = arith.constant dense<0.000000e+00> : vector<4x16x16xf32>
    %48 = tpu.matmul %41, %44, %cst_17 {dimension_numbers = #tpu.dot_dimension_numbers<[2], [2], [1], [1], [0, 0, 0, 1, 1, 1], [0], [0]>} : vector<4x16x8xbf16>, vector<4x16x8xbf16>, vector<4x16x16xf32> -> vector<4x16x16xf32>
    "tpu.trace_stop"() : () -> ()
    %cst_18 = arith.constant dense<0xFF800000> : vector<4x16xf32>
    %49 = vector.multi_reduction <maximumf>, %48, %cst_18 [2] : vector<4x16x16xf32> to vector<4x16xf32>
    %50 = vector.shape_cast %49 : vector<4x16xf32> to vector<4x16x1xf32>
    %51 = vector.broadcast %50 : vector<4x16x1xf32> to vector<4x16x16xf32>
    %52 = arith.subf %48, %51 : vector<4x16x16xf32>
    %53 = math.exp %52 : vector<4x16x16xf32>
    %cst_19 = arith.constant dense<0.000000e+00> : vector<4x16xf32>
    %54 = vector.multi_reduction <add>, %53, %cst_19 [2] : vector<4x16x16xf32> to vector<4x16xf32>
    %55 = vector.shape_cast %54 : vector<4x16xf32> to vector<4x16x1xf32>
    %56 = tpu.reciprocal %55 {approx = true} : vector<4x16x1xf32> -> vector<4x16x1xf32>
    %57 = vector.broadcast %56 : vector<4x16x1xf32> to vector<4x16x16xf32>
    %58 = arith.mulf %53, %57 : vector<4x16x16xf32>
    %59 = arith.truncf %58 : vector<4x16x16xf32> to vector<4x16x16xbf16>
    "tpu.trace_start"() <{level = 10 : i32, message = "hqk,hkd->hqd"}> : () -> ()
    %cst_20 = arith.constant dense<0.000000e+00> : vector<4x16x8xf32>
    %60 = tpu.matmul %59, %47, %cst_20 {dimension_numbers = #tpu.dot_dimension_numbers<[2], [1], [1], [2], [0, 0, 0, 1, 1, 2], [0], [0]>} : vector<4x16x16xbf16>, vector<4x16x8xbf16>, vector<4x16x8xf32> -> vector<4x16x8xf32>
    "tpu.trace_stop"() : () -> ()
    %61 = tpu.transpose %60, [1, 0, 2] : vector<4x16x8xf32> -> vector<16x4x8xf32>
    %62 = vector.shape_cast %61 : vector<16x4x8xf32> to vector<16x32xf32>
    %63 = vector.extract_strided_slice %34 {offsets = [16, 0], sizes = [16, 32], strides = [1, 1]} : vector<32x32xbf16> to vector<16x32xbf16>
    %64 = vector.shape_cast %63 : vector<16x32xbf16> to vector<16x4x8xbf16>
    %65 = tpu.transpose %64, [1, 0, 2] : vector<16x4x8xbf16> -> vector<4x16x8xbf16>
    %66 = vector.extract_strided_slice %36 {offsets = [16, 0], sizes = [16, 32], strides = [1, 1]} : vector<32x32xbf16> to vector<16x32xbf16>
    %67 = vector.shape_cast %66 : vector<16x32xbf16> to vector<16x4x8xbf16>
    %68 = tpu.transpose %67, [1, 0, 2] : vector<16x4x8xbf16> -> vector<4x16x8xbf16>
    %69 = vector.extract_strided_slice %38 {offsets = [16, 0], sizes = [16, 32], strides = [1, 1]} : vector<32x32xbf16> to vector<16x32xbf16>
    %70 = vector.shape_cast %69 : vector<16x32xbf16> to vector<16x4x8xbf16>
    %71 = tpu.transpose %70, [1, 0, 2] : vector<16x4x8xbf16> -> vector<4x16x8xbf16>
    "tpu.trace_start"() <{level = 10 : i32, message = "hqd,hkd->hqk"}> : () -> ()
    %cst_21 = arith.constant dense<0.000000e+00> : vector<4x16x16xf32>
    %72 = tpu.matmul %65, %68, %cst_21 {dimension_numbers = #tpu.dot_dimension_numbers<[2], [2], [1], [1], [0, 0, 0, 1, 1, 1], [0], [0]>} : vector<4x16x8xbf16>, vector<4x16x8xbf16>, vector<4x16x16xf32> -> vector<4x16x16xf32>
    "tpu.trace_stop"() : () -> ()
    %cst_22 = arith.constant dense<0xFF800000> : vector<4x16xf32>
    %73 = vector.multi_reduction <maximumf>, %72, %cst_22 [2] : vector<4x16x16xf32> to vector<4x16xf32>
    %74 = vector.shape_cast %73 : vector<4x16xf32> to vector<4x16x1xf32>
    %75 = vector.broadcast %74 : vector<4x16x1xf32> to vector<4x16x16xf32>
    %76 = arith.subf %72, %75 : vector<4x16x16xf32>
    %77 = math.exp %76 : vector<4x16x16xf32>
    %cst_23 = arith.constant dense<0.000000e+00> : vector<4x16xf32>
    %78 = vector.multi_reduction <add>, %77, %cst_23 [2] : vector<4x16x16xf32> to vector<4x16xf32>
    %79 = vector.shape_cast %78 : vector<4x16xf32> to vector<4x16x1xf32>
    %80 = tpu.reciprocal %79 {approx = true} : vector<4x16x1xf32> -> vector<4x16x1xf32>
    %81 = vector.broadcast %80 : vector<4x16x1xf32> to vector<4x16x16xf32>
    %82 = arith.mulf %77, %81 : vector<4x16x16xf32>
    %83 = arith.truncf %82 : vector<4x16x16xf32> to vector<4x16x16xbf16>
    "tpu.trace_start"() <{level = 10 : i32, message = "hqk,hkd->hqd"}> : () -> ()
    %cst_24 = arith.constant dense<0.000000e+00> : vector<4x16x8xf32>
    %84 = tpu.matmul %83, %71, %cst_24 {dimension_numbers = #tpu.dot_dimension_numbers<[2], [1], [1], [2], [0, 0, 0, 1, 1, 2], [0], [0]>} : vector<4x16x16xbf16>, vector<4x16x8xbf16>, vector<4x16x8xf32> -> vector<4x16x8xf32>
    "tpu.trace_stop"() : () -> ()
    %85 = tpu.transpose %84, [1, 0, 2] : vector<4x16x8xf32> -> vector<16x4x8xf32>
    %86 = vector.shape_cast %85 : vector<16x4x8xf32> to vector<16x32xf32>
    %87 = tpu.concatenate %62, %86 in 0 : vector<16x32xf32>, vector<16x32xf32> -> vector<32x32xf32>
    %88 = arith.truncf %87 : vector<32x32xf32> to vector<32x32xbf16>
    %c0_25 = arith.constant 0 : index
    %c0_26 = arith.constant 0 : index
    %c0_27 = arith.constant 0 : index
    %89 = vector.load %arg6[%c0_25, %c0_26, %c0_27] : memref<1x32x32xbf16, #tpu.memory_space<vmem>>, vector<1x32x32xbf16>
    %90 = vector.shape_cast %89 : vector<1x32x32xbf16> to vector<32x32xbf16>
    %cst_28 = arith.constant dense<0.000000e+00> : vector<32x32xf32>
    %91 = tpu.matmul %88, %90, %cst_28 {dimension_numbers = #tpu.dot_dimension_numbers<[1], [0], [0], [1], [0, 0, 1, 1], [], []>} : vector<32x32xbf16>, vector<32x32xbf16>, vector<32x32xf32> -> vector<32x32xf32>
    %c0_29 = arith.constant 0 : index
    %c0_30 = arith.constant 0 : index
    %c0_31 = arith.constant 0 : index
    %92 = vector.load %arg7[%c0_29, %c0_30, %c0_31] : memref<1x1x32xf32, #tpu.memory_space<vmem>>, vector<1x1x32xf32>
    %93 = vector.shape_cast %92 : vector<1x1x32xf32> to vector<1x32xf32>
    %94 = vector.broadcast %93 : vector<1x32xf32> to vector<32x32xf32>
    %95 = arith.addf %91, %94 : vector<32x32xf32>
    %96 = arith.addf %4, %95 : vector<32x32xf32>
    %c0_32 = arith.constant 0 : index
    %c0_33 = arith.constant 0 : index
    %c0_34 = arith.constant 0 : index
    %97 = vector.load %arg8[%c0_32, %c0_33, %c0_34] : memref<1x1x32xf32, #tpu.memory_space<vmem>>, vector<1x1x32xf32>
    %98 = vector.shape_cast %97 : vector<1x1x32xf32> to vector<1x32xf32>
    %c0_35 = arith.constant 0 : index
    %c0_36 = arith.constant 0 : index
    %c0_37 = arith.constant 0 : index
    %99 = vector.load %arg9[%c0_35, %c0_36, %c0_37] : memref<1x1x32xf32, #tpu.memory_space<vmem>>, vector<1x1x32xf32>
    %100 = vector.shape_cast %99 : vector<1x1x32xf32> to vector<1x32xf32>
    %cst_38 = arith.constant dense<0.000000e+00> : vector<32xf32>
    %101 = vector.multi_reduction <add>, %96, %cst_38 [1] : vector<32x32xf32> to vector<32xf32>
    %102 = vector.shape_cast %101 : vector<32xf32> to vector<32x1xf32>
    %cst_39 = arith.constant 3.200000e+01 : f32
    %103 = vector.broadcast %cst_39 : f32 to vector<32x1xf32>
    %104 = arith.divf %102, %103 : vector<32x1xf32>
    %105 = vector.broadcast %104 : vector<32x1xf32> to vector<32x32xf32>
    %106 = arith.subf %96, %105 : vector<32x32xf32>
    %107 = arith.mulf %106, %106 : vector<32x32xf32>
    %cst_40 = arith.constant dense<0.000000e+00> : vector<32xf32>
    %108 = vector.multi_reduction <add>, %107, %cst_40 [1] : vector<32x32xf32> to vector<32xf32>
    %109 = vector.shape_cast %108 : vector<32xf32> to vector<32x1xf32>
    %cst_41 = arith.constant 3.200000e+01 : f32
    %110 = vector.broadcast %cst_41 : f32 to vector<32x1xf32>
    %111 = arith.divf %109, %110 : vector<32x1xf32>
    %cst_42 = arith.constant 9.99999974E-6 : f32
    %112 = vector.broadcast %cst_42 : f32 to vector<32x1xf32>
    %113 = arith.addf %111, %112 : vector<32x1xf32>
    %114 = math.rsqrt %113 : vector<32x1xf32>
    %115 = vector.broadcast %114 : vector<32x1xf32> to vector<32x32xf32>
    %116 = arith.mulf %106, %115 : vector<32x32xf32>
    %117 = vector.broadcast %98 : vector<1x32xf32> to vector<32x32xf32>
    %118 = arith.mulf %116, %117 : vector<32x32xf32>
    %119 = vector.broadcast %100 : vector<1x32xf32> to vector<32x32xf32>
    %120 = arith.addf %118, %119 : vector<32x32xf32>
    %121 = arith.truncf %120 : vector<32x32xf32> to vector<32x32xbf16>
    %c0_43 = arith.constant 0 : index
    %c0_44 = arith.constant 0 : index
    %c0_45 = arith.constant 0 : index
    %122 = vector.load %arg10[%c0_43, %c0_44, %c0_45] : memref<1x32x128xbf16, #tpu.memory_space<vmem>>, vector<1x32x128xbf16>
    %123 = vector.shape_cast %122 : vector<1x32x128xbf16> to vector<32x128xbf16>
    %cst_46 = arith.constant dense<0.000000e+00> : vector<32x128xf32>
    %124 = tpu.matmul %121, %123, %cst_46 {dimension_numbers = #tpu.dot_dimension_numbers<[1], [0], [0], [1], [0, 0, 1, 1], [], []>} : vector<32x32xbf16>, vector<32x128xbf16>, vector<32x128xf32> -> vector<32x128xf32>
    %c0_47 = arith.constant 0 : index
    %c0_48 = arith.constant 0 : index
    %c0_49 = arith.constant 0 : index
    %125 = vector.load %arg11[%c0_47, %c0_48, %c0_49] : memref<1x1x128xf32, #tpu.memory_space<vmem>>, vector<1x1x128xf32>
    %126 = vector.shape_cast %125 : vector<1x1x128xf32> to vector<1x128xf32>
    %127 = vector.broadcast %126 : vector<1x128xf32> to vector<32x128xf32>
    %128 = arith.addf %124, %127 : vector<32x128xf32>
    %129 = arith.mulf %128, %128 : vector<32x128xf32>
    %130 = arith.mulf %128, %129 : vector<32x128xf32>
    %cst_50 = arith.constant 4.471500e-02 : f32
    %131 = vector.broadcast %cst_50 : f32 to vector<32x128xf32>
    %132 = arith.mulf %131, %130 : vector<32x128xf32>
    %133 = arith.addf %128, %132 : vector<32x128xf32>
    %cst_51 = arith.constant 0.797884583 : f32
    %134 = vector.broadcast %cst_51 : f32 to vector<32x128xf32>
    %135 = arith.mulf %134, %133 : vector<32x128xf32>
    %136 = math.tanh %135 : vector<32x128xf32>
    %cst_52 = arith.constant 1.000000e+00 : f32
    %137 = vector.broadcast %cst_52 : f32 to vector<32x128xf32>
    %138 = arith.addf %137, %136 : vector<32x128xf32>
    %cst_53 = arith.constant 5.000000e-01 : f32
    %139 = vector.broadcast %cst_53 : f32 to vector<32x128xf32>
    %140 = arith.mulf %139, %138 : vector<32x128xf32>
    %141 = arith.mulf %128, %140 : vector<32x128xf32>
    %142 = arith.truncf %141 : vector<32x128xf32> to vector<32x128xbf16>
    %c0_54 = arith.constant 0 : index
    %c0_55 = arith.constant 0 : index
    %c0_56 = arith.constant 0 : index
    %143 = vector.load %arg12[%c0_54, %c0_55, %c0_56] : memref<1x128x32xbf16, #tpu.memory_space<vmem>>, vector<1x128x32xbf16>
    %144 = vector.shape_cast %143 : vector<1x128x32xbf16> to vector<128x32xbf16>
    %cst_57 = arith.constant dense<0.000000e+00> : vector<32x32xf32>
    %145 = tpu.matmul %142, %144, %cst_57 {dimension_numbers = #tpu.dot_dimension_numbers<[1], [0], [0], [1], [0, 0, 1, 1], [], []>} : vector<32x128xbf16>, vector<128x32xbf16>, vector<32x32xf32> -> vector<32x32xf32>
    %c0_58 = arith.constant 0 : index
    %c0_59 = arith.constant 0 : index
    %c0_60 = arith.constant 0 : index
    %146 = vector.load %arg13[%c0_58, %c0_59, %c0_60] : memref<1x1x32xf32, #tpu.memory_space<vmem>>, vector<1x1x32xf32>
    %147 = vector.shape_cast %146 : vector<1x1x32xf32> to vector<1x32xf32>
    %148 = vector.broadcast %147 : vector<1x32xf32> to vector<32x32xf32>
    %149 = arith.addf %145, %148 : vector<32x32xf32>
    %150 = arith.addf %96, %149 : vector<32x32xf32>
    %151 = vector.shape_cast %150 : vector<32x32xf32> to vector<2x16x32xf32>
    %c0_61 = arith.constant 0 : index
    %c0_62 = arith.constant 0 : index
    %c0_63 = arith.constant 0 : index
    %152 = vector.load %arg15[%c0_61, %c0_62, %c0_63] : memref<2x16x32xf32, #tpu.memory_space<vmem>>, vector<2x16x32xf32>
    tpu.vector_store %arg15[%c0_61, %c0_62, %c0_63], %151 {strides = array<i32>} : memref<2x16x32xf32, #tpu.memory_space<vmem>>, vector<2x16x32xf32>,
    %c1_i32 = arith.constant 1 : i32
    %153 = arith.cmpi eq, %arg1, %c1_i32 : i32
    %154 = arith.extui %153 : i1 to i32
    %c0_i32_64 = arith.constant 0 : i32
    %155 = arith.cmpi ne, %154, %c0_i32_64 : i32
    scf.if %155 {
      %156 = vector.shape_cast %150 : vector<32x32xf32> to vector<2x16x32xf32>
      %157 = vector.extract_strided_slice %156 {offsets = [0, 8, 0], sizes = [2, 8, 32], strides = [1, 1, 1]} : vector<2x16x32xf32> to vector<2x8x32xf32>
      %c0_65 = arith.constant 0 : index
      %c0_66 = arith.constant 0 : index
      %c0_67 = arith.constant 0 : index
      %158 = vector.load %arg14[%c0_65, %c0_66, %c0_67] : memref<2x8x32xf32, #tpu.memory_space<vmem>>, vector<2x8x32xf32>
      tpu.vector_store %arg14[%c0_65, %c0_66, %c0_67], %157 {strides = array<i32>} : memref<2x8x32xf32, #tpu.memory_space<vmem>>, vector<2x8x32xf32>,
    } else {
    }
    return
  }
  func.func @transform_0(%arg0: i32, %arg1: i32) -> (i32, i32, i32) {
    %c0_i32 = arith.constant 0 : i32
    %c0_i32_0 = arith.constant 0 : i32
    %c0_i32_1 = arith.constant 0 : i32
    return %arg0, %c0_i32, %c0_i32_0 : i32, i32, i32
  }
  func.func @transform_1(%arg0: i32, %arg1: i32) -> (i32, i32, i32) {
    %c0_i32 = arith.constant 0 : i32
    %c0_i32_0 = arith.constant 0 : i32
    %c0_i32_1 = arith.constant 0 : i32
    return %arg1, %c0_i32, %c0_i32_0 : i32, i32, i32
  }
  func.func @transform_2(%arg0: i32, %arg1: i32) -> (i32, i32, i32) {
    %c0_i32 = arith.constant 0 : i32
    %c0_i32_0 = arith.constant 0 : i32
    %c0_i32_1 = arith.constant 0 : i32
    return %arg1, %c0_i32, %c0_i32_0 : i32, i32, i32
  }
  func.func @transform_3(%arg0: i32, %arg1: i32) -> (i32, i32, i32) {
    %c0_i32 = arith.constant 0 : i32
    %c0_i32_0 = arith.constant 0 : i32
    %c0_i32_1 = arith.constant 0 : i32
    return %arg1, %c0_i32, %c0_i32_0 : i32, i32, i32
  }
  func.func @transform_4(%arg0: i32, %arg1: i32) -> (i32, i32, i32) {
    %c0_i32 = arith.constant 0 : i32
    %c0_i32_0 = arith.constant 0 : i32
    %c0_i32_1 = arith.constant 0 : i32
    return %arg1, %c0_i32, %c0_i32_0 : i32, i32, i32
  }
  func.func @transform_5(%arg0: i32, %arg1: i32) -> (i32, i32, i32) {
    %c0_i32 = arith.constant 0 : i32
    %c0_i32_0 = arith.constant 0 : i32
    %c0_i32_1 = arith.constant 0 : i32
    return %arg1, %c0_i32, %c0_i32_0 : i32, i32, i32
  }
  func.func @transform_6(%arg0: i32, %arg1: i32) -> (i32, i32, i32) {
    %c0_i32 = arith.constant 0 : i32
    %c0_i32_0 = arith.constant 0 : i32
    %c0_i32_1 = arith.constant 0 : i32
    return %arg1, %c0_i32, %c0_i32_0 : i32, i32, i32
  }
  func.func @transform_7(%arg0: i32, %arg1: i32) -> (i32, i32, i32) {
    %c0_i32 = arith.constant 0 : i32
    %c0_i32_0 = arith.constant 0 : i32
    %c0_i32_1 = arith.constant 0 : i32
    return %arg1, %c0_i32, %c0_i32_0 : i32, i32, i32
  }
  func.func @transform_8(%arg0: i32, %arg1: i32) -> (i32, i32, i32) {
    %c0_i32 = arith.constant 0 : i32
    %c0_i32_0 = arith.constant 0 : i32
    %c0_i32_1 = arith.constant 0 : i32
    return %arg1, %c0_i32, %c0_i32_0 : i32, i32, i32
  }
  func.func @transform_9(%arg0: i32, %arg1: i32) -> (i32, i32, i32) {
    %c0_i32 = arith.constant 0 : i32
    %c0_i32_0 = arith.constant 0 : i32
    %c0_i32_1 = arith.constant 0 : i32
    return %arg1, %c0_i32, %c0_i32_0 : i32, i32, i32
  }
  func.func @transform_10(%arg0: i32, %arg1: i32) -> (i32, i32, i32) {
    %c0_i32 = arith.constant 0 : i32
    %c0_i32_0 = arith.constant 0 : i32
    %c0_i32_1 = arith.constant 0 : i32
    return %arg1, %c0_i32, %c0_i32_0 : i32, i32, i32
  }
  func.func @transform_11(%arg0: i32, %arg1: i32) -> (i32, i32, i32) {
    %c0_i32 = arith.constant 0 : i32
    %c0_i32_0 = arith.constant 0 : i32
    %c0_i32_1 = arith.constant 0 : i32
    return %arg1, %c0_i32, %c0_i32_0 : i32, i32, i32
  }
  func.func @transform_12(%arg0: i32, %arg1: i32) -> (i32, i32, i32) {
    %c0_i32 = arith.constant 0 : i32
    %c0_i32_0 = arith.constant 0 : i32
    %c0_i32_1 = arith.constant 0 : i32
    return %arg0, %c0_i32, %c0_i32_0 : i32, i32, i32
  }
}

</mosaic_0001>

<llo_original>
// kernel: tpu_custom_call.1
$region0: #{tpu_custom_call.1}
  #allocation0 [shape = 'u32[]', space=smem, size = 0x4, offset = 0x4, fixed_abs, tag = 'smem constant byte address 0x4 - core index']
  #allocation1 [shape = 'u32[144,128]{1,0:T(1,128)}', space=vmem, size = 0x12000, scoped, tag = 'internal scratch']
  #allocation2 [shape = 'f32[2,16,32]{2,1,0:T(8,128)}', space=vmem, size = 0x4000, scoped, tag = 'scratch operand']
  %s0 = inlined_call_operand.hbm [shape: f32[4,16,32], index: 0, kind: input, shape index: {}]
  %s1 = inlined_call_operand.hbm [shape: f32[2,1,32], index: 1, kind: input, shape index: {}]
  %s2 = inlined_call_operand.hbm [shape: f32[2,1,32], index: 2, kind: input, shape index: {}]
  %s3 = inlined_call_operand.hbm [shape: bf16[2,32,96], index: 3, kind: input, shape index: {}]
  %s4 = inlined_call_operand.hbm [shape: bf16[2,32,32], index: 4, kind: input, shape index: {}]
  %s5 = inlined_call_operand.hbm [shape: f32[2,1,32], index: 5, kind: input, shape index: {}]
  %s6 = inlined_call_operand.hbm [shape: f32[2,1,32], index: 6, kind: input, shape index: {}]
  %s7 = inlined_call_operand.hbm [shape: f32[2,1,32], index: 7, kind: input, shape index: {}]
  %s8 = inlined_call_operand.hbm [shape: bf16[2,32,128], index: 8, kind: input, shape index: {}]
  %s9 = inlined_call_operand.hbm [shape: f32[2,1,128], index: 9, kind: input, shape index: {}]
  %s10 = inlined_call_operand.hbm [shape: bf16[2,128,32], index: 10, kind: input, shape index: {}]
  %s11 = inlined_call_operand.hbm [shape: f32[2,1,32], index: 11, kind: input, shape index: {}]
  %s12 = inlined_call_operand.hbm [shape: f32[4,8,32], index: 12, kind: output, shape index: {}]
  %s13 = sld [smem:[#allocation0]]
  $region137: #{tpu_custom_call.1} parent=0
    _
  %s15 = ssub.s32 1, %s13
  %s16 = scalar_select 0, %s15, %s13
  $region1: #{tpu_custom_call.1} parent=0
    #allocation3 [shape = 'u8[32768]{0}', space=vmem, size = 0x8000, scoped, tag = 'input window, operand 0']
    #allocation4 [shape = 's32[2]{0}', space=sflag, size = 0x8, scoped, tag = 'scoped memory for tpu_custom_call.1']
    #allocation5 [shape = 's32[2]{0}', space=sflag, size = 0x8, scoped, tag = 'scoped memory for tpu_custom_call.1']
    #allocation6 [shape = 'u8[1024]{0}', space=vmem, size = 0x400, scoped, tag = 'input window, operand 1']
    #allocation7 [shape = 's32[2]{0}', space=sflag, size = 0x8, scoped, tag = 'scoped memory for tpu_custom_call.1']
    #allocation8 [shape = 'u8[1024]{0}', space=vmem, size = 0x400, scoped, tag = 'input window, operand 2']
    #allocation9 [shape = 'u8[16384]{0}', space=vmem, size = 0x4000, scoped, tag = 'input window, operand 3']
    #allocation10 [shape = 's32[2]{0}', space=sflag, size = 0x8, scoped, tag = 'scoped memory for tpu_custom_call.1']
    #allocation11 [shape = 'u8[16384]{0}', space=vmem, size = 0x4000, scoped, tag = 'input window, operand 4']
    #allocation12 [shape = 'u8[1024]{0}', space=vmem, size = 0x400, scoped, tag = 'input window, operand 5']
    #allocation13 [shape = 's32[2]{0}', space=sflag, size = 0x8, scoped, tag = 'scoped memory for tpu_custom_call.1']
    #allocation14 [shape = 'u8[1024]{0}', space=vmem, size = 0x400, scoped, tag = 'input window, operand 6']
    #allocation15 [shape = 'u8[1024]{0}', space=vmem, size = 0x400, scoped, tag = 'input window, operand 7']
    #allocation16 [shape = 's32[2]{0}', space=sflag, size = 0x8, scoped, tag = 'scoped memory for tpu_custom_call.1']
    #allocation17 [shape = 'u8[16384]{0}', space=vmem, size = 0x4000, scoped, tag = 'input window, operand 8']
    #allocation18 [shape = 'u8[1024]{0}', space=vmem, size = 0x400, scoped, tag = 'input window, operand 9']
    #allocation19 [shape = 's32[2]{0}', space=sflag, size = 0x8, scoped, tag = 'scoped memory for tpu_custom_call.1']
    #allocation20 [shape = 'u8[65536]{0}', space=vmem, size = 0x10000, scoped, tag = 'input window, operand 10']
    #allocation21 [shape = 'u8[1024]{0}', space=vmem, size = 0x400, scoped, tag = 'input window, operand 11']
    #allocation22 [shape = 's32[2]{0}', space=sflag, size = 0x8, scoped, tag = 'scoped memory for tpu_custom_call.1']
    #allocation23 [shape = 'u8[16384]{0}', space=vmem, size = 0x4000, scoped, tag = 'output window, operand 0']
    %17 = vsyncpa [#allocation4], 0
    %s18 = scalar_lea.sflag [#allocation4], 1
    %19 = vsyncpa %s18, 0
    %20 = vsyncpa [#allocation7], 0
    %s21 = scalar_lea.sflag [#allocation7], 1
    %22 = vsyncpa %s21, 0
    %23 = vsyncpa [#allocation10], 0
    %s24 = scalar_lea.sflag [#allocation10], 1
    %25 = vsyncpa %s24, 0
    %26 = vsyncpa [#allocation13], 0
    %s27 = scalar_lea.sflag [#allocation13], 1
    %28 = vsyncpa %s27, 0
    %29 = vsyncpa [#allocation16], 0
    %s30 = scalar_lea.sflag [#allocation16], 1
    %31 = vsyncpa %s30, 0
    %32 = vsyncpa [#allocation19], 0
    %s33 = scalar_lea.sflag [#allocation19], 1
    %34 = vsyncpa %s33, 0
    %35 = vsyncpa [#allocation22], 0
    %s36 = scalar_lea.sflag [#allocation22], 1
    %37 = vsyncpa %s36, 0
    %38 = vsyncpa [#allocation5], 0
    %s39 = scalar_lea.sflag [#allocation5], 1
    %40 = vsyncpa %s39, 0
    loop: start=0, step=1, limit=6
    $region2: #{tpu_custom_call.1} parent=1 // loop_pre_header
      _
    $region3: #{tpu_custom_call.1} parent=1 // loop_header
      %s42 = sphi 0, %s46
      %p43 = scmp.ge.s32.totalorder %s42, 6
      %s49 = sphi 0, %s61
      %s50 = sphi 0, %s57
      %s51 = sphi 0, %s49
      %s52 = sphi 0, %s50
      %s53 = sphi 0, %s51
      %s54 = sphi 0, %s52
      %s64 = sphi 0, %s66
      %s67 = sphi 0, %s64
      %s68 = sphi 0, %s67
      %s84 = sphi 0, %s68
      %s90 = sphi 0, %s92
      %s93 = sphi 0, %s90
      %s94 = sphi 0, %s93
      %s110 = sphi 0, %s94
      %s116 = sphi 0, %s118
      %s119 = sphi 0, %s116
      %s120 = sphi 0, %s119
      %s136 = sphi 0, %s120
      %s142 = sphi 0, %s144
      %s145 = sphi 0, %s142
      %s146 = sphi 0, %s145
      %s162 = sphi 0, %s146
      %s168 = sphi 0, %s170
      %s171 = sphi 0, %s168
      %s172 = sphi 0, %s171
      %s188 = sphi 0, %s172
      %s194 = sphi 0, %s196
      %s197 = sphi 0, %s194
      %s198 = sphi 0, %s197
      %s214 = sphi 0, %s198
      %s220 = sphi 0, %s222
      %s223 = sphi 0, %s220
      %s224 = sphi 0, %s223
      %s240 = sphi 0, %s224
      %s246 = sphi 0, %s248
      %s249 = sphi 0, %s246
      %s250 = sphi 0, %s249
      %s266 = sphi 0, %s250
      %s272 = sphi 0, %s274
      %s275 = sphi 0, %s272
      %s276 = sphi 0, %s275
      %s292 = sphi 0, %s276
      %s298 = sphi 0, %s300
      %s301 = sphi 0, %s298
      %s302 = sphi 0, %s301
      %s318 = sphi 0, %s302
      %s324 = sphi 0, %s326
      %s327 = sphi 0, %s324
      %s328 = sphi 0, %s327
      %s344 = sphi 0, %s328
      %s350 = sphi 0, %s352
      %s353 = sphi 0, %s350
      %s354 = sphi 0, %s353
      %s370 = sphi 0, %s354
      %s376 = sphi 0, %s378
      %s379 = sphi 0, %s376
      %s380 = sphi 0, %s379
      %s396 = sphi 0, %s380
    $region4: #{tpu_custom_call.1} parent=1 // loop_header_branch
      %45 = sbr.rel (%p43) target = $region8
    $region5: #{tpu_custom_call.1} parent=1 // loop_body
      %s47 = ssub.s32 %s42, 1
      %s48 = ssub.s32 %s42, 2
      %s55 = sadd.s32 1, %s50
      %p56 = scmp.ge.s32.totalorder %s55, 2
      %s57 = scalar_select %p56, 0, %s55
      %s58 = sadd.s32 1, %s49
      %s59 = scalar_select %p56, %s58, %s49
      %p60 = scmp.ge.s32.totalorder %s59, 2
      %s61 = scalar_select %p60, 0, %s59
      %s62 = ssub.s32 %s49, %s61
      %p63 = scmp.eq.s32.totalorder %s62, 0
      %s65 = sadd.s32 %s64, 1
      %s66 = scalar_select %p63, %s64, %s65
      %p69 = pneg %p63
      %p70 = scmp.eq.s32.totalorder %s42, 3
      %p71 = por %p69, %p70
      %p72 = scmp.ne.s32.totalorder %s64, %s67
      %p73 = scmp.eq.s32.totalorder %s42, 0
      %p74 = por %p72, %p73
      %p75 = scmp.ne.s32.totalorder %s64, %s67
      %p76 = scmp.eq.s32.totalorder %s47, 3
      %p77 = por %p75, %p76
      %p78 = scmp.ne.s32.totalorder %s67, %s68
      %p79 = scmp.eq.s32.totalorder %s47, 0
      %p80 = por %p78, %p79
      %p81 = scmp.ne.s32.totalorder %s67, %s68
      %p82 = scmp.eq.s32.totalorder %s48, 3
      %p83 = por %p81, %p82
      %p85 = scmp.ne.s32.totalorder %s68, %s84
      %p86 = scmp.eq.s32.totalorder %s48, 0
      %p87 = por %p85, %p86
      %s88 = ssub.s32 %s50, %s57
      %p89 = scmp.eq.s32.totalorder %s88, 0
      %s91 = sadd.s32 %s90, 1
      %s92 = scalar_select %p89, %s90, %s91
      %p95 = pneg %p89
      %p96 = scmp.eq.s32.totalorder %s42, 3
      %p97 = por %p95, %p96
      %p98 = scmp.ne.s32.totalorder %s90, %s93
      %p99 = scmp.eq.s32.totalorder %s42, 0
      %p100 = por %p98, %p99
      %p101 = scmp.ne.s32.totalorder %s90, %s93
      %p102 = scmp.eq.s32.totalorder %s47, 3
      %p103 = por %p101, %p102
      %p104 = scmp.ne.s32.totalorder %s93, %s94
      %p105 = scmp.eq.s32.totalorder %s47, 0
      %p106 = por %p104, %p105
      %p107 = scmp.ne.s32.totalorder %s93, %s94
      %p108 = scmp.eq.s32.totalorder %s48, 3
      %p109 = por %p107, %p108
      %p111 = scmp.ne.s32.totalorder %s94, %s110
      %p112 = scmp.eq.s32.totalorder %s48, 0
      %p113 = por %p111, %p112
      %s114 = ssub.s32 %s50, %s57
      %p115 = scmp.eq.s32.totalorder %s114, 0
      %s117 = sadd.s32 %s116, 1
      %s118 = scalar_select %p115, %s116, %s117
      %p121 = pneg %p115
      %p122 = scmp.eq.s32.totalorder %s42, 3
      %p123 = por %p121, %p122
      %p124 = scmp.ne.s32.totalorder %s116, %s119
      %p125 = scmp.eq.s32.totalorder %s42, 0
      %p126 = por %p124, %p125
      %p127 = scmp.ne.s32.totalorder %s116, %s119
      %p128 = scmp.eq.s32.totalorder %s47, 3
      %p129 = por %p127, %p128
      %p130 = scmp.ne.s32.totalorder %s119, %s120
      %p131 = scmp.eq.s32.totalorder %s47, 0
      %p132 = por %p130, %p131
      %p133 = scmp.ne.s32.totalorder %s119, %s120
      %p134 = scmp.eq.s32.totalorder %s48, 3
      %p135 = por %p133, %p134
      %p137 = scmp.ne.s32.totalorder %s120, %s136
      %p138 = scmp.eq.s32.totalorder %s48, 0
      %p139 = por %p137, %p138
      %s140 = ssub.s32 %s50, %s57
      %p141 = scmp.eq.s32.totalorder %s140, 0
      %s143 = sadd.s32 %s142, 1
      %s144 = scalar_select %p141, %s142, %s143
      %p147 = pneg %p141
      %p148 = scmp.eq.s32.totalorder %s42, 3
      %p149 = por %p147, %p148
      %p150 = scmp.ne.s32.totalorder %s142, %s145
      %p151 = scmp.eq.s32.totalorder %s42, 0
      %p152 = por %p150, %p151
      %p153 = scmp.ne.s32.totalorder %s142, %s145
      %p154 = scmp.eq.s32.totalorder %s47, 3
      %p155 = por %p153, %p154
      %p156 = scmp.ne.s32.totalorder %s145, %s146
      %p157 = scmp.eq.s32.totalorder %s47, 0
      %p158 = por %p156, %p157
      %p159 = scmp.ne.s32.totalorder %s145, %s146
      %p160 = scmp.eq.s32.totalorder %s48, 3
      %p161 = por %p159, %p160
      %p163 = scmp.ne.s32.totalorder %s146, %s162
      %p164 = scmp.eq.s32.totalorder %s48, 0
      %p165 = por %p163, %p164
      %s166 = ssub.s32 %s50, %s57
      %p167 = scmp.eq.s32.totalorder %s166, 0
      %s169 = sadd.s32 %s168, 1
      %s170 = scalar_select %p167, %s168, %s169
      %p173 = pneg %p167
      %p174 = scmp.eq.s32.totalorder %s42, 3
      %p175 = por %p173, %p174
      %p176 = scmp.ne.s32.totalorder %s168, %s171
      %p177 = scmp.eq.s32.totalorder %s42, 0
      %p178 = por %p176, %p177
      %p179 = scmp.ne.s32.totalorder %s168, %s171
      %p180 = scmp.eq.s32.totalorder %s47, 3
      %p181 = por %p179, %p180
      %p182 = scmp.ne.s32.totalorder %s171, %s172
      %p183 = scmp.eq.s32.totalorder %s47, 0
      %p184 = por %p182, %p183
      %p185 = scmp.ne.s32.totalorder %s171, %s172
      %p186 = scmp.eq.s32.totalorder %s48, 3
      %p187 = por %p185, %p186
      %p189 = scmp.ne.s32.totalorder %s172, %s188
      %p190 = scmp.eq.s32.totalorder %s48, 0
      %p191 = por %p189, %p190
      %s192 = ssub.s32 %s50, %s57
      %p193 = scmp.eq.s32.totalorder %s192, 0
      %s195 = sadd.s32 %s194, 1
      %s196 = scalar_select %p193, %s194, %s195
      %p199 = pneg %p193
      %p200 = scmp.eq.s32.totalorder %s42, 3
      %p201 = por %p199, %p200
      %p202 = scmp.ne.s32.totalorder %s194, %s197
      %p203 = scmp.eq.s32.totalorder %s42, 0
      %p204 = por %p202, %p203
      %p205 = scmp.ne.s32.totalorder %s194, %s197
      %p206 = scmp.eq.s32.totalorder %s47, 3
      %p207 = por %p205, %p206
      %p208 = scmp.ne.s32.totalorder %s197, %s198
      %p209 = scmp.eq.s32.totalorder %s47, 0
      %p210 = por %p208, %p209
      %p211 = scmp.ne.s32.totalorder %s197, %s198
      %p212 = scmp.eq.s32.totalorder %s48, 3
      %p213 = por %p211, %p212
      %p215 = scmp.ne.s32.totalorder %s198, %s214
      %p216 = scmp.eq.s32.totalorder %s48, 0
      %p217 = por %p215, %p216
      %s218 = ssub.s32 %s50, %s57
      %p219 = scmp.eq.s32.totalorder %s218, 0
      %s221 = sadd.s32 %s220, 1
      %s222 = scalar_select %p219, %s220, %s221
      %p225 = pneg %p219
      %p226 = scmp.eq.s32.totalorder %s42, 3
      %p227 = por %p225, %p226
      %p228 = scmp.ne.s32.totalorder %s220, %s223
      %p229 = scmp.eq.s32.totalorder %s42, 0
      %p230 = por %p228, %p229
      %p231 = scmp.ne.s32.totalorder %s220, %s223
      %p232 = scmp.eq.s32.totalorder %s47, 3
      %p233 = por %p231, %p232
      %p234 = scmp.ne.s32.totalorder %s223, %s224
      %p235 = scmp.eq.s32.totalorder %s47, 0
      %p236 = por %p234, %p235
      %p237 = scmp.ne.s32.totalorder %s223, %s224
      %p238 = scmp.eq.s32.totalorder %s48, 3
      %p239 = por %p237, %p238
      %p241 = scmp.ne.s32.totalorder %s224, %s240
      %p242 = scmp.eq.s32.totalorder %s48, 0
      %p243 = por %p241, %p242
      %s244 = ssub.s32 %s50, %s57
      %p245 = scmp.eq.s32.totalorder %s244, 0
      %s247 = sadd.s32 %s246, 1
      %s248 = scalar_select %p245, %s246, %s247
      %p251 = pneg %p245
      %p252 = scmp.eq.s32.totalorder %s42, 3
      %p253 = por %p251, %p252
      %p254 = scmp.ne.s32.totalorder %s246, %s249
      %p255 = scmp.eq.s32.totalorder %s42, 0
      %p256 = por %p254, %p255
      %p257 = scmp.ne.s32.totalorder %s246, %s249
      %p258 = scmp.eq.s32.totalorder %s47, 3
      %p259 = por %p257, %p258
      %p260 = scmp.ne.s32.totalorder %s249, %s250
      %p261 = scmp.eq.s32.totalorder %s47, 0
      %p262 = por %p260, %p261
      %p263 = scmp.ne.s32.totalorder %s249, %s250
      %p264 = scmp.eq.s32.totalorder %s48, 3
      %p265 = por %p263, %p264
      %p267 = scmp.ne.s32.totalorder %s250, %s266
      %p268 = scmp.eq.s32.totalorder %s48, 0
      %p269 = por %p267, %p268
      %s270 = ssub.s32 %s50, %s57
      %p271 = scmp.eq.s32.totalorder %s270, 0
      %s273 = sadd.s32 %s272, 1
      %s274 = scalar_select %p271, %s272, %s273
      %p277 = pneg %p271
      %p278 = scmp.eq.s32.totalorder %s42, 3
      %p279 = por %p277, %p278
      %p280 = scmp.ne.s32.totalorder %s272, %s275
      %p281 = scmp.eq.s32.totalorder %s42, 0
      %p282 = por %p280, %p281
      %p283 = scmp.ne.s32.totalorder %s272, %s275
      %p284 = scmp.eq.s32.totalorder %s47, 3
      %p285 = por %p283, %p284
      %p286 = scmp.ne.s32.totalorder %s275, %s276
      %p287 = scmp.eq.s32.totalorder %s47, 0
      %p288 = por %p286, %p287
      %p289 = scmp.ne.s32.totalorder %s275, %s276
      %p290 = scmp.eq.s32.totalorder %s48, 3
      %p291 = por %p289, %p290
      %p293 = scmp.ne.s32.totalorder %s276, %s292
      %p294 = scmp.eq.s32.totalorder %s48, 0
      %p295 = por %p293, %p294
      %s296 = ssub.s32 %s50, %s57
      %p297 = scmp.eq.s32.totalorder %s296, 0
      %s299 = sadd.s32 %s298, 1
      %s300 = scalar_select %p297, %s298, %s299
      %p303 = pneg %p297
      %p304 = scmp.eq.s32.totalorder %s42, 3
      %p305 = por %p303, %p304
      %p306 = scmp.ne.s32.totalorder %s298, %s301
      %p307 = scmp.eq.s32.totalorder %s42, 0
      %p308 = por %p306, %p307
      %p309 = scmp.ne.s32.totalorder %s298, %s301
      %p310 = scmp.eq.s32.totalorder %s47, 3
      %p311 = por %p309, %p310
      %p312 = scmp.ne.s32.totalorder %s301, %s302
      %p313 = scmp.eq.s32.totalorder %s47, 0
      %p314 = por %p312, %p313
      %p315 = scmp.ne.s32.totalorder %s301, %s302
      %p316 = scmp.eq.s32.totalorder %s48, 3
      %p317 = por %p315, %p316
      %p319 = scmp.ne.s32.totalorder %s302, %s318
      %p320 = scmp.eq.s32.totalorder %s48, 0
      %p321 = por %p319, %p320
      %s322 = ssub.s32 %s50, %s57
      %p323 = scmp.eq.s32.totalorder %s322, 0
      %s325 = sadd.s32 %s324, 1
      %s326 = scalar_select %p323, %s324, %s325
      %p329 = pneg %p323
      %p330 = scmp.eq.s32.totalorder %s42, 3
      %p331 = por %p329, %p330
      %p332 = scmp.ne.s32.totalorder %s324, %s327
      %p333 = scmp.eq.s32.totalorder %s42, 0
      %p334 = por %p332, %p333
      %p335 = scmp.ne.s32.totalorder %s324, %s327
      %p336 = scmp.eq.s32.totalorder %s47, 3
      %p337 = por %p335, %p336
      %p338 = scmp.ne.s32.totalorder %s327, %s328
      %p339 = scmp.eq.s32.totalorder %s47, 0
      %p340 = por %p338, %p339
      %p341 = scmp.ne.s32.totalorder %s327, %s328
      %p342 = scmp.eq.s32.totalorder %s48, 3
      %p343 = por %p341, %p342
      %p345 = scmp.ne.s32.totalorder %s328, %s344
      %p346 = scmp.eq.s32.totalorder %s48, 0
      %p347 = por %p345, %p346
      %s348 = ssub.s32 %s50, %s57
      %p349 = scmp.eq.s32.totalorder %s348, 0
      %s351 = sadd.s32 %s350, 1
      %s352 = scalar_select %p349, %s350, %s351
      %p355 = pneg %p349
      %p356 = scmp.eq.s32.totalorder %s42, 3
      %p357 = por %p355, %p356
      %p358 = scmp.ne.s32.totalorder %s350, %s353
      %p359 = scmp.eq.s32.totalorder %s42, 0
      %p360 = por %p358, %p359
      %p361 = scmp.ne.s32.totalorder %s350, %s353
      %p362 = scmp.eq.s32.totalorder %s47, 3
      %p363 = por %p361, %p362
      %p364 = scmp.ne.s32.totalorder %s353, %s354
      %p365 = scmp.eq.s32.totalorder %s47, 0
      %p366 = por %p364, %p365
      %p367 = scmp.ne.s32.totalorder %s353, %s354
      %p368 = scmp.eq.s32.totalorder %s48, 3
      %p369 = por %p367, %p368
      %p371 = scmp.ne.s32.totalorder %s354, %s370
      %p372 = scmp.eq.s32.totalorder %s48, 0
      %p373 = por %p371, %p372
      %s374 = ssub.s32 %s49, %s61
      %p375 = scmp.eq.s32.totalorder %s374, 0
      %s377 = sadd.s32 %s376, 1
      %s378 = scalar_select %p375, %s376, %s377
      %p381 = pneg %p375
      %p382 = scmp.eq.s32.totalorder %s42, 3
      %p383 = por %p381, %p382
      %p384 = scmp.ne.s32.totalorder %s376, %s379
      %p385 = scmp.eq.s32.totalorder %s42, 0
      %p386 = por %p384, %p385
      %p387 = scmp.ne.s32.totalorder %s376, %s379
      %p388 = scmp.eq.s32.totalorder %s47, 3
      %p389 = por %p387, %p388
      %p390 = scmp.ne.s32.totalorder %s379, %s380
      %p391 = scmp.eq.s32.totalorder %s47, 0
      %p392 = por %p390, %p391
      %p393 = scmp.ne.s32.totalorder %s379, %s380
      %p394 = scmp.eq.s32.totalorder %s48, 3
      %p395 = por %p393, %p394
      %p397 = scmp.ne.s32.totalorder %s380, %s396
      %p398 = scmp.eq.s32.totalorder %s48, 0
      %p399 = por %p397, %p398
      %p400 = scmp.le.s32.totalorder 1, %s42
      %p401 = scmp.lt.s32.totalorder %s42, 5
      %p402 = pnand %p400, %p401
      %p403 = pneg %p402
      // Predicated region
      $region9: #{tpu_custom_call.1} parent=5 // pred_check
        _
      $region10: #{tpu_custom_call.1} parent=5 // pred_check_branch
        %405 = sbr.rel (%p402) target = $region12
      $region11: #{tpu_custom_call.1} parent=5 // pred_region
        %s406 = ssub.s32 %s42, 1
      $region12: #{tpu_custom_call.1} parent=5 // pred_fallthru
        _
      %p407 = scmp.lt.s32.totalorder %s42, 4
      // Predicated region
      $region13: #{tpu_custom_call.1} parent=5 // pred_check
        %p408 = pneg %p407
      $region14: #{tpu_custom_call.1} parent=5 // pred_check_branch
        %410 = sbr.rel (%p408) target = $region16
      $region15: #{tpu_custom_call.1} parent=5 // pred_region
        // Predicated region
        $region17: #{tpu_custom_call.1} parent=15 // pred_check
          %p411 = pneg %p74
        $region18: #{tpu_custom_call.1} parent=15 // pred_check_branch
          %413 = sbr.rel (%p411) target = $region20
        $region19: #{tpu_custom_call.1} parent=15 // pred_region
          %s414 = sand.u32 %s64, 1
          %s415 = scalar_lea.sflag [#allocation4], %s414
          %s416 = sand.u32 %s64, 1
          %s417 = smul.addr %s416, 32
          %s418 = scalar_lea.vmem [#allocation3], %s417
          %s419 = smul.u32 2, %s49
          %s421 = ssub.s32 512, 512
          %422 = vsyncadd %s415, %s421
          %s423 = smul.addr %s419, 2
          %s424 = smul.addr %s423, 128
          %s425 = scalar_lea.hbm %s0, %s424
          %s426 = sshll.u32 %s418, 4
          %s427 = int_to_ptr.vmem [resolvable:$true] %s426
          %432 = dma.hbm_to_vmem [thread:$0]  %s425, 512, %s427, %s415, 128, 128, 8
        $region20: #{tpu_custom_call.1} parent=15 // pred_fallthru
          _
        // Predicated region
        $region21: #{tpu_custom_call.1} parent=15 // pred_check
          %p433 = pneg %p100
        $region22: #{tpu_custom_call.1} parent=15 // pred_check_branch
          %435 = sbr.rel (%p433) target = $region24
        $region23: #{tpu_custom_call.1} parent=15 // pred_region
          %s436 = sand.u32 %s42, 1
          %s437 = scalar_lea.sflag [#allocation7], %s436
          %s438 = sand.u32 %s90, 1
          %s439 = scalar_lea.vmem [#allocation6], %s438
          %s441 = ssub.s32 16, 16
          %442 = vsyncadd %s437, %s441
          %s443 = smul.addr %s50, 16
          %s444 = scalar_lea.hbm %s1, %s443
          %s446 = sshll.u32 %s439, 4
          %s447 = int_to_ptr.vmem [resolvable:$true] %s446
          %449 = dma.hbm_to_vmem [thread:$0]  %s444, 16, %s447, %s437
        $region24: #{tpu_custom_call.1} parent=15 // pred_fallthru
          _
        // Predicated region
        $region25: #{tpu_custom_call.1} parent=15 // pred_check
          %p450 = pneg %p126
        $region26: #{tpu_custom_call.1} parent=15 // pred_check_branch
          %452 = sbr.rel (%p450) target = $region28
        $region27: #{tpu_custom_call.1} parent=15 // pred_region
          %s453 = sand.u32 %s42, 1
          %s454 = scalar_lea.sflag [#allocation7], %s453
          %s455 = sand.u32 %s116, 1
          %s456 = scalar_lea.vmem [#allocation8], %s455
          %s458 = ssub.s32 16, 16
          %459 = vsyncadd %s454, %s458
          %s460 = smul.addr %s50, 16
          %s461 = scalar_lea.hbm %s2, %s460
          %s463 = sshll.u32 %s456, 4
          %s464 = int_to_ptr.vmem [resolvable:$true] %s463
          %466 = dma.hbm_to_vmem [thread:$0]  %s461, 16, %s464, %s454
        $region28: #{tpu_custom_call.1} parent=15 // pred_fallthru
          _
        // Predicated region
        $region29: #{tpu_custom_call.1} parent=15 // pred_check
          %p467 = pneg %p152
        $region30: #{tpu_custom_call.1} parent=15 // pred_check_branch
          %469 = sbr.rel (%p467) target = $region32
        $region31: #{tpu_custom_call.1} parent=15 // pred_region
          %s470 = sand.u32 %s42, 1
          %s471 = scalar_lea.sflag [#allocation10], %s470
          %s472 = sand.u32 %s142, 1
          %s473 = smul.addr %s472, 16
          %s474 = scalar_lea.vmem [#allocation9], %s473
          %s476 = ssub.s32 256, 256
          %477 = vsyncadd %s471, %s476
          %s478 = smul.addr %s50, 4
          %s479 = smul.addr %s478, 64
          %s480 = scalar_lea.hbm %s3, %s479
          %s481 = sshll.u32 %s474, 4
          %s482 = int_to_ptr.vmem [resolvable:$true] %s481
          %487 = dma.hbm_to_vmem [thread:$0]  %s480, 256, %s482, %s471, 64, 64, 4
        $region32: #{tpu_custom_call.1} parent=15 // pred_fallthru
          _
        // Predicated region
        $region33: #{tpu_custom_call.1} parent=15 // pred_check
          %p488 = pneg %p178
        $region34: #{tpu_custom_call.1} parent=15 // pred_check_branch
          %490 = sbr.rel (%p488) target = $region36
        $region35: #{tpu_custom_call.1} parent=15 // pred_region
          %s491 = sand.u32 %s42, 1
          %s492 = scalar_lea.sflag [#allocation10], %s491
          %s493 = sand.u32 %s168, 1
          %s494 = smul.addr %s493, 16
          %s495 = scalar_lea.vmem [#allocation11], %s494
          %s497 = ssub.s32 256, 256
          %498 = vsyncadd %s492, %s497
          %s499 = smul.addr %s50, 4
          %s500 = smul.addr %s499, 64
          %s501 = scalar_lea.hbm %s4, %s500
          %s502 = sshll.u32 %s495, 4
          %s503 = int_to_ptr.vmem [resolvable:$true] %s502
          %508 = dma.hbm_to_vmem [thread:$0]  %s501, 256, %s503, %s492, 64, 64, 4
        $region36: #{tpu_custom_call.1} parent=15 // pred_fallthru
          _
        // Predicated region
        $region37: #{tpu_custom_call.1} parent=15 // pred_check
          %p509 = pneg %p204
        $region38: #{tpu_custom_call.1} parent=15 // pred_check_branch
          %511 = sbr.rel (%p509) target = $region40
        $region39: #{tpu_custom_call.1} parent=15 // pred_region
          %s512 = sand.u32 %s42, 1
          %s513 = scalar_lea.sflag [#allocation13], %s512
          %s514 = sand.u32 %s194, 1
          %s515 = scalar_lea.vmem [#allocation12], %s514
          %s517 = ssub.s32 16, 16
          %518 = vsyncadd %s513, %s517
          %s519 = smul.addr %s50, 16
          %s520 = scalar_lea.hbm %s5, %s519
          %s522 = sshll.u32 %s515, 4
          %s523 = int_to_ptr.vmem [resolvable:$true] %s522
          %525 = dma.hbm_to_vmem [thread:$0]  %s520, 16, %s523, %s513
        $region40: #{tpu_custom_call.1} parent=15 // pred_fallthru
          _
        // Predicated region
        $region41: #{tpu_custom_call.1} parent=15 // pred_check
          %p526 = pneg %p230
        $region42: #{tpu_custom_call.1} parent=15 // pred_check_branch
          %528 = sbr.rel (%p526) target = $region44
        $region43: #{tpu_custom_call.1} parent=15 // pred_region
          %s529 = sand.u32 %s42, 1
          %s530 = scalar_lea.sflag [#allocation13], %s529
          %s531 = sand.u32 %s220, 1
          %s532 = scalar_lea.vmem [#allocation14], %s531
          %s534 = ssub.s32 16, 16
          %535 = vsyncadd %s530, %s534
          %s536 = smul.addr %s50, 16
          %s537 = scalar_lea.hbm %s6, %s536
          %s539 = sshll.u32 %s532, 4
          %s540 = int_to_ptr.vmem [resolvable:$true] %s539
          %542 = dma.hbm_to_vmem [thread:$0]  %s537, 16, %s540, %s530
        $region44: #{tpu_custom_call.1} parent=15 // pred_fallthru
          _
        // Predicated region
        $region45: #{tpu_custom_call.1} parent=15 // pred_check
          %p543 = pneg %p256
        $region46: #{tpu_custom_call.1} parent=15 // pred_check_branch
          %545 = sbr.rel (%p543) target = $region48
        $region47: #{tpu_custom_call.1} parent=15 // pred_region
          %s546 = sand.u32 %s42, 1
          %s547 = scalar_lea.sflag [#allocation16], %s546
          %s548 = sand.u32 %s246, 1
          %s549 = scalar_lea.vmem [#allocation15], %s548
          %s551 = ssub.s32 16, 16
          %552 = vsyncadd %s547, %s551
          %s553 = smul.addr %s50, 16
          %s554 = scalar_lea.hbm %s7, %s553
          %s556 = sshll.u32 %s549, 4
          %s557 = int_to_ptr.vmem [resolvable:$true] %s556
          %559 = dma.hbm_to_vmem [thread:$0]  %s554, 16, %s557, %s547
        $region48: #{tpu_custom_call.1} parent=15 // pred_fallthru
          _
        // Predicated region
        $region49: #{tpu_custom_call.1} parent=15 // pred_check
          %p560 = pneg %p282
        $region50: #{tpu_custom_call.1} parent=15 // pred_check_branch
          %562 = sbr.rel (%p560) target = $region52
        $region51: #{tpu_custom_call.1} parent=15 // pred_region
          %s563 = sand.u32 %s42, 1
          %s564 = scalar_lea.sflag [#allocation16], %s563
          %s565 = sand.u32 %s272, 1
          %s566 = smul.addr %s565, 16
          %s567 = scalar_lea.vmem [#allocation17], %s566
          %s569 = ssub.s32 256, 256
          %570 = vsyncadd %s564, %s569
          %s571 = smul.addr %s50, 4
          %s572 = smul.addr %s571, 64
          %s573 = scalar_lea.hbm %s8, %s572
          %s574 = sshll.u32 %s567, 4
          %s575 = int_to_ptr.vmem [resolvable:$true] %s574
          %580 = dma.hbm_to_vmem [thread:$0]  %s573, 256, %s575, %s564, 64, 64, 4
        $region52: #{tpu_custom_call.1} parent=15 // pred_fallthru
          _
        // Predicated region
        $region53: #{tpu_custom_call.1} parent=15 // pred_check
          %p581 = pneg %p308
        $region54: #{tpu_custom_call.1} parent=15 // pred_check_branch
          %583 = sbr.rel (%p581) target = $region56
        $region55: #{tpu_custom_call.1} parent=15 // pred_region
          %s584 = sand.u32 %s42, 1
          %s585 = scalar_lea.sflag [#allocation19], %s584
          %s586 = sand.u32 %s298, 1
          %s587 = scalar_lea.vmem [#allocation18], %s586
          %s589 = ssub.s32 16, 16
          %590 = vsyncadd %s585, %s589
          %s591 = smul.addr %s50, 16
          %s592 = scalar_lea.hbm %s9, %s591
          %s594 = sshll.u32 %s587, 4
          %s595 = int_to_ptr.vmem [resolvable:$true] %s594
          %597 = dma.hbm_to_vmem [thread:$0]  %s592, 16, %s595, %s585
        $region56: #{tpu_custom_call.1} parent=15 // pred_fallthru
          _
        // Predicated region
        $region57: #{tpu_custom_call.1} parent=15 // pred_check
          %p598 = pneg %p334
        $region58: #{tpu_custom_call.1} parent=15 // pred_check_branch
          %600 = sbr.rel (%p598) target = $region60
        $region59: #{tpu_custom_call.1} parent=15 // pred_region
          %s601 = sand.u32 %s42, 1
          %s602 = scalar_lea.sflag [#allocation19], %s601
          %s603 = sand.u32 %s324, 1
          %s604 = smul.addr %s603, 64
          %s605 = scalar_lea.vmem [#allocation20], %s604
          %s607 = ssub.s32 1024, 1024
          %608 = vsyncadd %s602, %s607
          %s609 = smul.addr %s50, 16
          %s610 = smul.addr %s609, 64
          %s611 = scalar_lea.hbm %s10, %s610
          %s612 = sshll.u32 %s605, 4
          %s613 = int_to_ptr.vmem [resolvable:$true] %s612
          %618 = dma.hbm_to_vmem [thread:$0]  %s611, 1024, %s613, %s602, 64, 64, 4
        $region60: #{tpu_custom_call.1} parent=15 // pred_fallthru
          _
        // Predicated region
        $region61: #{tpu_custom_call.1} parent=15 // pred_check
          %p619 = pneg %p360
        $region62: #{tpu_custom_call.1} parent=15 // pred_check_branch
          %621 = sbr.rel (%p619) target = $region64
        $region63: #{tpu_custom_call.1} parent=15 // pred_region
          %s622 = sand.u32 %s350, 1
          %s623 = scalar_lea.sflag [#allocation22], %s622
          %s624 = sand.u32 %s350, 1
          %s625 = scalar_lea.vmem [#allocation21], %s624
          %s627 = ssub.s32 16, 16
          %628 = vsyncadd %s623, %s627
          %s629 = smul.addr %s50, 16
          %s630 = scalar_lea.hbm %s11, %s629
          %s632 = sshll.u32 %s625, 4
          %s633 = int_to_ptr.vmem [resolvable:$true] %s632
          %635 = dma.hbm_to_vmem [thread:$0]  %s630, 16, %s633, %s623
        $region64: #{tpu_custom_call.1} parent=15 // pred_fallthru
          _
      $region16: #{tpu_custom_call.1} parent=5 // pred_fallthru
        _
      %p636 = scmp.le.s32.totalorder 1, %s42
      %p637 = scmp.lt.s32.totalorder %s42, 5
      %p638 = pnand %p636, %p637
      %p639 = pneg %p638
      // Predicated region
      $region65: #{tpu_custom_call.1} parent=5 // pred_check
        _
      $region66: #{tpu_custom_call.1} parent=5 // pred_check_branch
        %641 = sbr.rel (%p638) target = $region68
      $region67: #{tpu_custom_call.1} parent=5 // pred_region
        %s642 = ssub.s32 %s42, 1
        %s643 = sand.u32 %s67, 1
        %s644 = scalar_lea.sflag [#allocation4], %s643
        %s645 = sand.u32 %s67, 1
        %s646 = smul.addr %s645, 32
        %s647 = scalar_lea.vmem [#allocation3], %s646
        // Predicated region
        $region69: #{tpu_custom_call.1} parent=67 // pred_check
          %p648 = pneg %p80
        $region70: #{tpu_custom_call.1} parent=67 // pred_check_branch
          %650 = sbr.rel (%p648) target = $region72
        $region71: #{tpu_custom_call.1} parent=67 // pred_region
          %651 = dma.done %s644, 512
        $region72: #{tpu_custom_call.1} parent=67 // pred_fallthru
          _
        %s652 = sand.u32 %s47, 1
        %s653 = scalar_lea.sflag [#allocation7], %s652
        %s654 = sand.u32 %s93, 1
        %s655 = scalar_lea.vmem [#allocation6], %s654
        // Predicated region
        $region73: #{tpu_custom_call.1} parent=67 // pred_check
          %p656 = pneg %p106
        $region74: #{tpu_custom_call.1} parent=67 // pred_check_branch
          %658 = sbr.rel (%p656) target = $region76
        $region75: #{tpu_custom_call.1} parent=67 // pred_region
          %659 = dma.done %s653, 16
        $region76: #{tpu_custom_call.1} parent=67 // pred_fallthru
          _
        %s660 = sand.u32 %s47, 1
        %s661 = scalar_lea.sflag [#allocation7], %s660
        %s662 = sand.u32 %s119, 1
        %s663 = scalar_lea.vmem [#allocation8], %s662
        // Predicated region
        $region77: #{tpu_custom_call.1} parent=67 // pred_check
          %p664 = pneg %p132
        $region78: #{tpu_custom_call.1} parent=67 // pred_check_branch
          %666 = sbr.rel (%p664) target = $region80
        $region79: #{tpu_custom_call.1} parent=67 // pred_region
          %667 = dma.done %s661, 16
        $region80: #{tpu_custom_call.1} parent=67 // pred_fallthru
          _
        %s668 = sand.u32 %s47, 1
        %s669 = scalar_lea.sflag [#allocation10], %s668
        %s670 = sand.u32 %s145, 1
        %s671 = smul.addr %s670, 16
        %s672 = scalar_lea.vmem [#allocation9], %s671
        // Predicated region
        $region81: #{tpu_custom_call.1} parent=67 // pred_check
          %p673 = pneg %p158
        $region82: #{tpu_custom_call.1} parent=67 // pred_check_branch
          %675 = sbr.rel (%p673) target = $region84
        $region83: #{tpu_custom_call.1} parent=67 // pred_region
          %676 = dma.done %s669, 256
        $region84: #{tpu_custom_call.1} parent=67 // pred_fallthru
          _
        %s677 = sand.u32 %s47, 1
        %s678 = scalar_lea.sflag [#allocation10], %s677
        %s679 = sand.u32 %s171, 1
        %s680 = smul.addr %s679, 16
        %s681 = scalar_lea.vmem [#allocation11], %s680
        // Predicated region
        $region85: #{tpu_custom_call.1} parent=67 // pred_check
          %p682 = pneg %p184
        $region86: #{tpu_custom_call.1} parent=67 // pred_check_branch
          %684 = sbr.rel (%p682) target = $region88
        $region87: #{tpu_custom_call.1} parent=67 // pred_region
          %685 = dma.done %s678, 256
        $region88: #{tpu_custom_call.1} parent=67 // pred_fallthru
          _
        %s686 = sand.u32 %s47, 1
        %s687 = scalar_lea.sflag [#allocation13], %s686
        %s688 = sand.u32 %s197, 1
        %s689 = scalar_lea.vmem [#allocation12], %s688
        // Predicated region
        $region89: #{tpu_custom_call.1} parent=67 // pred_check
          %p690 = pneg %p210
        $region90: #{tpu_custom_call.1} parent=67 // pred_check_branch
          %692 = sbr.rel (%p690) target = $region92
        $region91: #{tpu_custom_call.1} parent=67 // pred_region
          %693 = dma.done %s687, 16
        $region92: #{tpu_custom_call.1} parent=67 // pred_fallthru
          _
        %s694 = sand.u32 %s47, 1
        %s695 = scalar_lea.sflag [#allocation13], %s694
        %s696 = sand.u32 %s223, 1
        %s697 = scalar_lea.vmem [#allocation14], %s696
        // Predicated region
        $region93: #{tpu_custom_call.1} parent=67 // pred_check
          %p698 = pneg %p236
        $region94: #{tpu_custom_call.1} parent=67 // pred_check_branch
          %700 = sbr.rel (%p698) target = $region96
        $region95: #{tpu_custom_call.1} parent=67 // pred_region
          %701 = dma.done %s695, 16
        $region96: #{tpu_custom_call.1} parent=67 // pred_fallthru
          _
        %s702 = sand.u32 %s47, 1
        %s703 = scalar_lea.sflag [#allocation16], %s702
        %s704 = sand.u32 %s249, 1
        %s705 = scalar_lea.vmem [#allocation15], %s704
        // Predicated region
        $region97: #{tpu_custom_call.1} parent=67 // pred_check
          %p706 = pneg %p262
        $region98: #{tpu_custom_call.1} parent=67 // pred_check_branch
          %708 = sbr.rel (%p706) target = $region100
        $region99: #{tpu_custom_call.1} parent=67 // pred_region
          %709 = dma.done %s703, 16
        $region100: #{tpu_custom_call.1} parent=67 // pred_fallthru
          _
        %s710 = sand.u32 %s47, 1
        %s711 = scalar_lea.sflag [#allocation16], %s710
        %s712 = sand.u32 %s275, 1
        %s713 = smul.addr %s712, 16
        %s714 = scalar_lea.vmem [#allocation17], %s713
        // Predicated region
        $region101: #{tpu_custom_call.1} parent=67 // pred_check
          %p715 = pneg %p288
        $region102: #{tpu_custom_call.1} parent=67 // pred_check_branch
          %717 = sbr.rel (%p715) target = $region104
        $region103: #{tpu_custom_call.1} parent=67 // pred_region
          %718 = dma.done %s711, 256
        $region104: #{tpu_custom_call.1} parent=67 // pred_fallthru
          _
        %s719 = sand.u32 %s47, 1
        %s720 = scalar_lea.sflag [#allocation19], %s719
        %s721 = sand.u32 %s301, 1
        %s722 = scalar_lea.vmem [#allocation18], %s721
        // Predicated region
        $region105: #{tpu_custom_call.1} parent=67 // pred_check
          %p723 = pneg %p314
        $region106: #{tpu_custom_call.1} parent=67 // pred_check_branch
          %725 = sbr.rel (%p723) target = $region108
        $region107: #{tpu_custom_call.1} parent=67 // pred_region
          %726 = dma.done %s720, 16
        $region108: #{tpu_custom_call.1} parent=67 // pred_fallthru
          _
        %s727 = sand.u32 %s47, 1
        %s728 = scalar_lea.sflag [#allocation19], %s727
        %s729 = sand.u32 %s327, 1
        %s730 = smul.addr %s729, 64
        %s731 = scalar_lea.vmem [#allocation20], %s730
        // Predicated region
        $region109: #{tpu_custom_call.1} parent=67 // pred_check
          %p732 = pneg %p340
        $region110: #{tpu_custom_call.1} parent=67 // pred_check_branch
          %734 = sbr.rel (%p732) target = $region112
        $region111: #{tpu_custom_call.1} parent=67 // pred_region
          %735 = dma.done %s728, 1024
        $region112: #{tpu_custom_call.1} parent=67 // pred_fallthru
          _
        %s736 = sand.u32 %s353, 1
        %s737 = scalar_lea.sflag [#allocation22], %s736
        %s738 = sand.u32 %s353, 1
        %s739 = scalar_lea.vmem [#allocation21], %s738
        // Predicated region
        $region113: #{tpu_custom_call.1} parent=67 // pred_check
          %p740 = pneg %p366
        $region114: #{tpu_custom_call.1} parent=67 // pred_check_branch
          %742 = sbr.rel (%p740) target = $region116
        $region115: #{tpu_custom_call.1} parent=67 // pred_region
          %743 = dma.done %s737, 16
        $region116: #{tpu_custom_call.1} parent=67 // pred_fallthru
          _
        %s744 = sand.u32 %s67, 1
        %s745 = scalar_lea.sflag [#allocation4], %s744
        %s746 = sand.u32 %s67, 1
        %s747 = smul.addr %s746, 32
        %s748 = scalar_lea.vmem [#allocation3], %s747
        %p749 = pneg %p80
        %p750 = pneg %p77
        %s751 = sand.u32 %s47, 1
        %s752 = scalar_lea.sflag [#allocation7], %s751
        %s753 = sand.u32 %s93, 1
        %s754 = scalar_lea.vmem [#allocation6], %s753
        %p755 = pneg %p106
        %p756 = pneg %p103
        %s757 = sand.u32 %s47, 1
        %s758 = scalar_lea.sflag [#allocation7], %s757
        %s759 = sand.u32 %s119, 1
        %s760 = scalar_lea.vmem [#allocation8], %s759
        %p761 = pneg %p132
        %p762 = pneg %p129
        %s763 = sand.u32 %s47, 1
        %s764 = scalar_lea.sflag [#allocation10], %s763
        %s765 = sand.u32 %s145, 1
        %s766 = smul.addr %s765, 16
        %s767 = scalar_lea.vmem [#allocation9], %s766
        %p768 = pneg %p158
        %p769 = pneg %p155
        %s770 = sand.u32 %s47, 1
        %s771 = scalar_lea.sflag [#allocation10], %s770
        %s772 = sand.u32 %s171, 1
        %s773 = smul.addr %s772, 16
        %s774 = scalar_lea.vmem [#allocation11], %s773
        %p775 = pneg %p184
        %p776 = pneg %p181
        %s777 = sand.u32 %s47, 1
        %s778 = scalar_lea.sflag [#allocation13], %s777
        %s779 = sand.u32 %s197, 1
        %s780 = scalar_lea.vmem [#allocation12], %s779
        %p781 = pneg %p210
        %p782 = pneg %p207
        %s783 = sand.u32 %s47, 1
        %s784 = scalar_lea.sflag [#allocation13], %s783
        %s785 = sand.u32 %s223, 1
        %s786 = scalar_lea.vmem [#allocation14], %s785
        %p787 = pneg %p236
        %p788 = pneg %p233
        %s789 = sand.u32 %s47, 1
        %s790 = scalar_lea.sflag [#allocation16], %s789
        %s791 = sand.u32 %s249, 1
        %s792 = scalar_lea.vmem [#allocation15], %s791
        %p793 = pneg %p262
        %p794 = pneg %p259
        %s795 = sand.u32 %s47, 1
        %s796 = scalar_lea.sflag [#allocation16], %s795
        %s797 = sand.u32 %s275, 1
        %s798 = smul.addr %s797, 16
        %s799 = scalar_lea.vmem [#allocation17], %s798
        %p800 = pneg %p288
        %p801 = pneg %p285
        %s802 = sand.u32 %s47, 1
        %s803 = scalar_lea.sflag [#allocation19], %s802
        %s804 = sand.u32 %s301, 1
        %s805 = scalar_lea.vmem [#allocation18], %s804
        %p806 = pneg %p314
        %p807 = pneg %p311
        %s808 = sand.u32 %s47, 1
        %s809 = scalar_lea.sflag [#allocation19], %s808
        %s810 = sand.u32 %s327, 1
        %s811 = smul.addr %s810, 64
        %s812 = scalar_lea.vmem [#allocation20], %s811
        %p813 = pneg %p340
        %p814 = pneg %p337
        %s815 = sand.u32 %s353, 1
        %s816 = scalar_lea.sflag [#allocation22], %s815
        %s817 = sand.u32 %s353, 1
        %s818 = scalar_lea.vmem [#allocation21], %s817
        %p819 = pneg %p366
        %p820 = pneg %p363
        %p821 = pneg %p392
        %p822 = pneg %p389
        %s823 = sand.u32 %s379, 1
        %s824 = scalar_lea.sflag [#allocation5], %s823
        %s825 = sand.u32 %s379, 1
        %s826 = smul.addr %s825, 16
        %s827 = scalar_lea.vmem [#allocation23], %s826
        %s828 = smul.u32 2, %s51
        %s829 = smul.u32 2, %s51
        %p831 = scmp.eq.s32.totalorder %s52, 0
        // Predicated region
        $region117: #{tpu_custom_call.1} parent=67 // pred_check
          %p832 = pneg %p831
        $region118: #{tpu_custom_call.1} parent=67 // pred_check_branch
          %834 = sbr.rel (%p832) target = $region120
        $region119: #{tpu_custom_call.1} parent=67 // pred_region
          %v835 = vld [vmem:[%s647] sm:$0xff]
          %v836 = vld [vmem:[%s647 + $0x8] sm:$0xff]
          %v837 = vld [vmem:[%s647 + $0x10] sm:$0xff]
          %v838 = vld [vmem:[%s647 + $0x18] sm:$0xff]
          %vm839 = vcmask 261120
          %840 = vst.msk [vmem:[#allocation2] sm:$0xff] %vm839, %v835
          %841 = vst.msk [vmem:[#allocation2 + $0x8] sm:$0xff] %vm839, %v836
          %842 = vst.msk [vmem:[#allocation2 + $0x10] sm:$0xff] %vm839, %v837
          %843 = vst.msk [vmem:[#allocation2 + $0x18] sm:$0xff] %vm839, %v838
        $region120: #{tpu_custom_call.1} parent=67 // pred_fallthru
          _
        %v844 = vld [vmem:[#allocation2] sm:$0xff]
        %v845 = vld [vmem:[#allocation2 + $0x8] sm:$0xff]
        %v846 = vld [vmem:[#allocation2 + $0x10] sm:$0xff]
        %v847 = vld [vmem:[#allocation2 + $0x18] sm:$0xff]
        %v848 = vld [vmem:[%s655] sm:$0x1]
        %v849 = vld [vmem:[%s663] sm:$0x1]
        %vm850 = vcmask 261120
        %v851 = vsel %vm850, %v844, 0.0
        %852 = vadd.xlane.f32.xlu0 %v851
        %v853 = vpop.xlane.xlu0 %852
        %v854 = vsel %vm850, %v845, 0.0
        %855 = vadd.xlane.f32.xlu0 %v854
        %v856 = vpop.xlane.xlu0 %855
        %v857 = vsel %vm850, %v846, 0.0
        %858 = vadd.xlane.f32.xlu0 %v857
        %v859 = vpop.xlane.xlu0 %858
        %v860 = vsel %vm850, %v847, 0.0
        %861 = vadd.xlane.f32.xlu0 %v860
        %v862 = vpop.xlane.xlu0 %861
        %v863 = vrcp.pop 32.0
        %v864 = vmul.f32 %v853, %v863
        %v865 = vmul.f32 %v856, %v863
        %v866 = vmul.f32 %v859, %v863
        %v867 = vmul.f32 %v862, %v863
        %v868 = vsub.f32 %v844, %v864
        %v869 = vsub.f32 %v845, %v865
        %v870 = vsub.f32 %v846, %v866
        %v871 = vsub.f32 %v847, %v867
        %v872 = vmul.f32 %v868, %v868
        %v873 = vmul.f32 %v869, %v869
        %v874 = vmul.f32 %v870, %v870
        %v875 = vmul.f32 %v871, %v871
        %v876 = vsel %vm850, %v872, 0.0
        %877 = vadd.xlane.f32.xlu0 %v876
        %v878 = vpop.xlane.xlu0 %877
        %v879 = vsel %vm850, %v873, 0.0
        %880 = vadd.xlane.f32.xlu0 %v879
        %v881 = vpop.xlane.xlu0 %880
        %v882 = vsel %vm850, %v874, 0.0
        %883 = vadd.xlane.f32.xlu0 %v882
        %v884 = vpop.xlane.xlu0 %883
        %v885 = vsel %vm850, %v875, 0.0
        %886 = vadd.xlane.f32.xlu0 %v885
        %v887 = vpop.xlane.xlu0 %886
        %v888 = vmul.f32 %v878, %v863
        %v889 = vmul.f32 %v881, %v863
        %v890 = vmul.f32 %v884, %v863
        %v891 = vmul.f32 %v887, %v863
        %v892 = vadd.f32 %v888, 1e-05
        %v893 = vadd.f32 %v889, 1e-05
        %v894 = vadd.f32 %v890, 1e-05
        %v895 = vadd.f32 %v891, 1e-05
        %v896 = vrsqrt.pop %v892
        %v897 = vrsqrt.pop %v893
        %v898 = vrsqrt.pop %v894
        %v899 = vrsqrt.pop %v895
        %v900 = vmul.f32 %v868, %v896
        %v901 = vmul.f32 %v869, %v897
        %v902 = vmul.f32 %v870, %v898
        %v903 = vmul.f32 %v871, %v899
        %v905 = vlaneseq
        %v906 = vshrl.u32 %v905, 7
        %v907 = vsub.s32 0, %v906
        %v908 = vrot.slane %v848, %v907
        %v910 = vmul.f32 %v900, %v908
        %v911 = vmul.f32 %v901, %v908
        %v912 = vmul.f32 %v902, %v908
        %v913 = vmul.f32 %v903, %v908
        %v915 = vlaneseq
        %v916 = vshrl.u32 %v915, 7
        %v917 = vsub.s32 0, %v916
        %v918 = vrot.slane %v849, %v917
        %v920 = vadd.f32 %v910, %v918
        %v921 = vadd.f32 %v911, %v918
        %v922 = vadd.f32 %v912, %v918
        %v923 = vadd.f32 %v913, %v918
        %v924 = vpack.c.bf16 %v921, %v920
        %v925 = vpack.c.bf16 %v923, %v922
        %v926 = vld [vmem:[%s672] sm:$0xf]
        %v927 = vld [vmem:[%s672 + $0x4] sm:$0xf]
        %v928 = vld [vmem:[%s672 + $0x8] sm:$0xf]
        %v929 = vld [vmem:[%s672 + $0xc] sm:$0xf]
        %v934 = vunpack.c.l.b16 %v926
        %v935 = vunpack.c.l.b16 %v927
        %v936 = vunpack.c.l.b16 %v928
        %v937 = vunpack.c.l.b16 %v929
        %v938 = vpack.c.b16 %v935, %v934
        %v939 = vpack.c.b16 %v937, %v936
        %v943 = vsel %vm850, %v924, 0
        %v946 = vsel %vm850, %v925, 0
        %948 = vmatprep.subr.bf16.mxu0 0
        %949 = vmatpush1.bf16.msra.mxu0 %v938
        %950 = vmatprep.subr.bf16.mxu0 0
        %951 = vmatpush1.bf16.msra.mxu0 %v939
        %952 = vmatprep.subr.bf16.mxu0 0
        %953 = vmatpush1.bf16.msra.mxu0 0
        %954 = vmatprep.subr.bf16.mxu0 0
        %955 = vmatpush1.bf16.msra.mxu0 0
        %956 = vmatprep.subr.bf16.mxu0 0
        %957 = vmatpush1.bf16.msra.mxu0 0
        %958 = vmatprep.subr.bf16.mxu0 0
        %959 = vmatpush1.bf16.msra.mxu0 0
        %960 = vmatprep.subr.bf16.mxu0 0
        %961 = vmatpush1.bf16.msra.mxu0 0
        %962 = vmatprep.subr.bf16.mxu0 0
        %963 = vmatpush1.bf16.msra.mxu0 0
        %964 = vmatprep.subr.bf16.mxu0 0
        %965 = vmatpush1.bf16.msra.mxu0 0
        %966 = vmatprep.subr.bf16.mxu0 0
        %967 = vmatpush1.bf16.msra.mxu0 0
        %968 = vmatprep.subr.bf16.mxu0 0
        %969 = vmatpush1.bf16.msra.mxu0 0
        %970 = vmatprep.subr.bf16.mxu0 0
        %971 = vmatpush1.bf16.msra.mxu0 0
        %972 = vmatprep.subr.bf16.mxu0 0
        %973 = vmatpush1.bf16.msra.mxu0 0
        %974 = vmatprep.subr.bf16.mxu0 0
        %975 = vmatpush1.bf16.msra.mxu0 0
        %976 = vmatprep.subr.bf16.mxu0 0
        %977 = vmatpush1.bf16.msra.mxu0 0
        %978 = vmatprep.subr.bf16.mxu0 0
        %979 = vmatpush1.bf16.msra.mxu0 0
        %980 = vmatprep.mubr.bf16.mxu0 0
        %981 = vmatmul.mubr.bf16.gmra.mrb[0].mxu0 %v943
        %v982 = vpop.f32.mrb[0].mxu0
        %v983 = vadd.f32 0.0, %v982
        %v984 = vpop.f32.mrb[0].mxu0
        %v985 = vpop.f32.mrb[0].mxu0
        %v986 = vadd.f32 0.0, %v985
        %v987 = vpop.f32.mrb[0].mxu0
        %988 = vmatprep.mubr.bf16.mxu0 0
        %989 = vmatmul.mubr.bf16.gmra.mrb[0].mxu0 %v946
        %v990 = vpop.f32.mrb[0].mxu0
        %v991 = vadd.f32 0.0, %v990
        %v992 = vpop.f32.mrb[0].mxu0
        %v993 = vpop.f32.mrb[0].mxu0
        %v994 = vadd.f32 0.0, %v993
        %v995 = vpop.f32.mrb[0].mxu0
        %996 = vdwg.mxu0
        %v997 = vpack.c.bf16 %v986, %v983
        %v998 = vpack.c.bf16 %v994, %v991
        %1000 = vrot.lane.b32.xlu0 %v997, 120
        %v1001 = vpop.permute.xlu0 %1000
        %1002 = vrot.lane.b32.xlu0 %v997, 112
        %v1003 = vpop.permute.xlu0 %1002
        %1004 = vrot.lane.b32.xlu0 %v997, 104
        %v1005 = vpop.permute.xlu0 %1004
        %v1008 = vpack.i.b16 %v1001, %v997
        %v1010 = vshrl.u32 %v997, 16
        %v1011 = vshrl.u32 %v1001, 16
        %v1012 = vpack.i.b16 %v1011, %v1010
        %v1016 = vpack.i.b16 %v1005, %v1003
        %v1018 = vshrl.u32 %v1003, 16
        %v1019 = vshrl.u32 %v1005, 16
        %v1020 = vpack.i.b16 %v1019, %v1018
        %v1023 = vpack.i.b16 0, 0
        %v1025 = vshrl.u32 0, 16
        %v1026 = vpack.i.b16 %v1025, %v1025
        %v1028 = vcombine.high %v1008, %v1023
        %v1030 = vunpack.c.l.s4 1983009808
        %v1031 = vunpack.c.0.s8 %v1030
        %v1032 = vlaneseq
        %v1033 = vshrl.u32 %v1032, 7
        %v1034 = vsub.s32 %v1031, %v1033
        %v1035 = vrot.slane %v1008, %v1034
        %v1037 = vunpack.c.l.s4 1983009808
        %v1038 = vunpack.c.0.s8 %v1037
        %v1039 = vlaneseq
        %v1040 = vshrl.u32 %v1039, 7
        %v1041 = vsub.s32 %v1038, %v1040
        %v1042 = vrot.slane %v1028, %v1041
        %v1043 = vcombine.high %v1016, %v1023
        %v1045 = vunpack.c.l.s4 1983009808
        %v1046 = vunpack.c.0.s8 %v1045
        %v1047 = vlaneseq
        %v1048 = vshrl.u32 %v1047, 7
        %v1049 = vsub.s32 %v1046, %v1048
        %v1050 = vrot.slane %v1016, %v1049
        %v1052 = vunpack.c.l.s4 1983009808
        %v1053 = vunpack.c.0.s8 %v1052
        %v1054 = vlaneseq
        %v1055 = vshrl.u32 %v1054, 7
        %v1056 = vsub.s32 %v1053, %v1055
        %v1057 = vrot.slane %v1043, %v1056
        %v1058 = vcombine.low %v1035, %v1050
        %v1059 = vcombine.high %v1035, %v1050
        %v1061 = vunpack.c.l.s4 1934713408
        %v1062 = vunpack.c.0.s8 %v1061
        %v1063 = vlaneseq
        %v1064 = vshrl.u32 %v1063, 7
        %v1065 = vsub.s32 %v1062, %v1064
        %v1066 = vrot.slane %v1058, %v1065
        %v1068 = vunpack.c.l.s4 1934713408
        %v1069 = vunpack.c.0.s8 %v1068
        %v1070 = vlaneseq
        %v1071 = vshrl.u32 %v1070, 7
        %v1072 = vsub.s32 %v1069, %v1071
        %v1073 = vrot.slane %v1059, %v1072
        %v1074 = vcombine.low %v1042, %v1057
        %v1075 = vcombine.high %v1042, %v1057
        %v1077 = vunpack.c.l.s4 1934713408
        %v1078 = vunpack.c.0.s8 %v1077
        %v1079 = vlaneseq
        %v1080 = vshrl.u32 %v1079, 7
        %v1081 = vsub.s32 %v1078, %v1080
        %v1082 = vrot.slane %v1074, %v1081
        %v1084 = vunpack.c.l.s4 1934713408
        %v1085 = vunpack.c.0.s8 %v1084
        %v1086 = vlaneseq
        %v1087 = vshrl.u32 %v1086, 7
        %v1088 = vsub.s32 %v1085, %v1087
        %v1089 = vrot.slane %v1075, %v1088
        %v1090 = vcombine.high %v1066, 0
        %v1091 = vcombine.high %v1073, 0
        %v1092 = vcombine.high %v1082, 0
        %v1093 = vcombine.high %v1089, 0
        %v1094 = vcombine.high %v1012, %v1026
        %v1096 = vunpack.c.l.s4 1983009808
        %v1097 = vunpack.c.0.s8 %v1096
        %v1098 = vlaneseq
        %v1099 = vshrl.u32 %v1098, 7
        %v1100 = vsub.s32 %v1097, %v1099
        %v1101 = vrot.slane %v1012, %v1100
        %v1103 = vunpack.c.l.s4 1983009808
        %v1104 = vunpack.c.0.s8 %v1103
        %v1105 = vlaneseq
        %v1106 = vshrl.u32 %v1105, 7
        %v1107 = vsub.s32 %v1104, %v1106
        %v1108 = vrot.slane %v1094, %v1107
        %v1109 = vcombine.high %v1020, %v1026
        %v1111 = vunpack.c.l.s4 1983009808
        %v1112 = vunpack.c.0.s8 %v1111
        %v1113 = vlaneseq
        %v1114 = vshrl.u32 %v1113, 7
        %v1115 = vsub.s32 %v1112, %v1114
        %v1116 = vrot.slane %v1020, %v1115
        %v1118 = vunpack.c.l.s4 1983009808
        %v1119 = vunpack.c.0.s8 %v1118
        %v1120 = vlaneseq
        %v1121 = vshrl.u32 %v1120, 7
        %v1122 = vsub.s32 %v1119, %v1121
        %v1123 = vrot.slane %v1109, %v1122
        %v1124 = vcombine.low %v1101, %v1116
        %v1125 = vcombine.high %v1101, %v1116
        %v1127 = vunpack.c.l.s4 1934713408
        %v1128 = vunpack.c.0.s8 %v1127
        %v1129 = vlaneseq
        %v1130 = vshrl.u32 %v1129, 7
        %v1131 = vsub.s32 %v1128, %v1130
        %v1132 = vrot.slane %v1124, %v1131
        %v1134 = vunpack.c.l.s4 1934713408
        %v1135 = vunpack.c.0.s8 %v1134
        %v1136 = vlaneseq
        %v1137 = vshrl.u32 %v1136, 7
        %v1138 = vsub.s32 %v1135, %v1137
        %v1139 = vrot.slane %v1125, %v1138
        %v1140 = vcombine.low %v1108, %v1123
        %v1141 = vcombine.high %v1108, %v1123
        %v1143 = vunpack.c.l.s4 1934713408
        %v1144 = vunpack.c.0.s8 %v1143
        %v1145 = vlaneseq
        %v1146 = vshrl.u32 %v1145, 7
        %v1147 = vsub.s32 %v1144, %v1146
        %v1148 = vrot.slane %v1140, %v1147
        %v1150 = vunpack.c.l.s4 1934713408
        %v1151 = vunpack.c.0.s8 %v1150
        %v1152 = vlaneseq
        %v1153 = vshrl.u32 %v1152, 7
        %v1154 = vsub.s32 %v1151, %v1153
        %v1155 = vrot.slane %v1141, %v1154
        %v1156 = vcombine.high %v1132, 0
        %v1157 = vcombine.high %v1139, 0
        %v1158 = vcombine.high %v1148, 0
        %v1159 = vcombine.high %v1155, 0
        %v1160 = vcombine.low %v1066, %v1073
        %v1162 = vunpack.c.l.s4 1983009808
        %v1163 = vunpack.c.0.s8 %v1162
        %v1164 = vlaneseq
        %v1165 = vshrl.u32 %v1164, 7
        %v1166 = vsub.s32 %v1163, %v1165
        %v1167 = vrot.slane %v1160, %v1166
        %v1168 = vcombine.low %v1090, %v1091
        %v1170 = vunpack.c.l.s4 1983009808
        %v1171 = vunpack.c.0.s8 %v1170
        %v1172 = vlaneseq
        %v1173 = vshrl.u32 %v1172, 7
        %v1174 = vsub.s32 %v1171, %v1173
        %v1175 = vrot.slane %v1168, %v1174
        %v1176 = vcombine.low %v1082, %v1089
        %v1178 = vunpack.c.l.s4 1983009808
        %v1179 = vunpack.c.0.s8 %v1178
        %v1180 = vlaneseq
        %v1181 = vshrl.u32 %v1180, 7
        %v1182 = vsub.s32 %v1179, %v1181
        %v1183 = vrot.slane %v1176, %v1182
        %v1184 = vcombine.low %v1092, %v1093
        %v1186 = vunpack.c.l.s4 1983009808
        %v1187 = vunpack.c.0.s8 %v1186
        %v1188 = vlaneseq
        %v1189 = vshrl.u32 %v1188, 7
        %v1190 = vsub.s32 %v1187, %v1189
        %v1191 = vrot.slane %v1184, %v1190
        %v1192 = vcombine.low %v1167, %v1175
        %v1194 = vunpack.c.l.s4 1934713408
        %v1195 = vunpack.c.0.s8 %v1194
        %v1196 = vlaneseq
        %v1197 = vshrl.u32 %v1196, 7
        %v1198 = vsub.s32 %v1195, %v1197
        %v1199 = vrot.slane %v1192, %v1198
        %v1200 = vcombine.low %v1183, %v1191
        %v1202 = vunpack.c.l.s4 1934713408
        %v1203 = vunpack.c.0.s8 %v1202
        %v1204 = vlaneseq
        %v1205 = vshrl.u32 %v1204, 7
        %v1206 = vsub.s32 %v1203, %v1205
        %v1207 = vrot.slane %v1200, %v1206
        %v1208 = vcombine.low %v1199, %v1207
        %v1209 = vcombine.high %v1199, %v1207
        %v1210 = vcombine.low %v1132, %v1139
        %v1212 = vunpack.c.l.s4 1983009808
        %v1213 = vunpack.c.0.s8 %v1212
        %v1214 = vlaneseq
        %v1215 = vshrl.u32 %v1214, 7
        %v1216 = vsub.s32 %v1213, %v1215
        %v1217 = vrot.slane %v1210, %v1216
        %v1218 = vcombine.low %v1156, %v1157
        %v1220 = vunpack.c.l.s4 1983009808
        %v1221 = vunpack.c.0.s8 %v1220
        %v1222 = vlaneseq
        %v1223 = vshrl.u32 %v1222, 7
        %v1224 = vsub.s32 %v1221, %v1223
        %v1225 = vrot.slane %v1218, %v1224
        %v1226 = vcombine.low %v1148, %v1155
        %v1228 = vunpack.c.l.s4 1983009808
        %v1229 = vunpack.c.0.s8 %v1228
        %v1230 = vlaneseq
        %v1231 = vshrl.u32 %v1230, 7
        %v1232 = vsub.s32 %v1229, %v1231
        %v1233 = vrot.slane %v1226, %v1232
        %v1234 = vcombine.low %v1158, %v1159
        %v1236 = vunpack.c.l.s4 1983009808
        %v1237 = vunpack.c.0.s8 %v1236
        %v1238 = vlaneseq
        %v1239 = vshrl.u32 %v1238, 7
        %v1240 = vsub.s32 %v1237, %v1239
        %v1241 = vrot.slane %v1234, %v1240
        %v1242 = vcombine.low %v1217, %v1225
        %v1244 = vunpack.c.l.s4 1934713408
        %v1245 = vunpack.c.0.s8 %v1244
        %v1246 = vlaneseq
        %v1247 = vshrl.u32 %v1246, 7
        %v1248 = vsub.s32 %v1245, %v1247
        %v1249 = vrot.slane %v1242, %v1248
        %v1250 = vcombine.low %v1233, %v1241
        %v1252 = vunpack.c.l.s4 1934713408
        %v1253 = vunpack.c.0.s8 %v1252
        %v1254 = vlaneseq
        %v1255 = vshrl.u32 %v1254, 7
        %v1256 = vsub.s32 %v1253, %v1255
        %v1257 = vrot.slane %v1250, %v1256
        %v1258 = vcombine.low %v1249, %v1257
        %v1259 = vcombine.high %v1249, %v1257
        %v1262 = vpack.i.b16 %v1258, %v1208
        %v1263 = vshrl.u32 %v1208, 16
        %v1264 = vshrl.u32 %v1258, 16
        %v1265 = vpack.i.b16 %v1264, %v1263
        %v1268 = vpack.i.b16 %v1259, %v1209
        %v1269 = vshrl.u32 %v1209, 16
        %v1270 = vshrl.u32 %v1259, 16
        %v1271 = vpack.i.b16 %v1270, %v1269
        %1272 = vrot.lane.b32.xlu0 %v997, 96
        %v1273 = vpop.permute.xlu0 %1272
        %1274 = vrot.lane.b32.xlu0 %v1001, 96
        %v1275 = vpop.permute.xlu0 %1274
        %1276 = vrot.lane.b32.xlu0 %v1003, 96
        %v1277 = vpop.permute.xlu0 %1276
        %1278 = vrot.lane.b32.xlu0 %v1005, 96
        %v1279 = vpop.permute.xlu0 %1278
        %v1282 = vpack.i.b16 %v1275, %v1273
        %v1284 = vshrl.u32 %v1273, 16
        %v1285 = vshrl.u32 %v1275, 16
        %v1286 = vpack.i.b16 %v1285, %v1284
        %v1290 = vpack.i.b16 %v1279, %v1277
        %v1292 = vshrl.u32 %v1277, 16
        %v1293 = vshrl.u32 %v1279, 16
        %v1294 = vpack.i.b16 %v1293, %v1292
        %v1296 = vcombine.high %v1282, %v1023
        %v1298 = vunpack.c.l.s4 1983009808
        %v1299 = vunpack.c.0.s8 %v1298
        %v1300 = vlaneseq
        %v1301 = vshrl.u32 %v1300, 7
        %v1302 = vsub.s32 %v1299, %v1301
        %v1303 = vrot.slane %v1282, %v1302
        %v1305 = vunpack.c.l.s4 1983009808
        %v1306 = vunpack.c.0.s8 %v1305
        %v1307 = vlaneseq
        %v1308 = vshrl.u32 %v1307, 7
        %v1309 = vsub.s32 %v1306, %v1308
        %v1310 = vrot.slane %v1296, %v1309
        %v1311 = vcombine.high %v1290, %v1023
        %v1313 = vunpack.c.l.s4 1983009808
        %v1314 = vunpack.c.0.s8 %v1313
        %v1315 = vlaneseq
        %v1316 = vshrl.u32 %v1315, 7
        %v1317 = vsub.s32 %v1314, %v1316
        %v1318 = vrot.slane %v1290, %v1317
        %v1320 = vunpack.c.l.s4 1983009808
        %v1321 = vunpack.c.0.s8 %v1320
        %v1322 = vlaneseq
        %v1323 = vshrl.u32 %v1322, 7
        %v1324 = vsub.s32 %v1321, %v1323
        %v1325 = vrot.slane %v1311, %v1324
        %v1326 = vcombine.low %v1303, %v1318
        %v1327 = vcombine.high %v1303, %v1318
        %v1329 = vunpack.c.l.s4 1934713408
        %v1330 = vunpack.c.0.s8 %v1329
        %v1331 = vlaneseq
        %v1332 = vshrl.u32 %v1331, 7
        %v1333 = vsub.s32 %v1330, %v1332
        %v1334 = vrot.slane %v1326, %v1333
        %v1336 = vunpack.c.l.s4 1934713408
        %v1337 = vunpack.c.0.s8 %v1336
        %v1338 = vlaneseq
        %v1339 = vshrl.u32 %v1338, 7
        %v1340 = vsub.s32 %v1337, %v1339
        %v1341 = vrot.slane %v1327, %v1340
        %v1342 = vcombine.low %v1310, %v1325
        %v1343 = vcombine.high %v1310, %v1325
        %v1345 = vunpack.c.l.s4 1934713408
        %v1346 = vunpack.c.0.s8 %v1345
        %v1347 = vlaneseq
        %v1348 = vshrl.u32 %v1347, 7
        %v1349 = vsub.s32 %v1346, %v1348
        %v1350 = vrot.slane %v1342, %v1349
        %v1352 = vunpack.c.l.s4 1934713408
        %v1353 = vunpack.c.0.s8 %v1352
        %v1354 = vlaneseq
        %v1355 = vshrl.u32 %v1354, 7
        %v1356 = vsub.s32 %v1353, %v1355
        %v1357 = vrot.slane %v1343, %v1356
        %v1358 = vcombine.high %v1334, 0
        %v1359 = vcombine.high %v1341, 0
        %v1360 = vcombine.high %v1350, 0
        %v1361 = vcombine.high %v1357, 0
        %v1362 = vcombine.high %v1286, %v1026
        %v1364 = vunpack.c.l.s4 1983009808
        %v1365 = vunpack.c.0.s8 %v1364
        %v1366 = vlaneseq
        %v1367 = vshrl.u32 %v1366, 7
        %v1368 = vsub.s32 %v1365, %v1367
        %v1369 = vrot.slane %v1286, %v1368
        %v1371 = vunpack.c.l.s4 1983009808
        %v1372 = vunpack.c.0.s8 %v1371
        %v1373 = vlaneseq
        %v1374 = vshrl.u32 %v1373, 7
        %v1375 = vsub.s32 %v1372, %v1374
        %v1376 = vrot.slane %v1362, %v1375
        %v1377 = vcombine.high %v1294, %v1026
        %v1379 = vunpack.c.l.s4 1983009808
        %v1380 = vunpack.c.0.s8 %v1379
        %v1381 = vlaneseq
        %v1382 = vshrl.u32 %v1381, 7
        %v1383 = vsub.s32 %v1380, %v1382
        %v1384 = vrot.slane %v1294, %v1383
        %v1386 = vunpack.c.l.s4 1983009808
        %v1387 = vunpack.c.0.s8 %v1386
        %v1388 = vlaneseq
        %v1389 = vshrl.u32 %v1388, 7
        %v1390 = vsub.s32 %v1387, %v1389
        %v1391 = vrot.slane %v1377, %v1390
        %v1392 = vcombine.low %v1369, %v1384
        %v1393 = vcombine.high %v1369, %v1384
        %v1395 = vunpack.c.l.s4 1934713408
        %v1396 = vunpack.c.0.s8 %v1395
        %v1397 = vlaneseq
        %v1398 = vshrl.u32 %v1397, 7
        %v1399 = vsub.s32 %v1396, %v1398
        %v1400 = vrot.slane %v1392, %v1399
        %v1402 = vunpack.c.l.s4 1934713408
        %v1403 = vunpack.c.0.s8 %v1402
        %v1404 = vlaneseq
        %v1405 = vshrl.u32 %v1404, 7
        %v1406 = vsub.s32 %v1403, %v1405
        %v1407 = vrot.slane %v1393, %v1406
        %v1408 = vcombine.low %v1376, %v1391
        %v1409 = vcombine.high %v1376, %v1391
        %v1411 = vunpack.c.l.s4 1934713408
        %v1412 = vunpack.c.0.s8 %v1411
        %v1413 = vlaneseq
        %v1414 = vshrl.u32 %v1413, 7
        %v1415 = vsub.s32 %v1412, %v1414
        %v1416 = vrot.slane %v1408, %v1415
        %v1418 = vunpack.c.l.s4 1934713408
        %v1419 = vunpack.c.0.s8 %v1418
        %v1420 = vlaneseq
        %v1421 = vshrl.u32 %v1420, 7
        %v1422 = vsub.s32 %v1419, %v1421
        %v1423 = vrot.slane %v1409, %v1422
        %v1424 = vcombine.high %v1400, 0
        %v1425 = vcombine.high %v1407, 0
        %v1426 = vcombine.high %v1416, 0
        %v1427 = vcombine.high %v1423, 0
        %v1428 = vcombine.low %v1334, %v1341
        %v1430 = vunpack.c.l.s4 1983009808
        %v1431 = vunpack.c.0.s8 %v1430
        %v1432 = vlaneseq
        %v1433 = vshrl.u32 %v1432, 7
        %v1434 = vsub.s32 %v1431, %v1433
        %v1435 = vrot.slane %v1428, %v1434
        %v1436 = vcombine.low %v1358, %v1359
        %v1438 = vunpack.c.l.s4 1983009808
        %v1439 = vunpack.c.0.s8 %v1438
        %v1440 = vlaneseq
        %v1441 = vshrl.u32 %v1440, 7
        %v1442 = vsub.s32 %v1439, %v1441
        %v1443 = vrot.slane %v1436, %v1442
        %v1444 = vcombine.low %v1350, %v1357
        %v1446 = vunpack.c.l.s4 1983009808
        %v1447 = vunpack.c.0.s8 %v1446
        %v1448 = vlaneseq
        %v1449 = vshrl.u32 %v1448, 7
        %v1450 = vsub.s32 %v1447, %v1449
        %v1451 = vrot.slane %v1444, %v1450
        %v1452 = vcombine.low %v1360, %v1361
        %v1454 = vunpack.c.l.s4 1983009808
        %v1455 = vunpack.c.0.s8 %v1454
        %v1456 = vlaneseq
        %v1457 = vshrl.u32 %v1456, 7
        %v1458 = vsub.s32 %v1455, %v1457
        %v1459 = vrot.slane %v1452, %v1458
        %v1460 = vcombine.low %v1435, %v1443
        %v1462 = vunpack.c.l.s4 1934713408
        %v1463 = vunpack.c.0.s8 %v1462
        %v1464 = vlaneseq
        %v1465 = vshrl.u32 %v1464, 7
        %v1466 = vsub.s32 %v1463, %v1465
        %v1467 = vrot.slane %v1460, %v1466
        %v1468 = vcombine.low %v1451, %v1459
        %v1470 = vunpack.c.l.s4 1934713408
        %v1471 = vunpack.c.0.s8 %v1470
        %v1472 = vlaneseq
        %v1473 = vshrl.u32 %v1472, 7
        %v1474 = vsub.s32 %v1471, %v1473
        %v1475 = vrot.slane %v1468, %v1474
        %v1476 = vcombine.low %v1467, %v1475
        %v1477 = vcombine.high %v1467, %v1475
        %v1478 = vcombine.low %v1400, %v1407
        %v1480 = vunpack.c.l.s4 1983009808
        %v1481 = vunpack.c.0.s8 %v1480
        %v1482 = vlaneseq
        %v1483 = vshrl.u32 %v1482, 7
        %v1484 = vsub.s32 %v1481, %v1483
        %v1485 = vrot.slane %v1478, %v1484
        %v1486 = vcombine.low %v1424, %v1425
        %v1488 = vunpack.c.l.s4 1983009808
        %v1489 = vunpack.c.0.s8 %v1488
        %v1490 = vlaneseq
        %v1491 = vshrl.u32 %v1490, 7
        %v1492 = vsub.s32 %v1489, %v1491
        %v1493 = vrot.slane %v1486, %v1492
        %v1494 = vcombine.low %v1416, %v1423
        %v1496 = vunpack.c.l.s4 1983009808
        %v1497 = vunpack.c.0.s8 %v1496
        %v1498 = vlaneseq
        %v1499 = vshrl.u32 %v1498, 7
        %v1500 = vsub.s32 %v1497, %v1499
        %v1501 = vrot.slane %v1494, %v1500
        %v1502 = vcombine.low %v1426, %v1427
        %v1504 = vunpack.c.l.s4 1983009808
        %v1505 = vunpack.c.0.s8 %v1504
        %v1506 = vlaneseq
        %v1507 = vshrl.u32 %v1506, 7
        %v1508 = vsub.s32 %v1505, %v1507
        %v1509 = vrot.slane %v1502, %v1508
        %v1510 = vcombine.low %v1485, %v1493
        %v1512 = vunpack.c.l.s4 1934713408
        %v1513 = vunpack.c.0.s8 %v1512
        %v1514 = vlaneseq
        %v1515 = vshrl.u32 %v1514, 7
        %v1516 = vsub.s32 %v1513, %v1515
        %v1517 = vrot.slane %v1510, %v1516
        %v1518 = vcombine.low %v1501, %v1509
        %v1520 = vunpack.c.l.s4 1934713408
        %v1521 = vunpack.c.0.s8 %v1520
        %v1522 = vlaneseq
        %v1523 = vshrl.u32 %v1522, 7
        %v1524 = vsub.s32 %v1521, %v1523
        %v1525 = vrot.slane %v1518, %v1524
        %v1526 = vcombine.low %v1517, %v1525
        %v1527 = vcombine.high %v1517, %v1525
        %v1530 = vpack.i.b16 %v1526, %v1476
        %v1531 = vshrl.u32 %v1476, 16
        %v1532 = vshrl.u32 %v1526, 16
        %v1533 = vpack.i.b16 %v1532, %v1531
        %v1536 = vpack.i.b16 %v1527, %v1477
        %v1537 = vshrl.u32 %v1477, 16
        %v1538 = vshrl.u32 %v1527, 16
        %v1539 = vpack.i.b16 %v1538, %v1537
        %1540 = vrot.lane.b32.xlu0 %v997, 64
        %v1541 = vpop.permute.xlu0 %1540
        %1542 = vrot.lane.b32.xlu0 %v1001, 64
        %v1543 = vpop.permute.xlu0 %1542
        %1544 = vrot.lane.b32.xlu0 %v1003, 64
        %v1545 = vpop.permute.xlu0 %1544
        %1546 = vrot.lane.b32.xlu0 %v1005, 64
        %v1547 = vpop.permute.xlu0 %1546
        %v1550 = vpack.i.b16 %v1543, %v1541
        %v1552 = vshrl.u32 %v1541, 16
        %v1553 = vshrl.u32 %v1543, 16
        %v1554 = vpack.i.b16 %v1553, %v1552
        %v1558 = vpack.i.b16 %v1547, %v1545
        %v1560 = vshrl.u32 %v1545, 16
        %v1561 = vshrl.u32 %v1547, 16
        %v1562 = vpack.i.b16 %v1561, %v1560
        %v1564 = vcombine.high %v1550, %v1023
        %v1566 = vunpack.c.l.s4 1983009808
        %v1567 = vunpack.c.0.s8 %v1566
        %v1568 = vlaneseq
        %v1569 = vshrl.u32 %v1568, 7
        %v1570 = vsub.s32 %v1567, %v1569
        %v1571 = vrot.slane %v1550, %v1570
        %v1573 = vunpack.c.l.s4 1983009808
        %v1574 = vunpack.c.0.s8 %v1573
        %v1575 = vlaneseq
        %v1576 = vshrl.u32 %v1575, 7
        %v1577 = vsub.s32 %v1574, %v1576
        %v1578 = vrot.slane %v1564, %v1577
        %v1579 = vcombine.high %v1558, %v1023
        %v1581 = vunpack.c.l.s4 1983009808
        %v1582 = vunpack.c.0.s8 %v1581
        %v1583 = vlaneseq
        %v1584 = vshrl.u32 %v1583, 7
        %v1585 = vsub.s32 %v1582, %v1584
        %v1586 = vrot.slane %v1558, %v1585
        %v1588 = vunpack.c.l.s4 1983009808
        %v1589 = vunpack.c.0.s8 %v1588
        %v1590 = vlaneseq
        %v1591 = vshrl.u32 %v1590, 7
        %v1592 = vsub.s32 %v1589, %v1591
        %v1593 = vrot.slane %v1579, %v1592
        %v1594 = vcombine.low %v1571, %v1586
        %v1595 = vcombine.high %v1571, %v1586
        %v1597 = vunpack.c.l.s4 1934713408
        %v1598 = vunpack.c.0.s8 %v1597
        %v1599 = vlaneseq
        %v1600 = vshrl.u32 %v1599, 7
        %v1601 = vsub.s32 %v1598, %v1600
        %v1602 = vrot.slane %v1594, %v1601
        %v1604 = vunpack.c.l.s4 1934713408
        %v1605 = vunpack.c.0.s8 %v1604
        %v1606 = vlaneseq
        %v1607 = vshrl.u32 %v1606, 7
        %v1608 = vsub.s32 %v1605, %v1607
        %v1609 = vrot.slane %v1595, %v1608
        %v1610 = vcombine.low %v1578, %v1593
        %v1611 = vcombine.high %v1578, %v1593
        %v1613 = vunpack.c.l.s4 1934713408
        %v1614 = vunpack.c.0.s8 %v1613
        %v1615 = vlaneseq
        %v1616 = vshrl.u32 %v1615, 7
        %v1617 = vsub.s32 %v1614, %v1616
        %v1618 = vrot.slane %v1610, %v1617
        %v1620 = vunpack.c.l.s4 1934713408
        %v1621 = vunpack.c.0.s8 %v1620
        %v1622 = vlaneseq
        %v1623 = vshrl.u32 %v1622, 7
        %v1624 = vsub.s32 %v1621, %v1623
        %v1625 = vrot.slane %v1611, %v1624
        %v1626 = vcombine.high %v1602, 0
        %v1627 = vcombine.high %v1609, 0
        %v1628 = vcombine.high %v1618, 0
        %v1629 = vcombine.high %v1625, 0
        %v1630 = vcombine.high %v1554, %v1026
        %v1632 = vunpack.c.l.s4 1983009808
        %v1633 = vunpack.c.0.s8 %v1632
        %v1634 = vlaneseq
        %v1635 = vshrl.u32 %v1634, 7
        %v1636 = vsub.s32 %v1633, %v1635
        %v1637 = vrot.slane %v1554, %v1636
        %v1639 = vunpack.c.l.s4 1983009808
        %v1640 = vunpack.c.0.s8 %v1639
        %v1641 = vlaneseq
        %v1642 = vshrl.u32 %v1641, 7
        %v1643 = vsub.s32 %v1640, %v1642
        %v1644 = vrot.slane %v1630, %v1643
        %v1645 = vcombine.high %v1562, %v1026
        %v1647 = vunpack.c.l.s4 1983009808
        %v1648 = vunpack.c.0.s8 %v1647
        %v1649 = vlaneseq
        %v1650 = vshrl.u32 %v1649, 7
        %v1651 = vsub.s32 %v1648, %v1650
        %v1652 = vrot.slane %v1562, %v1651
        %v1654 = vunpack.c.l.s4 1983009808
        %v1655 = vunpack.c.0.s8 %v1654
        %v1656 = vlaneseq
        %v1657 = vshrl.u32 %v1656, 7
        %v1658 = vsub.s32 %v1655, %v1657
        %v1659 = vrot.slane %v1645, %v1658
        %v1660 = vcombine.low %v1637, %v1652
        %v1661 = vcombine.high %v1637, %v1652
        %v1663 = vunpack.c.l.s4 1934713408
        %v1664 = vunpack.c.0.s8 %v1663
        %v1665 = vlaneseq
        %v1666 = vshrl.u32 %v1665, 7
        %v1667 = vsub.s32 %v1664, %v1666
        %v1668 = vrot.slane %v1660, %v1667
        %v1670 = vunpack.c.l.s4 1934713408
        %v1671 = vunpack.c.0.s8 %v1670
        %v1672 = vlaneseq
        %v1673 = vshrl.u32 %v1672, 7
        %v1674 = vsub.s32 %v1671, %v1673
        %v1675 = vrot.slane %v1661, %v1674
        %v1676 = vcombine.low %v1644, %v1659
        %v1677 = vcombine.high %v1644, %v1659
        %v1679 = vunpack.c.l.s4 1934713408
        %v1680 = vunpack.c.0.s8 %v1679
        %v1681 = vlaneseq
        %v1682 = vshrl.u32 %v1681, 7
        %v1683 = vsub.s32 %v1680, %v1682
        %v1684 = vrot.slane %v1676, %v1683
        %v1686 = vunpack.c.l.s4 1934713408
        %v1687 = vunpack.c.0.s8 %v1686
        %v1688 = vlaneseq
        %v1689 = vshrl.u32 %v1688, 7
        %v1690 = vsub.s32 %v1687, %v1689
        %v1691 = vrot.slane %v1677, %v1690
        %v1692 = vcombine.high %v1668, 0
        %v1693 = vcombine.high %v1675, 0
        %v1694 = vcombine.high %v1684, 0
        %v1695 = vcombine.high %v1691, 0
        %v1696 = vcombine.low %v1602, %v1609
        %v1698 = vunpack.c.l.s4 1983009808
        %v1699 = vunpack.c.0.s8 %v1698
        %v1700 = vlaneseq
        %v1701 = vshrl.u32 %v1700, 7
        %v1702 = vsub.s32 %v1699, %v1701
        %v1703 = vrot.slane %v1696, %v1702
        %v1704 = vcombine.low %v1626, %v1627
        %v1706 = vunpack.c.l.s4 1983009808
        %v1707 = vunpack.c.0.s8 %v1706
        %v1708 = vlaneseq
        %v1709 = vshrl.u32 %v1708, 7
        %v1710 = vsub.s32 %v1707, %v1709
        %v1711 = vrot.slane %v1704, %v1710
        %v1712 = vcombine.low %v1618, %v1625
        %v1714 = vunpack.c.l.s4 1983009808
        %v1715 = vunpack.c.0.s8 %v1714
        %v1716 = vlaneseq
        %v1717 = vshrl.u32 %v1716, 7
        %v1718 = vsub.s32 %v1715, %v1717
        %v1719 = vrot.slane %v1712, %v1718
        %v1720 = vcombine.low %v1628, %v1629
        %v1722 = vunpack.c.l.s4 1983009808
        %v1723 = vunpack.c.0.s8 %v1722
        %v1724 = vlaneseq
        %v1725 = vshrl.u32 %v1724, 7
        %v1726 = vsub.s32 %v1723, %v1725
        %v1727 = vrot.slane %v1720, %v1726
        %v1728 = vcombine.low %v1703, %v1711
        %v1730 = vunpack.c.l.s4 1934713408
        %v1731 = vunpack.c.0.s8 %v1730
        %v1732 = vlaneseq
        %v1733 = vshrl.u32 %v1732, 7
        %v1734 = vsub.s32 %v1731, %v1733
        %v1735 = vrot.slane %v1728, %v1734
        %v1736 = vcombine.low %v1719, %v1727
        %v1738 = vunpack.c.l.s4 1934713408
        %v1739 = vunpack.c.0.s8 %v1738
        %v1740 = vlaneseq
        %v1741 = vshrl.u32 %v1740, 7
        %v1742 = vsub.s32 %v1739, %v1741
        %v1743 = vrot.slane %v1736, %v1742
        %v1744 = vcombine.low %v1735, %v1743
        %v1745 = vcombine.high %v1735, %v1743
        %v1746 = vcombine.low %v1668, %v1675
        %v1748 = vunpack.c.l.s4 1983009808
        %v1749 = vunpack.c.0.s8 %v1748
        %v1750 = vlaneseq
        %v1751 = vshrl.u32 %v1750, 7
        %v1752 = vsub.s32 %v1749, %v1751
        %v1753 = vrot.slane %v1746, %v1752
        %v1754 = vcombine.low %v1692, %v1693
        %v1756 = vunpack.c.l.s4 1983009808
        %v1757 = vunpack.c.0.s8 %v1756
        %v1758 = vlaneseq
        %v1759 = vshrl.u32 %v1758, 7
        %v1760 = vsub.s32 %v1757, %v1759
        %v1761 = vrot.slane %v1754, %v1760
        %v1762 = vcombine.low %v1684, %v1691
        %v1764 = vunpack.c.l.s4 1983009808
        %v1765 = vunpack.c.0.s8 %v1764
        %v1766 = vlaneseq
        %v1767 = vshrl.u32 %v1766, 7
        %v1768 = vsub.s32 %v1765, %v1767
        %v1769 = vrot.slane %v1762, %v1768
        %v1770 = vcombine.low %v1694, %v1695
        %v1772 = vunpack.c.l.s4 1983009808
        %v1773 = vunpack.c.0.s8 %v1772
        %v1774 = vlaneseq
        %v1775 = vshrl.u32 %v1774, 7
        %v1776 = vsub.s32 %v1773, %v1775
        %v1777 = vrot.slane %v1770, %v1776
        %v1778 = vcombine.low %v1753, %v1761
        %v1780 = vunpack.c.l.s4 1934713408
        %v1781 = vunpack.c.0.s8 %v1780
        %v1782 = vlaneseq
        %v1783 = vshrl.u32 %v1782, 7
        %v1784 = vsub.s32 %v1781, %v1783
        %v1785 = vrot.slane %v1778, %v1784
        %v1786 = vcombine.low %v1769, %v1777
        %v1788 = vunpack.c.l.s4 1934713408
        %v1789 = vunpack.c.0.s8 %v1788
        %v1790 = vlaneseq
        %v1791 = vshrl.u32 %v1790, 7
        %v1792 = vsub.s32 %v1789, %v1791
        %v1793 = vrot.slane %v1786, %v1792
        %v1794 = vcombine.low %v1785, %v1793
        %v1795 = vcombine.high %v1785, %v1793
        %v1798 = vpack.i.b16 %v1794, %v1744
        %v1800 = vshrl.u32 %v1744, 16
        %v1801 = vshrl.u32 %v1794, 16
        %v1802 = vpack.i.b16 %v1801, %v1800
        %v1806 = vpack.i.b16 %v1795, %v1745
        %v1808 = vshrl.u32 %v1745, 16
        %v1809 = vshrl.u32 %v1795, 16
        %v1810 = vpack.i.b16 %v1809, %v1808
        %vm1812 = vcmask 64512
        %v1814 = vsel %vm1812, %v1262, 0
        %v1817 = vsel %vm1812, %v1530, 0
        %1819 = vmatprep.subr.bf16.mxu0 0
        %1820 = vmatpush1.bf16.xpose.msra.mxu0 %v1817
        %1821 = vmatprep.subr.bf16.mxu0 0
        %1822 = vmatpush1.bf16.xpose.msra.mxu0 0
        %1823 = vmatprep.subr.bf16.mxu0 0
        %1824 = vmatpush1.bf16.xpose.msra.mxu0 0
        %1825 = vmatprep.subr.bf16.mxu0 0
        %1826 = vmatpush1.bf16.xpose.msra.mxu0 0
        %1827 = vmatprep.subr.bf16.mxu0 0
        %1828 = vmatpush1.bf16.xpose.msra.mxu0 0
        %1829 = vmatprep.subr.bf16.mxu0 0
        %1830 = vmatpush1.bf16.xpose.msra.mxu0 0
        %1831 = vmatprep.subr.bf16.mxu0 0
        %1832 = vmatpush1.bf16.xpose.msra.mxu0 0
        %1833 = vmatprep.subr.bf16.mxu0 0
        %1834 = vmatpush1.bf16.xpose.msra.mxu0 0
        %1835 = vmatprep.subr.bf16.mxu0 0
        %1836 = vmatpush1.bf16.xpose.msra.mxu0 0
        %1837 = vmatprep.subr.bf16.mxu0 0
        %1838 = vmatpush1.bf16.xpose.msra.mxu0 0
        %1839 = vmatprep.subr.bf16.mxu0 0
        %1840 = vmatpush1.bf16.xpose.msra.mxu0 0
        %1841 = vmatprep.subr.bf16.mxu0 0
        %1842 = vmatpush1.bf16.xpose.msra.mxu0 0
        %1843 = vmatprep.subr.bf16.mxu0 0
        %1844 = vmatpush1.bf16.xpose.msra.mxu0 0
        %1845 = vmatprep.subr.bf16.mxu0 0
        %1846 = vmatpush1.bf16.xpose.msra.mxu0 0
        %1847 = vmatprep.subr.bf16.mxu0 0
        %1848 = vmatpush1.bf16.xpose.msra.mxu0 0
        %1849 = vmatprep.subr.bf16.mxu0 0
        %1850 = vmatpush1.bf16.xpose.msra.mxu0 0
        %1851 = vmatprep.mubr.bf16.mxu0 0
        %1852 = vmatmul.mubr.bf16.gmra.mrb[0].mxu0 %v1814
        %v1853 = vpop.f32.mrb[0].mxu0
        %v1854 = vadd.f32 0.0, %v1853
        %v1855 = vpop.f32.mrb[0].mxu0
        %v1856 = vpop.f32.mrb[0].mxu0
        %v1857 = vadd.f32 0.0, %v1856
        %v1858 = vpop.f32.mrb[0].mxu0
        %1859 = vdwg.mxu0
        %v1861 = vsel %vm1812, %v1265, 0
        %v1864 = vsel %vm1812, %v1533, 0
        %1866 = vmatprep.subr.bf16.mxu0 0
        %1867 = vmatpush1.bf16.xpose.msra.mxu0 %v1864
        %1868 = vmatprep.subr.bf16.mxu0 0
        %1869 = vmatpush1.bf16.xpose.msra.mxu0 0
        %1870 = vmatprep.subr.bf16.mxu0 0
        %1871 = vmatpush1.bf16.xpose.msra.mxu0 0
        %1872 = vmatprep.subr.bf16.mxu0 0
        %1873 = vmatpush1.bf16.xpose.msra.mxu0 0
        %1874 = vmatprep.subr.bf16.mxu0 0
        %1875 = vmatpush1.bf16.xpose.msra.mxu0 0
        %1876 = vmatprep.subr.bf16.mxu0 0
        %1877 = vmatpush1.bf16.xpose.msra.mxu0 0
        %1878 = vmatprep.subr.bf16.mxu0 0
        %1879 = vmatpush1.bf16.xpose.msra.mxu0 0
        %1880 = vmatprep.subr.bf16.mxu0 0
        %1881 = vmatpush1.bf16.xpose.msra.mxu0 0
        %1882 = vmatprep.subr.bf16.mxu0 0
        %1883 = vmatpush1.bf16.xpose.msra.mxu0 0
        %1884 = vmatprep.subr.bf16.mxu0 0
        %1885 = vmatpush1.bf16.xpose.msra.mxu0 0
        %1886 = vmatprep.subr.bf16.mxu0 0
        %1887 = vmatpush1.bf16.xpose.msra.mxu0 0
        %1888 = vmatprep.subr.bf16.mxu0 0
        %1889 = vmatpush1.bf16.xpose.msra.mxu0 0
        %1890 = vmatprep.subr.bf16.mxu0 0
        %1891 = vmatpush1.bf16.xpose.msra.mxu0 0
        %1892 = vmatprep.subr.bf16.mxu0 0
        %1893 = vmatpush1.bf16.xpose.msra.mxu0 0
        %1894 = vmatprep.subr.bf16.mxu0 0
        %1895 = vmatpush1.bf16.xpose.msra.mxu0 0
        %1896 = vmatprep.subr.bf16.mxu0 0
        %1897 = vmatpush1.bf16.xpose.msra.mxu0 0
        %1898 = vmatprep.mubr.bf16.mxu0 0
        %1899 = vmatmul.mubr.bf16.gmra.mrb[0].mxu0 %v1861
        %v1900 = vpop.f32.mrb[0].mxu0
        %v1901 = vadd.f32 0.0, %v1900
        %v1902 = vpop.f32.mrb[0].mxu0
        %v1903 = vpop.f32.mrb[0].mxu0
        %v1904 = vadd.f32 0.0, %v1903
        %v1905 = vpop.f32.mrb[0].mxu0
        %1906 = vdwg.mxu0
        %v1908 = vsel %vm1812, %v1268, 0
        %v1911 = vsel %vm1812, %v1536, 0
        %1913 = vmatprep.subr.bf16.mxu0 0
        %1914 = vmatpush1.bf16.xpose.msra.mxu0 %v1911
        %1915 = vmatprep.subr.bf16.mxu0 0
        %1916 = vmatpush1.bf16.xpose.msra.mxu0 0
        %1917 = vmatprep.subr.bf16.mxu0 0
        %1918 = vmatpush1.bf16.xpose.msra.mxu0 0
        %1919 = vmatprep.subr.bf16.mxu0 0
        %1920 = vmatpush1.bf16.xpose.msra.mxu0 0
        %1921 = vmatprep.subr.bf16.mxu0 0
        %1922 = vmatpush1.bf16.xpose.msra.mxu0 0
        %1923 = vmatprep.subr.bf16.mxu0 0
        %1924 = vmatpush1.bf16.xpose.msra.mxu0 0
        %1925 = vmatprep.subr.bf16.mxu0 0
        %1926 = vmatpush1.bf16.xpose.msra.mxu0 0
        %1927 = vmatprep.subr.bf16.mxu0 0
        %1928 = vmatpush1.bf16.xpose.msra.mxu0 0
        %1929 = vmatprep.subr.bf16.mxu0 0
        %1930 = vmatpush1.bf16.xpose.msra.mxu0 0
        %1931 = vmatprep.subr.bf16.mxu0 0
        %1932 = vmatpush1.bf16.xpose.msra.mxu0 0
        %1933 = vmatprep.subr.bf16.mxu0 0
        %1934 = vmatpush1.bf16.xpose.msra.mxu0 0
        %1935 = vmatprep.subr.bf16.mxu0 0
        %1936 = vmatpush1.bf16.xpose.msra.mxu0 0
        %1937 = vmatprep.subr.bf16.mxu0 0
        %1938 = vmatpush1.bf16.xpose.msra.mxu0 0
        %1939 = vmatprep.subr.bf16.mxu0 0
        %1940 = vmatpush1.bf16.xpose.msra.mxu0 0
        %1941 = vmatprep.subr.bf16.mxu0 0
        %1942 = vmatpush1.bf16.xpose.msra.mxu0 0
        %1943 = vmatprep.subr.bf16.mxu0 0
        %1944 = vmatpush1.bf16.xpose.msra.mxu0 0
        %1945 = vmatprep.mubr.bf16.mxu0 0
        %1946 = vmatmul.mubr.bf16.gmra.mrb[0].mxu0 %v1908
        %v1947 = vpop.f32.mrb[0].mxu0
        %v1948 = vadd.f32 0.0, %v1947
        %v1949 = vpop.f32.mrb[0].mxu0
        %v1950 = vpop.f32.mrb[0].mxu0
        %v1951 = vadd.f32 0.0, %v1950
        %v1952 = vpop.f32.mrb[0].mxu0
        %1953 = vdwg.mxu0
        %v1955 = vsel %vm1812, %v1271, 0
        %v1958 = vsel %vm1812, %v1539, 0
        %1960 = vmatprep.subr.bf16.mxu0 0
        %1961 = vmatpush1.bf16.xpose.msra.mxu0 %v1958
        %1962 = vmatprep.subr.bf16.mxu0 0
        %1963 = vmatpush1.bf16.xpose.msra.mxu0 0
        %1964 = vmatprep.subr.bf16.mxu0 0
        %1965 = vmatpush1.bf16.xpose.msra.mxu0 0
        %1966 = vmatprep.subr.bf16.mxu0 0
        %1967 = vmatpush1.bf16.xpose.msra.mxu0 0
        %1968 = vmatprep.subr.bf16.mxu0 0
        %1969 = vmatpush1.bf16.xpose.msra.mxu0 0
        %1970 = vmatprep.subr.bf16.mxu0 0
        %1971 = vmatpush1.bf16.xpose.msra.mxu0 0
        %1972 = vmatprep.subr.bf16.mxu0 0
        %1973 = vmatpush1.bf16.xpose.msra.mxu0 0
        %1974 = vmatprep.subr.bf16.mxu0 0
        %1975 = vmatpush1.bf16.xpose.msra.mxu0 0
        %1976 = vmatprep.subr.bf16.mxu0 0
        %1977 = vmatpush1.bf16.xpose.msra.mxu0 0
        %1978 = vmatprep.subr.bf16.mxu0 0
        %1979 = vmatpush1.bf16.xpose.msra.mxu0 0
        %1980 = vmatprep.subr.bf16.mxu0 0
        %1981 = vmatpush1.bf16.xpose.msra.mxu0 0
        %1982 = vmatprep.subr.bf16.mxu0 0
        %1983 = vmatpush1.bf16.xpose.msra.mxu0 0
        %1984 = vmatprep.subr.bf16.mxu0 0
        %1985 = vmatpush1.bf16.xpose.msra.mxu0 0
        %1986 = vmatprep.subr.bf16.mxu0 0
        %1987 = vmatpush1.bf16.xpose.msra.mxu0 0
        %1988 = vmatprep.subr.bf16.mxu0 0
        %1989 = vmatpush1.bf16.xpose.msra.mxu0 0
        %1990 = vmatprep.subr.bf16.mxu0 0
        %1991 = vmatpush1.bf16.xpose.msra.mxu0 0
        %1992 = vmatprep.mubr.bf16.mxu0 0
        %1993 = vmatmul.mubr.bf16.gmra.mrb[0].mxu0 %v1955
        %v1994 = vpop.f32.mrb[0].mxu0
        %v1995 = vadd.f32 0.0, %v1994
        %v1996 = vpop.f32.mrb[0].mxu0
        %v1997 = vpop.f32.mrb[0].mxu0
        %v1998 = vadd.f32 0.0, %v1997
        %v1999 = vpop.f32.mrb[0].mxu0
        %2000 = vdwg.mxu0
        %vm2001 = vcmask 130048
        %v2002 = vsel %vm2001, %v1854, -inf
        %2003 = vmax.xlane.f32.xlu0 %v2002
        %v2004 = vpop.xlane.xlu0 %2003
        %v2005 = vsel %vm2001, %v1857, -inf
        %2006 = vmax.xlane.f32.xlu0 %v2005
        %v2007 = vpop.xlane.xlu0 %2006
        %v2008 = vsel %vm2001, %v1901, -inf
        %2009 = vmax.xlane.f32.xlu0 %v2008
        %v2010 = vpop.xlane.xlu0 %2009
        %v2011 = vsel %vm2001, %v1904, -inf
        %2012 = vmax.xlane.f32.xlu0 %v2011
        %v2013 = vpop.xlane.xlu0 %2012
        %v2014 = vsel %vm2001, %v1948, -inf
        %2015 = vmax.xlane.f32.xlu0 %v2014
        %v2016 = vpop.xlane.xlu0 %2015
        %v2017 = vsel %vm2001, %v1951, -inf
        %2018 = vmax.xlane.f32.xlu0 %v2017
        %v2019 = vpop.xlane.xlu0 %2018
        %v2020 = vsel %vm2001, %v1995, -inf
        %2021 = vmax.xlane.f32.xlu0 %v2020
        %v2022 = vpop.xlane.xlu0 %2021
        %v2023 = vsel %vm2001, %v1998, -inf
        %2024 = vmax.xlane.f32.xlu0 %v2023
        %v2025 = vpop.xlane.xlu0 %2024
        %v2026 = vsub.f32 %v1854, %v2004
        %v2027 = vsub.f32 %v1857, %v2007
        %v2028 = vsub.f32 %v1901, %v2010
        %v2029 = vsub.f32 %v1904, %v2013
        %v2030 = vsub.f32 %v1948, %v2016
        %v2031 = vsub.f32 %v1951, %v2019
        %v2032 = vsub.f32 %v1995, %v2022
        %v2033 = vsub.f32 %v1998, %v2025
        %v2034 = vmul.f32 %v2026, 1.442695
        %v2035 = vpow.pop %v2034
        %v2036 = vmul.f32 %v2027, 1.442695
        %v2037 = vpow.pop %v2036
        %v2038 = vmul.f32 %v2028, 1.442695
        %v2039 = vpow.pop %v2038
        %v2040 = vmul.f32 %v2029, 1.442695
        %v2041 = vpow.pop %v2040
        %v2042 = vmul.f32 %v2030, 1.442695
        %v2043 = vpow.pop %v2042
        %v2044 = vmul.f32 %v2031, 1.442695
        %v2045 = vpow.pop %v2044
        %v2046 = vmul.f32 %v2032, 1.442695
        %v2047 = vpow.pop %v2046
        %v2048 = vmul.f32 %v2033, 1.442695
        %v2049 = vpow.pop %v2048
        %v2050 = vsel %vm2001, %v2035, 0.0
        %2051 = vadd.xlane.f32.xlu0 %v2050
        %v2052 = vpop.xlane.xlu0 %2051
        %v2053 = vsel %vm2001, %v2037, 0.0
        %2054 = vadd.xlane.f32.xlu0 %v2053
        %v2055 = vpop.xlane.xlu0 %2054
        %v2056 = vsel %vm2001, %v2039, 0.0
        %2057 = vadd.xlane.f32.xlu0 %v2056
        %v2058 = vpop.xlane.xlu0 %2057
        %v2059 = vsel %vm2001, %v2041, 0.0
        %2060 = vadd.xlane.f32.xlu0 %v2059
        %v2061 = vpop.xlane.xlu0 %2060
        %v2062 = vsel %vm2001, %v2043, 0.0
        %2063 = vadd.xlane.f32.xlu0 %v2062
        %v2064 = vpop.xlane.xlu0 %2063
        %v2065 = vsel %vm2001, %v2045, 0.0
        %2066 = vadd.xlane.f32.xlu0 %v2065
        %v2067 = vpop.xlane.xlu0 %2066
        %v2068 = vsel %vm2001, %v2047, 0.0
        %2069 = vadd.xlane.f32.xlu0 %v2068
        %v2070 = vpop.xlane.xlu0 %2069
        %v2071 = vsel %vm2001, %v2049, 0.0
        %2072 = vadd.xlane.f32.xlu0 %v2071
        %v2073 = vpop.xlane.xlu0 %2072
        %v2074 = vrcp.pop %v2052
        %v2075 = vrcp.pop %v2055
        %v2076 = vrcp.pop %v2058
        %v2077 = vrcp.pop %v2061
        %v2078 = vrcp.pop %v2064
        %v2079 = vrcp.pop %v2067
        %v2080 = vrcp.pop %v2070
        %v2081 = vrcp.pop %v2073
        %v2082 = vmul.f32 %v2035, %v2074
        %v2083 = vmul.f32 %v2037, %v2075
        %v2084 = vmul.f32 %v2039, %v2076
        %v2085 = vmul.f32 %v2041, %v2077
        %v2086 = vmul.f32 %v2043, %v2078
        %v2087 = vmul.f32 %v2045, %v2079
        %v2088 = vmul.f32 %v2047, %v2080
        %v2089 = vmul.f32 %v2049, %v2081
        %v2090 = vpack.c.bf16 %v2083, %v2082
        %v2091 = vpack.c.bf16 %v2085, %v2084
        %v2092 = vpack.c.bf16 %v2087, %v2086
        %v2093 = vpack.c.bf16 %v2089, %v2088
        %v2095 = vsel %vm2001, %v2090, 0
        %2097 = vmatprep.subr.bf16.mxu0 0
        %2098 = vmatpush1.bf16.msra.mxu0 %v1798
        %2099 = vmatprep.subr.bf16.mxu0 0
        %2100 = vmatpush1.bf16.msra.mxu0 0
        %2101 = vmatprep.subr.bf16.mxu0 0
        %2102 = vmatpush1.bf16.msra.mxu0 0
        %2103 = vmatprep.subr.bf16.mxu0 0
        %2104 = vmatpush1.bf16.msra.mxu0 0
        %2105 = vmatprep.subr.bf16.mxu0 0
        %2106 = vmatpush1.bf16.msra.mxu0 0
        %2107 = vmatprep.subr.bf16.mxu0 0
        %2108 = vmatpush1.bf16.msra.mxu0 0
        %2109 = vmatprep.subr.bf16.mxu0 0
        %2110 = vmatpush1.bf16.msra.mxu0 0
        %2111 = vmatprep.subr.bf16.mxu0 0
        %2112 = vmatpush1.bf16.msra.mxu0 0
        %2113 = vmatprep.subr.bf16.mxu0 0
        %2114 = vmatpush1.bf16.msra.mxu0 0
        %2115 = vmatprep.subr.bf16.mxu0 0
        %2116 = vmatpush1.bf16.msra.mxu0 0
        %2117 = vmatprep.subr.bf16.mxu0 0
        %2118 = vmatpush1.bf16.msra.mxu0 0
        %2119 = vmatprep.subr.bf16.mxu0 0
        %2120 = vmatpush1.bf16.msra.mxu0 0
        %2121 = vmatprep.subr.bf16.mxu0 0
        %2122 = vmatpush1.bf16.msra.mxu0 0
        %2123 = vmatprep.subr.bf16.mxu0 0
        %2124 = vmatpush1.bf16.msra.mxu0 0
        %2125 = vmatprep.subr.bf16.mxu0 0
        %2126 = vmatpush1.bf16.msra.mxu0 0
        %2127 = vmatprep.subr.bf16.mxu0 0
        %2128 = vmatpush1.bf16.msra.mxu0 0
        %2129 = vmatprep.mubr.bf16.mxu0 0
        %2130 = vmatmul.mubr.bf16.gmra.mrb[0].mxu0 %v2095
        %v2131 = vpop.f32.mrb[0].mxu0
        %v2132 = vadd.f32 0.0, %v2131
        %v2133 = vpop.f32.mrb[0].mxu0
        %v2134 = vpop.f32.mrb[0].mxu0
        %v2135 = vadd.f32 0.0, %v2134
        %v2136 = vpop.f32.mrb[0].mxu0
        %2137 = vdwg.mxu0
        %v2139 = vsel %vm2001, %v2091, 0
        %2141 = vmatprep.subr.bf16.mxu0 0
        %2142 = vmatpush1.bf16.msra.mxu0 %v1802
        %2143 = vmatprep.subr.bf16.mxu0 0
        %2144 = vmatpush1.bf16.msra.mxu0 0
        %2145 = vmatprep.subr.bf16.mxu0 0
        %2146 = vmatpush1.bf16.msra.mxu0 0
        %2147 = vmatprep.subr.bf16.mxu0 0
        %2148 = vmatpush1.bf16.msra.mxu0 0
        %2149 = vmatprep.subr.bf16.mxu0 0
        %2150 = vmatpush1.bf16.msra.mxu0 0
        %2151 = vmatprep.subr.bf16.mxu0 0
        %2152 = vmatpush1.bf16.msra.mxu0 0
        %2153 = vmatprep.subr.bf16.mxu0 0
        %2154 = vmatpush1.bf16.msra.mxu0 0
        %2155 = vmatprep.subr.bf16.mxu0 0
        %2156 = vmatpush1.bf16.msra.mxu0 0
        %2157 = vmatprep.subr.bf16.mxu0 0
        %2158 = vmatpush1.bf16.msra.mxu0 0
        %2159 = vmatprep.subr.bf16.mxu0 0
        %2160 = vmatpush1.bf16.msra.mxu0 0
        %2161 = vmatprep.subr.bf16.mxu0 0
        %2162 = vmatpush1.bf16.msra.mxu0 0
        %2163 = vmatprep.subr.bf16.mxu0 0
        %2164 = vmatpush1.bf16.msra.mxu0 0
        %2165 = vmatprep.subr.bf16.mxu0 0
        %2166 = vmatpush1.bf16.msra.mxu0 0
        %2167 = vmatprep.subr.bf16.mxu0 0
        %2168 = vmatpush1.bf16.msra.mxu0 0
        %2169 = vmatprep.subr.bf16.mxu0 0
        %2170 = vmatpush1.bf16.msra.mxu0 0
        %2171 = vmatprep.subr.bf16.mxu0 0
        %2172 = vmatpush1.bf16.msra.mxu0 0
        %2173 = vmatprep.mubr.bf16.mxu0 0
        %2174 = vmatmul.mubr.bf16.gmra.mrb[0].mxu0 %v2139
        %v2175 = vpop.f32.mrb[0].mxu0
        %v2176 = vadd.f32 0.0, %v2175
        %v2177 = vpop.f32.mrb[0].mxu0
        %v2178 = vpop.f32.mrb[0].mxu0
        %v2179 = vadd.f32 0.0, %v2178
        %v2180 = vpop.f32.mrb[0].mxu0
        %2181 = vdwg.mxu0
        %v2183 = vsel %vm2001, %v2092, 0
        %2185 = vmatprep.subr.bf16.mxu0 0
        %2186 = vmatpush1.bf16.msra.mxu0 %v1806
        %2187 = vmatprep.subr.bf16.mxu0 0
        %2188 = vmatpush1.bf16.msra.mxu0 0
        %2189 = vmatprep.subr.bf16.mxu0 0
        %2190 = vmatpush1.bf16.msra.mxu0 0
        %2191 = vmatprep.subr.bf16.mxu0 0
        %2192 = vmatpush1.bf16.msra.mxu0 0
        %2193 = vmatprep.subr.bf16.mxu0 0
        %2194 = vmatpush1.bf16.msra.mxu0 0
        %2195 = vmatprep.subr.bf16.mxu0 0
        %2196 = vmatpush1.bf16.msra.mxu0 0
        %2197 = vmatprep.subr.bf16.mxu0 0
        %2198 = vmatpush1.bf16.msra.mxu0 0
        %2199 = vmatprep.subr.bf16.mxu0 0
        %2200 = vmatpush1.bf16.msra.mxu0 0
        %2201 = vmatprep.subr.bf16.mxu0 0
        %2202 = vmatpush1.bf16.msra.mxu0 0
        %2203 = vmatprep.subr.bf16.mxu0 0
        %2204 = vmatpush1.bf16.msra.mxu0 0
        %2205 = vmatprep.subr.bf16.mxu0 0
        %2206 = vmatpush1.bf16.msra.mxu0 0
        %2207 = vmatprep.subr.bf16.mxu0 0
        %2208 = vmatpush1.bf16.msra.mxu0 0
        %2209 = vmatprep.subr.bf16.mxu0 0
        %2210 = vmatpush1.bf16.msra.mxu0 0
        %2211 = vmatprep.subr.bf16.mxu0 0
        %2212 = vmatpush1.bf16.msra.mxu0 0
        %2213 = vmatprep.subr.bf16.mxu0 0
        %2214 = vmatpush1.bf16.msra.mxu0 0
        %2215 = vmatprep.subr.bf16.mxu0 0
        %2216 = vmatpush1.bf16.msra.mxu0 0
        %2217 = vmatprep.mubr.bf16.mxu0 0
        %2218 = vmatmul.mubr.bf16.gmra.mrb[0].mxu0 %v2183
        %v2219 = vpop.f32.mrb[0].mxu0
        %v2220 = vadd.f32 0.0, %v2219
        %v2221 = vpop.f32.mrb[0].mxu0
        %v2222 = vpop.f32.mrb[0].mxu0
        %v2223 = vadd.f32 0.0, %v2222
        %v2224 = vpop.f32.mrb[0].mxu0
        %2225 = vdwg.mxu0
        %v2227 = vsel %vm2001, %v2093, 0
        %2229 = vmatprep.subr.bf16.mxu0 0
        %2230 = vmatpush1.bf16.msra.mxu0 %v1810
        %2231 = vmatprep.subr.bf16.mxu0 0
        %2232 = vmatpush1.bf16.msra.mxu0 0
        %2233 = vmatprep.subr.bf16.mxu0 0
        %2234 = vmatpush1.bf16.msra.mxu0 0
        %2235 = vmatprep.subr.bf16.mxu0 0
        %2236 = vmatpush1.bf16.msra.mxu0 0
        %2237 = vmatprep.subr.bf16.mxu0 0
        %2238 = vmatpush1.bf16.msra.mxu0 0
        %2239 = vmatprep.subr.bf16.mxu0 0
        %2240 = vmatpush1.bf16.msra.mxu0 0
        %2241 = vmatprep.subr.bf16.mxu0 0
        %2242 = vmatpush1.bf16.msra.mxu0 0
        %2243 = vmatprep.subr.bf16.mxu0 0
        %2244 = vmatpush1.bf16.msra.mxu0 0
        %2245 = vmatprep.subr.bf16.mxu0 0
        %2246 = vmatpush1.bf16.msra.mxu0 0
        %2247 = vmatprep.subr.bf16.mxu0 0
        %2248 = vmatpush1.bf16.msra.mxu0 0
        %2249 = vmatprep.subr.bf16.mxu0 0
        %2250 = vmatpush1.bf16.msra.mxu0 0
        %2251 = vmatprep.subr.bf16.mxu0 0
        %2252 = vmatpush1.bf16.msra.mxu0 0
        %2253 = vmatprep.subr.bf16.mxu0 0
        %2254 = vmatpush1.bf16.msra.mxu0 0
        %2255 = vmatprep.subr.bf16.mxu0 0
        %2256 = vmatpush1.bf16.msra.mxu0 0
        %2257 = vmatprep.subr.bf16.mxu0 0
        %2258 = vmatpush1.bf16.msra.mxu0 0
        %2259 = vmatprep.subr.bf16.mxu0 0
        %2260 = vmatpush1.bf16.msra.mxu0 0
        %2261 = vmatprep.mubr.bf16.mxu0 0
        %2262 = vmatmul.mubr.bf16.gmra.mrb[0].mxu0 %v2227
        %v2263 = vpop.f32.mrb[0].mxu0
        %v2264 = vadd.f32 0.0, %v2263
        %v2265 = vpop.f32.mrb[0].mxu0
        %v2266 = vpop.f32.mrb[0].mxu0
        %v2267 = vadd.f32 0.0, %v2266
        %v2268 = vpop.f32.mrb[0].mxu0
        %2269 = vdwg.mxu0
        %v2270 = vcombine.low %v2132, %v2220
        %v2271 = vcombine.high %v2132, %v2220
        %v2273 = vunpack.c.l.s4 1983009808
        %v2274 = vunpack.c.0.s8 %v2273
        %v2275 = vlaneseq
        %v2276 = vshrl.u32 %v2275, 7
        %v2277 = vsub.s32 %v2274, %v2276
        %v2278 = vrot.slane %v2270, %v2277
        %v2280 = vunpack.c.l.s4 1983009808
        %v2281 = vunpack.c.0.s8 %v2280
        %v2282 = vlaneseq
        %v2283 = vshrl.u32 %v2282, 7
        %v2284 = vsub.s32 %v2281, %v2283
        %v2285 = vrot.slane %v2271, %v2284
        %v2286 = vcombine.low %v2176, %v2264
        %v2287 = vcombine.high %v2176, %v2264
        %v2289 = vunpack.c.l.s4 1983009808
        %v2290 = vunpack.c.0.s8 %v2289
        %v2291 = vlaneseq
        %v2292 = vshrl.u32 %v2291, 7
        %v2293 = vsub.s32 %v2290, %v2292
        %v2294 = vrot.slane %v2286, %v2293
        %v2296 = vunpack.c.l.s4 1983009808
        %v2297 = vunpack.c.0.s8 %v2296
        %v2298 = vlaneseq
        %v2299 = vshrl.u32 %v2298, 7
        %v2300 = vsub.s32 %v2297, %v2299
        %v2301 = vrot.slane %v2287, %v2300
        %v2302 = vcombine.low %v2278, %v2294
        %v2303 = vcombine.high %v2278, %v2294
        %v2305 = vunpack.c.l.s4 1934713408
        %v2306 = vunpack.c.0.s8 %v2305
        %v2307 = vlaneseq
        %v2308 = vshrl.u32 %v2307, 7
        %v2309 = vsub.s32 %v2306, %v2308
        %v2310 = vrot.slane %v2302, %v2309
        %v2312 = vunpack.c.l.s4 1934713408
        %v2313 = vunpack.c.0.s8 %v2312
        %v2314 = vlaneseq
        %v2315 = vshrl.u32 %v2314, 7
        %v2316 = vsub.s32 %v2313, %v2315
        %v2317 = vrot.slane %v2303, %v2316
        %v2318 = vcombine.low %v2285, %v2301
        %v2319 = vcombine.high %v2285, %v2301
        %v2321 = vunpack.c.l.s4 1934713408
        %v2322 = vunpack.c.0.s8 %v2321
        %v2323 = vlaneseq
        %v2324 = vshrl.u32 %v2323, 7
        %v2325 = vsub.s32 %v2322, %v2324
        %v2326 = vrot.slane %v2318, %v2325
        %v2328 = vunpack.c.l.s4 1934713408
        %v2329 = vunpack.c.0.s8 %v2328
        %v2330 = vlaneseq
        %v2331 = vshrl.u32 %v2330, 7
        %v2332 = vsub.s32 %v2329, %v2331
        %v2333 = vrot.slane %v2319, %v2332
        %v2334 = vcombine.high %v2310, 0.0
        %v2335 = vcombine.high %v2317, 0.0
        %v2336 = vcombine.high %v2326, 0.0
        %v2337 = vcombine.high %v2333, 0.0
        %v2338 = vcombine.low %v2135, %v2223
        %v2339 = vcombine.high %v2135, %v2223
        %v2341 = vunpack.c.l.s4 1983009808
        %v2342 = vunpack.c.0.s8 %v2341
        %v2343 = vlaneseq
        %v2344 = vshrl.u32 %v2343, 7
        %v2345 = vsub.s32 %v2342, %v2344
        %v2346 = vrot.slane %v2338, %v2345
        %v2348 = vunpack.c.l.s4 1983009808
        %v2349 = vunpack.c.0.s8 %v2348
        %v2350 = vlaneseq
        %v2351 = vshrl.u32 %v2350, 7
        %v2352 = vsub.s32 %v2349, %v2351
        %v2353 = vrot.slane %v2339, %v2352
        %v2354 = vcombine.low %v2179, %v2267
        %v2355 = vcombine.high %v2179, %v2267
        %v2357 = vunpack.c.l.s4 1983009808
        %v2358 = vunpack.c.0.s8 %v2357
        %v2359 = vlaneseq
        %v2360 = vshrl.u32 %v2359, 7
        %v2361 = vsub.s32 %v2358, %v2360
        %v2362 = vrot.slane %v2354, %v2361
        %v2364 = vunpack.c.l.s4 1983009808
        %v2365 = vunpack.c.0.s8 %v2364
        %v2366 = vlaneseq
        %v2367 = vshrl.u32 %v2366, 7
        %v2368 = vsub.s32 %v2365, %v2367
        %v2369 = vrot.slane %v2355, %v2368
        %v2370 = vcombine.low %v2346, %v2362
        %v2371 = vcombine.high %v2346, %v2362
        %v2373 = vunpack.c.l.s4 1934713408
        %v2374 = vunpack.c.0.s8 %v2373
        %v2375 = vlaneseq
        %v2376 = vshrl.u32 %v2375, 7
        %v2377 = vsub.s32 %v2374, %v2376
        %v2378 = vrot.slane %v2370, %v2377
        %v2380 = vunpack.c.l.s4 1934713408
        %v2381 = vunpack.c.0.s8 %v2380
        %v2382 = vlaneseq
        %v2383 = vshrl.u32 %v2382, 7
        %v2384 = vsub.s32 %v2381, %v2383
        %v2385 = vrot.slane %v2371, %v2384
        %v2386 = vcombine.low %v2353, %v2369
        %v2387 = vcombine.high %v2353, %v2369
        %v2389 = vunpack.c.l.s4 1934713408
        %v2390 = vunpack.c.0.s8 %v2389
        %v2391 = vlaneseq
        %v2392 = vshrl.u32 %v2391, 7
        %v2393 = vsub.s32 %v2390, %v2392
        %v2394 = vrot.slane %v2386, %v2393
        %v2396 = vunpack.c.l.s4 1934713408
        %v2397 = vunpack.c.0.s8 %v2396
        %v2398 = vlaneseq
        %v2399 = vshrl.u32 %v2398, 7
        %v2400 = vsub.s32 %v2397, %v2399
        %v2401 = vrot.slane %v2387, %v2400
        %v2402 = vcombine.high %v2378, 0.0
        %v2403 = vcombine.high %v2385, 0.0
        %v2404 = vcombine.high %v2394, 0.0
        %v2405 = vcombine.high %v2401, 0.0
        %v2406 = vcombine.low %v2310, %v2317
        %v2408 = vunpack.c.l.s4 1983009808
        %v2409 = vunpack.c.0.s8 %v2408
        %v2410 = vlaneseq
        %v2411 = vshrl.u32 %v2410, 7
        %v2412 = vsub.s32 %v2409, %v2411
        %v2413 = vrot.slane %v2406, %v2412
        %v2414 = vcombine.low %v2334, %v2335
        %v2416 = vunpack.c.l.s4 1983009808
        %v2417 = vunpack.c.0.s8 %v2416
        %v2418 = vlaneseq
        %v2419 = vshrl.u32 %v2418, 7
        %v2420 = vsub.s32 %v2417, %v2419
        %v2421 = vrot.slane %v2414, %v2420
        %v2422 = vcombine.low %v2326, %v2333
        %v2424 = vunpack.c.l.s4 1983009808
        %v2425 = vunpack.c.0.s8 %v2424
        %v2426 = vlaneseq
        %v2427 = vshrl.u32 %v2426, 7
        %v2428 = vsub.s32 %v2425, %v2427
        %v2429 = vrot.slane %v2422, %v2428
        %v2430 = vcombine.low %v2336, %v2337
        %v2432 = vunpack.c.l.s4 1983009808
        %v2433 = vunpack.c.0.s8 %v2432
        %v2434 = vlaneseq
        %v2435 = vshrl.u32 %v2434, 7
        %v2436 = vsub.s32 %v2433, %v2435
        %v2437 = vrot.slane %v2430, %v2436
        %v2438 = vcombine.low %v2413, %v2421
        %v2439 = vcombine.high %v2413, %v2421
        %v2441 = vunpack.c.l.s4 1934713408
        %v2442 = vunpack.c.0.s8 %v2441
        %v2443 = vlaneseq
        %v2444 = vshrl.u32 %v2443, 7
        %v2445 = vsub.s32 %v2442, %v2444
        %v2446 = vrot.slane %v2438, %v2445
        %v2448 = vunpack.c.l.s4 1934713408
        %v2449 = vunpack.c.0.s8 %v2448
        %v2450 = vlaneseq
        %v2451 = vshrl.u32 %v2450, 7
        %v2452 = vsub.s32 %v2449, %v2451
        %v2453 = vrot.slane %v2439, %v2452
        %v2454 = vcombine.low %v2429, %v2437
        %v2455 = vcombine.high %v2429, %v2437
        %v2457 = vunpack.c.l.s4 1934713408
        %v2458 = vunpack.c.0.s8 %v2457
        %v2459 = vlaneseq
        %v2460 = vshrl.u32 %v2459, 7
        %v2461 = vsub.s32 %v2458, %v2460
        %v2462 = vrot.slane %v2454, %v2461
        %v2464 = vunpack.c.l.s4 1934713408
        %v2465 = vunpack.c.0.s8 %v2464
        %v2466 = vlaneseq
        %v2467 = vshrl.u32 %v2466, 7
        %v2468 = vsub.s32 %v2465, %v2467
        %v2469 = vrot.slane %v2455, %v2468
        %v2470 = vcombine.low %v2446, %v2462
        %v2471 = vcombine.high %v2446, %v2462
        %v2472 = vcombine.low %v2453, %v2469
        %v2473 = vcombine.high %v2453, %v2469
        %v2474 = vcombine.low %v2378, %v2385
        %v2476 = vunpack.c.l.s4 1983009808
        %v2477 = vunpack.c.0.s8 %v2476
        %v2478 = vlaneseq
        %v2479 = vshrl.u32 %v2478, 7
        %v2480 = vsub.s32 %v2477, %v2479
        %v2481 = vrot.slane %v2474, %v2480
        %v2482 = vcombine.low %v2402, %v2403
        %v2484 = vunpack.c.l.s4 1983009808
        %v2485 = vunpack.c.0.s8 %v2484
        %v2486 = vlaneseq
        %v2487 = vshrl.u32 %v2486, 7
        %v2488 = vsub.s32 %v2485, %v2487
        %v2489 = vrot.slane %v2482, %v2488
        %v2490 = vcombine.low %v2394, %v2401
        %v2492 = vunpack.c.l.s4 1983009808
        %v2493 = vunpack.c.0.s8 %v2492
        %v2494 = vlaneseq
        %v2495 = vshrl.u32 %v2494, 7
        %v2496 = vsub.s32 %v2493, %v2495
        %v2497 = vrot.slane %v2490, %v2496
        %v2498 = vcombine.low %v2404, %v2405
        %v2500 = vunpack.c.l.s4 1983009808
        %v2501 = vunpack.c.0.s8 %v2500
        %v2502 = vlaneseq
        %v2503 = vshrl.u32 %v2502, 7
        %v2504 = vsub.s32 %v2501, %v2503
        %v2505 = vrot.slane %v2498, %v2504
        %v2506 = vcombine.low %v2481, %v2489
        %v2507 = vcombine.high %v2481, %v2489
        %v2509 = vunpack.c.l.s4 1934713408
        %v2510 = vunpack.c.0.s8 %v2509
        %v2511 = vlaneseq
        %v2512 = vshrl.u32 %v2511, 7
        %v2513 = vsub.s32 %v2510, %v2512
        %v2514 = vrot.slane %v2506, %v2513
        %v2516 = vunpack.c.l.s4 1934713408
        %v2517 = vunpack.c.0.s8 %v2516
        %v2518 = vlaneseq
        %v2519 = vshrl.u32 %v2518, 7
        %v2520 = vsub.s32 %v2517, %v2519
        %v2521 = vrot.slane %v2507, %v2520
        %v2522 = vcombine.low %v2497, %v2505
        %v2523 = vcombine.high %v2497, %v2505
        %v2525 = vunpack.c.l.s4 1934713408
        %v2526 = vunpack.c.0.s8 %v2525
        %v2527 = vlaneseq
        %v2528 = vshrl.u32 %v2527, 7
        %v2529 = vsub.s32 %v2526, %v2528
        %v2530 = vrot.slane %v2522, %v2529
        %v2532 = vunpack.c.l.s4 1934713408
        %v2533 = vunpack.c.0.s8 %v2532
        %v2534 = vlaneseq
        %v2535 = vshrl.u32 %v2534, 7
        %v2536 = vsub.s32 %v2533, %v2535
        %v2537 = vrot.slane %v2523, %v2536
        %v2538 = vcombine.low %v2514, %v2530
        %v2539 = vcombine.high %v2514, %v2530
        %v2540 = vcombine.low %v2521, %v2537
        %v2541 = vcombine.high %v2521, %v2537
        %2544 = vrot.lane.b32.xlu0 %v2471, 8
        %v2545 = vpop.permute.xlu0 %2544
        %2546 = vrot.lane.b32.xlu0 %v2539, 8
        %v2547 = vpop.permute.xlu0 %2546
        %2552 = vrot.lane.b32.xlu0 %v2472, 16
        %v2553 = vpop.permute.xlu0 %2552
        %2554 = vrot.lane.b32.xlu0 %v2540, 16
        %v2555 = vpop.permute.xlu0 %2554
        %2560 = vrot.lane.b32.xlu0 %v2473, 24
        %v2561 = vpop.permute.xlu0 %2560
        %2562 = vrot.lane.b32.xlu0 %v2541, 24
        %v2563 = vpop.permute.xlu0 %2562
        %v2566 = vsel %vm1812, %v2470, %v2545
        %v2567 = vsel %vm1812, %v2538, %v2547
        %v2568 = vsel %vm2001, %v2566, %v2553
        %v2569 = vsel %vm2001, %v2567, %v2555
        %vm2570 = vcmask 195584
        %v2571 = vsel %vm2570, %v2568, %v2561
        %v2572 = vsel %vm2570, %v2569, %v2563
        %2574 = vrot.lane.b32.xlu0 %v998, 120
        %v2575 = vpop.permute.xlu0 %2574
        %2576 = vrot.lane.b32.xlu0 %v998, 112
        %v2577 = vpop.permute.xlu0 %2576
        %2578 = vrot.lane.b32.xlu0 %v998, 104
        %v2579 = vpop.permute.xlu0 %2578
        %v2582 = vpack.i.b16 %v2575, %v998
        %v2584 = vshrl.u32 %v998, 16
        %v2585 = vshrl.u32 %v2575, 16
        %v2586 = vpack.i.b16 %v2585, %v2584
        %v2590 = vpack.i.b16 %v2579, %v2577
        %v2592 = vshrl.u32 %v2577, 16
        %v2593 = vshrl.u32 %v2579, 16
        %v2594 = vpack.i.b16 %v2593, %v2592
        %v2596 = vcombine.high %v2582, %v1023
        %v2598 = vunpack.c.l.s4 1983009808
        %v2599 = vunpack.c.0.s8 %v2598
        %v2600 = vlaneseq
        %v2601 = vshrl.u32 %v2600, 7
        %v2602 = vsub.s32 %v2599, %v2601
        %v2603 = vrot.slane %v2582, %v2602
        %v2605 = vunpack.c.l.s4 1983009808
        %v2606 = vunpack.c.0.s8 %v2605
        %v2607 = vlaneseq
        %v2608 = vshrl.u32 %v2607, 7
        %v2609 = vsub.s32 %v2606, %v2608
        %v2610 = vrot.slane %v2596, %v2609
        %v2611 = vcombine.high %v2590, %v1023
        %v2613 = vunpack.c.l.s4 1983009808
        %v2614 = vunpack.c.0.s8 %v2613
        %v2615 = vlaneseq
        %v2616 = vshrl.u32 %v2615, 7
        %v2617 = vsub.s32 %v2614, %v2616
        %v2618 = vrot.slane %v2590, %v2617
        %v2620 = vunpack.c.l.s4 1983009808
        %v2621 = vunpack.c.0.s8 %v2620
        %v2622 = vlaneseq
        %v2623 = vshrl.u32 %v2622, 7
        %v2624 = vsub.s32 %v2621, %v2623
        %v2625 = vrot.slane %v2611, %v2624
        %v2626 = vcombine.low %v2603, %v2618
        %v2627 = vcombine.high %v2603, %v2618
        %v2629 = vunpack.c.l.s4 1934713408
        %v2630 = vunpack.c.0.s8 %v2629
        %v2631 = vlaneseq
        %v2632 = vshrl.u32 %v2631, 7
        %v2633 = vsub.s32 %v2630, %v2632
        %v2634 = vrot.slane %v2626, %v2633
        %v2636 = vunpack.c.l.s4 1934713408
        %v2637 = vunpack.c.0.s8 %v2636
        %v2638 = vlaneseq
        %v2639 = vshrl.u32 %v2638, 7
        %v2640 = vsub.s32 %v2637, %v2639
        %v2641 = vrot.slane %v2627, %v2640
        %v2642 = vcombine.low %v2610, %v2625
        %v2643 = vcombine.high %v2610, %v2625
        %v2645 = vunpack.c.l.s4 1934713408
        %v2646 = vunpack.c.0.s8 %v2645
        %v2647 = vlaneseq
        %v2648 = vshrl.u32 %v2647, 7
        %v2649 = vsub.s32 %v2646, %v2648
        %v2650 = vrot.slane %v2642, %v2649
        %v2652 = vunpack.c.l.s4 1934713408
        %v2653 = vunpack.c.0.s8 %v2652
        %v2654 = vlaneseq
        %v2655 = vshrl.u32 %v2654, 7
        %v2656 = vsub.s32 %v2653, %v2655
        %v2657 = vrot.slane %v2643, %v2656
        %v2658 = vcombine.high %v2634, 0
        %v2659 = vcombine.high %v2641, 0
        %v2660 = vcombine.high %v2650, 0
        %v2661 = vcombine.high %v2657, 0
        %v2662 = vcombine.high %v2586, %v1026
        %v2664 = vunpack.c.l.s4 1983009808
        %v2665 = vunpack.c.0.s8 %v2664
        %v2666 = vlaneseq
        %v2667 = vshrl.u32 %v2666, 7
        %v2668 = vsub.s32 %v2665, %v2667
        %v2669 = vrot.slane %v2586, %v2668
        %v2671 = vunpack.c.l.s4 1983009808
        %v2672 = vunpack.c.0.s8 %v2671
        %v2673 = vlaneseq
        %v2674 = vshrl.u32 %v2673, 7
        %v2675 = vsub.s32 %v2672, %v2674
        %v2676 = vrot.slane %v2662, %v2675
        %v2677 = vcombine.high %v2594, %v1026
        %v2679 = vunpack.c.l.s4 1983009808
        %v2680 = vunpack.c.0.s8 %v2679
        %v2681 = vlaneseq
        %v2682 = vshrl.u32 %v2681, 7
        %v2683 = vsub.s32 %v2680, %v2682
        %v2684 = vrot.slane %v2594, %v2683
        %v2686 = vunpack.c.l.s4 1983009808
        %v2687 = vunpack.c.0.s8 %v2686
        %v2688 = vlaneseq
        %v2689 = vshrl.u32 %v2688, 7
        %v2690 = vsub.s32 %v2687, %v2689
        %v2691 = vrot.slane %v2677, %v2690
        %v2692 = vcombine.low %v2669, %v2684
        %v2693 = vcombine.high %v2669, %v2684
        %v2695 = vunpack.c.l.s4 1934713408
        %v2696 = vunpack.c.0.s8 %v2695
        %v2697 = vlaneseq
        %v2698 = vshrl.u32 %v2697, 7
        %v2699 = vsub.s32 %v2696, %v2698
        %v2700 = vrot.slane %v2692, %v2699
        %v2702 = vunpack.c.l.s4 1934713408
        %v2703 = vunpack.c.0.s8 %v2702
        %v2704 = vlaneseq
        %v2705 = vshrl.u32 %v2704, 7
        %v2706 = vsub.s32 %v2703, %v2705
        %v2707 = vrot.slane %v2693, %v2706
        %v2708 = vcombine.low %v2676, %v2691
        %v2709 = vcombine.high %v2676, %v2691
        %v2711 = vunpack.c.l.s4 1934713408
        %v2712 = vunpack.c.0.s8 %v2711
        %v2713 = vlaneseq
        %v2714 = vshrl.u32 %v2713, 7
        %v2715 = vsub.s32 %v2712, %v2714
        %v2716 = vrot.slane %v2708, %v2715
        %v2718 = vunpack.c.l.s4 1934713408
        %v2719 = vunpack.c.0.s8 %v2718
        %v2720 = vlaneseq
        %v2721 = vshrl.u32 %v2720, 7
        %v2722 = vsub.s32 %v2719, %v2721
        %v2723 = vrot.slane %v2709, %v2722
        %v2724 = vcombine.high %v2700, 0
        %v2725 = vcombine.high %v2707, 0
        %v2726 = vcombine.high %v2716, 0
        %v2727 = vcombine.high %v2723, 0
        %v2728 = vcombine.low %v2634, %v2641
        %v2730 = vunpack.c.l.s4 1983009808
        %v2731 = vunpack.c.0.s8 %v2730
        %v2732 = vlaneseq
        %v2733 = vshrl.u32 %v2732, 7
        %v2734 = vsub.s32 %v2731, %v2733
        %v2735 = vrot.slane %v2728, %v2734
        %v2736 = vcombine.low %v2658, %v2659
        %v2738 = vunpack.c.l.s4 1983009808
        %v2739 = vunpack.c.0.s8 %v2738
        %v2740 = vlaneseq
        %v2741 = vshrl.u32 %v2740, 7
        %v2742 = vsub.s32 %v2739, %v2741
        %v2743 = vrot.slane %v2736, %v2742
        %v2744 = vcombine.low %v2650, %v2657
        %v2746 = vunpack.c.l.s4 1983009808
        %v2747 = vunpack.c.0.s8 %v2746
        %v2748 = vlaneseq
        %v2749 = vshrl.u32 %v2748, 7
        %v2750 = vsub.s32 %v2747, %v2749
        %v2751 = vrot.slane %v2744, %v2750
        %v2752 = vcombine.low %v2660, %v2661
        %v2754 = vunpack.c.l.s4 1983009808
        %v2755 = vunpack.c.0.s8 %v2754
        %v2756 = vlaneseq
        %v2757 = vshrl.u32 %v2756, 7
        %v2758 = vsub.s32 %v2755, %v2757
        %v2759 = vrot.slane %v2752, %v2758
        %v2760 = vcombine.low %v2735, %v2743
        %v2762 = vunpack.c.l.s4 1934713408
        %v2763 = vunpack.c.0.s8 %v2762
        %v2764 = vlaneseq
        %v2765 = vshrl.u32 %v2764, 7
        %v2766 = vsub.s32 %v2763, %v2765
        %v2767 = vrot.slane %v2760, %v2766
        %v2768 = vcombine.low %v2751, %v2759
        %v2770 = vunpack.c.l.s4 1934713408
        %v2771 = vunpack.c.0.s8 %v2770
        %v2772 = vlaneseq
        %v2773 = vshrl.u32 %v2772, 7
        %v2774 = vsub.s32 %v2771, %v2773
        %v2775 = vrot.slane %v2768, %v2774
        %v2776 = vcombine.low %v2767, %v2775
        %v2777 = vcombine.high %v2767, %v2775
        %v2778 = vcombine.low %v2700, %v2707
        %v2780 = vunpack.c.l.s4 1983009808
        %v2781 = vunpack.c.0.s8 %v2780
        %v2782 = vlaneseq
        %v2783 = vshrl.u32 %v2782, 7
        %v2784 = vsub.s32 %v2781, %v2783
        %v2785 = vrot.slane %v2778, %v2784
        %v2786 = vcombine.low %v2724, %v2725
        %v2788 = vunpack.c.l.s4 1983009808
        %v2789 = vunpack.c.0.s8 %v2788
        %v2790 = vlaneseq
        %v2791 = vshrl.u32 %v2790, 7
        %v2792 = vsub.s32 %v2789, %v2791
        %v2793 = vrot.slane %v2786, %v2792
        %v2794 = vcombine.low %v2716, %v2723
        %v2796 = vunpack.c.l.s4 1983009808
        %v2797 = vunpack.c.0.s8 %v2796
        %v2798 = vlaneseq
        %v2799 = vshrl.u32 %v2798, 7
        %v2800 = vsub.s32 %v2797, %v2799
        %v2801 = vrot.slane %v2794, %v2800
        %v2802 = vcombine.low %v2726, %v2727
        %v2804 = vunpack.c.l.s4 1983009808
        %v2805 = vunpack.c.0.s8 %v2804
        %v2806 = vlaneseq
        %v2807 = vshrl.u32 %v2806, 7
        %v2808 = vsub.s32 %v2805, %v2807
        %v2809 = vrot.slane %v2802, %v2808
        %v2810 = vcombine.low %v2785, %v2793
        %v2812 = vunpack.c.l.s4 1934713408
        %v2813 = vunpack.c.0.s8 %v2812
        %v2814 = vlaneseq
        %v2815 = vshrl.u32 %v2814, 7
        %v2816 = vsub.s32 %v2813, %v2815
        %v2817 = vrot.slane %v2810, %v2816
        %v2818 = vcombine.low %v2801, %v2809
        %v2820 = vunpack.c.l.s4 1934713408
        %v2821 = vunpack.c.0.s8 %v2820
        %v2822 = vlaneseq
        %v2823 = vshrl.u32 %v2822, 7
        %v2824 = vsub.s32 %v2821, %v2823
        %v2825 = vrot.slane %v2818, %v2824
        %v2826 = vcombine.low %v2817, %v2825
        %v2827 = vcombine.high %v2817, %v2825
        %v2830 = vpack.i.b16 %v2826, %v2776
        %v2831 = vshrl.u32 %v2776, 16
        %v2832 = vshrl.u32 %v2826, 16
        %v2833 = vpack.i.b16 %v2832, %v2831
        %v2836 = vpack.i.b16 %v2827, %v2777
        %v2837 = vshrl.u32 %v2777, 16
        %v2838 = vshrl.u32 %v2827, 16
        %v2839 = vpack.i.b16 %v2838, %v2837
        %2840 = vrot.lane.b32.xlu0 %v998, 96
        %v2841 = vpop.permute.xlu0 %2840
        %2842 = vrot.lane.b32.xlu0 %v2575, 96
        %v2843 = vpop.permute.xlu0 %2842
        %2844 = vrot.lane.b32.xlu0 %v2577, 96
        %v2845 = vpop.permute.xlu0 %2844
        %2846 = vrot.lane.b32.xlu0 %v2579, 96
        %v2847 = vpop.permute.xlu0 %2846
        %v2850 = vpack.i.b16 %v2843, %v2841
        %v2852 = vshrl.u32 %v2841, 16
        %v2853 = vshrl.u32 %v2843, 16
        %v2854 = vpack.i.b16 %v2853, %v2852
        %v2858 = vpack.i.b16 %v2847, %v2845
        %v2860 = vshrl.u32 %v2845, 16
        %v2861 = vshrl.u32 %v2847, 16
        %v2862 = vpack.i.b16 %v2861, %v2860
        %v2864 = vcombine.high %v2850, %v1023
        %v2866 = vunpack.c.l.s4 1983009808
        %v2867 = vunpack.c.0.s8 %v2866
        %v2868 = vlaneseq
        %v2869 = vshrl.u32 %v2868, 7
        %v2870 = vsub.s32 %v2867, %v2869
        %v2871 = vrot.slane %v2850, %v2870
        %v2873 = vunpack.c.l.s4 1983009808
        %v2874 = vunpack.c.0.s8 %v2873
        %v2875 = vlaneseq
        %v2876 = vshrl.u32 %v2875, 7
        %v2877 = vsub.s32 %v2874, %v2876
        %v2878 = vrot.slane %v2864, %v2877
        %v2879 = vcombine.high %v2858, %v1023
        %v2881 = vunpack.c.l.s4 1983009808
        %v2882 = vunpack.c.0.s8 %v2881
        %v2883 = vlaneseq
        %v2884 = vshrl.u32 %v2883, 7
        %v2885 = vsub.s32 %v2882, %v2884
        %v2886 = vrot.slane %v2858, %v2885
        %v2888 = vunpack.c.l.s4 1983009808
        %v2889 = vunpack.c.0.s8 %v2888
        %v2890 = vlaneseq
        %v2891 = vshrl.u32 %v2890, 7
        %v2892 = vsub.s32 %v2889, %v2891
        %v2893 = vrot.slane %v2879, %v2892
        %v2894 = vcombine.low %v2871, %v2886
        %v2895 = vcombine.high %v2871, %v2886
        %v2897 = vunpack.c.l.s4 1934713408
        %v2898 = vunpack.c.0.s8 %v2897
        %v2899 = vlaneseq
        %v2900 = vshrl.u32 %v2899, 7
        %v2901 = vsub.s32 %v2898, %v2900
        %v2902 = vrot.slane %v2894, %v2901
        %v2904 = vunpack.c.l.s4 1934713408
        %v2905 = vunpack.c.0.s8 %v2904
        %v2906 = vlaneseq
        %v2907 = vshrl.u32 %v2906, 7
        %v2908 = vsub.s32 %v2905, %v2907
        %v2909 = vrot.slane %v2895, %v2908
        %v2910 = vcombine.low %v2878, %v2893
        %v2911 = vcombine.high %v2878, %v2893
        %v2913 = vunpack.c.l.s4 1934713408
        %v2914 = vunpack.c.0.s8 %v2913
        %v2915 = vlaneseq
        %v2916 = vshrl.u32 %v2915, 7
        %v2917 = vsub.s32 %v2914, %v2916
        %v2918 = vrot.slane %v2910, %v2917
        %v2920 = vunpack.c.l.s4 1934713408
        %v2921 = vunpack.c.0.s8 %v2920
        %v2922 = vlaneseq
        %v2923 = vshrl.u32 %v2922, 7
        %v2924 = vsub.s32 %v2921, %v2923
        %v2925 = vrot.slane %v2911, %v2924
        %v2926 = vcombine.high %v2902, 0
        %v2927 = vcombine.high %v2909, 0
        %v2928 = vcombine.high %v2918, 0
        %v2929 = vcombine.high %v2925, 0
        %v2930 = vcombine.high %v2854, %v1026
        %v2932 = vunpack.c.l.s4 1983009808
        %v2933 = vunpack.c.0.s8 %v2932
        %v2934 = vlaneseq
        %v2935 = vshrl.u32 %v2934, 7
        %v2936 = vsub.s32 %v2933, %v2935
        %v2937 = vrot.slane %v2854, %v2936
        %v2939 = vunpack.c.l.s4 1983009808
        %v2940 = vunpack.c.0.s8 %v2939
        %v2941 = vlaneseq
        %v2942 = vshrl.u32 %v2941, 7
        %v2943 = vsub.s32 %v2940, %v2942
        %v2944 = vrot.slane %v2930, %v2943
        %v2945 = vcombine.high %v2862, %v1026
        %v2947 = vunpack.c.l.s4 1983009808
        %v2948 = vunpack.c.0.s8 %v2947
        %v2949 = vlaneseq
        %v2950 = vshrl.u32 %v2949, 7
        %v2951 = vsub.s32 %v2948, %v2950
        %v2952 = vrot.slane %v2862, %v2951
        %v2954 = vunpack.c.l.s4 1983009808
        %v2955 = vunpack.c.0.s8 %v2954
        %v2956 = vlaneseq
        %v2957 = vshrl.u32 %v2956, 7
        %v2958 = vsub.s32 %v2955, %v2957
        %v2959 = vrot.slane %v2945, %v2958
        %v2960 = vcombine.low %v2937, %v2952
        %v2961 = vcombine.high %v2937, %v2952
        %v2963 = vunpack.c.l.s4 1934713408
        %v2964 = vunpack.c.0.s8 %v2963
        %v2965 = vlaneseq
        %v2966 = vshrl.u32 %v2965, 7
        %v2967 = vsub.s32 %v2964, %v2966
        %v2968 = vrot.slane %v2960, %v2967
        %v2970 = vunpack.c.l.s4 1934713408
        %v2971 = vunpack.c.0.s8 %v2970
        %v2972 = vlaneseq
        %v2973 = vshrl.u32 %v2972, 7
        %v2974 = vsub.s32 %v2971, %v2973
        %v2975 = vrot.slane %v2961, %v2974
        %v2976 = vcombine.low %v2944, %v2959
        %v2977 = vcombine.high %v2944, %v2959
        %v2979 = vunpack.c.l.s4 1934713408
        %v2980 = vunpack.c.0.s8 %v2979
        %v2981 = vlaneseq
        %v2982 = vshrl.u32 %v2981, 7
        %v2983 = vsub.s32 %v2980, %v2982
        %v2984 = vrot.slane %v2976, %v2983
        %v2986 = vunpack.c.l.s4 1934713408
        %v2987 = vunpack.c.0.s8 %v2986
        %v2988 = vlaneseq
        %v2989 = vshrl.u32 %v2988, 7
        %v2990 = vsub.s32 %v2987, %v2989
        %v2991 = vrot.slane %v2977, %v2990
        %v2992 = vcombine.high %v2968, 0
        %v2993 = vcombine.high %v2975, 0
        %v2994 = vcombine.high %v2984, 0
        %v2995 = vcombine.high %v2991, 0
        %v2996 = vcombine.low %v2902, %v2909
        %v2998 = vunpack.c.l.s4 1983009808
        %v2999 = vunpack.c.0.s8 %v2998
        %v3000 = vlaneseq
        %v3001 = vshrl.u32 %v3000, 7
        %v3002 = vsub.s32 %v2999, %v3001
        %v3003 = vrot.slane %v2996, %v3002
        %v3004 = vcombine.low %v2926, %v2927
        %v3006 = vunpack.c.l.s4 1983009808
        %v3007 = vunpack.c.0.s8 %v3006
        %v3008 = vlaneseq
        %v3009 = vshrl.u32 %v3008, 7
        %v3010 = vsub.s32 %v3007, %v3009
        %v3011 = vrot.slane %v3004, %v3010
        %v3012 = vcombine.low %v2918, %v2925
        %v3014 = vunpack.c.l.s4 1983009808
        %v3015 = vunpack.c.0.s8 %v3014
        %v3016 = vlaneseq
        %v3017 = vshrl.u32 %v3016, 7
        %v3018 = vsub.s32 %v3015, %v3017
        %v3019 = vrot.slane %v3012, %v3018
        %v3020 = vcombine.low %v2928, %v2929
        %v3022 = vunpack.c.l.s4 1983009808
        %v3023 = vunpack.c.0.s8 %v3022
        %v3024 = vlaneseq
        %v3025 = vshrl.u32 %v3024, 7
        %v3026 = vsub.s32 %v3023, %v3025
        %v3027 = vrot.slane %v3020, %v3026
        %v3028 = vcombine.low %v3003, %v3011
        %v3030 = vunpack.c.l.s4 1934713408
        %v3031 = vunpack.c.0.s8 %v3030
        %v3032 = vlaneseq
        %v3033 = vshrl.u32 %v3032, 7
        %v3034 = vsub.s32 %v3031, %v3033
        %v3035 = vrot.slane %v3028, %v3034
        %v3036 = vcombine.low %v3019, %v3027
        %v3038 = vunpack.c.l.s4 1934713408
        %v3039 = vunpack.c.0.s8 %v3038
        %v3040 = vlaneseq
        %v3041 = vshrl.u32 %v3040, 7
        %v3042 = vsub.s32 %v3039, %v3041
        %v3043 = vrot.slane %v3036, %v3042
        %v3044 = vcombine.low %v3035, %v3043
        %v3045 = vcombine.high %v3035, %v3043
        %v3046 = vcombine.low %v2968, %v2975
        %v3048 = vunpack.c.l.s4 1983009808
        %v3049 = vunpack.c.0.s8 %v3048
        %v3050 = vlaneseq
        %v3051 = vshrl.u32 %v3050, 7
        %v3052 = vsub.s32 %v3049, %v3051
        %v3053 = vrot.slane %v3046, %v3052
        %v3054 = vcombine.low %v2992, %v2993
        %v3056 = vunpack.c.l.s4 1983009808
        %v3057 = vunpack.c.0.s8 %v3056
        %v3058 = vlaneseq
        %v3059 = vshrl.u32 %v3058, 7
        %v3060 = vsub.s32 %v3057, %v3059
        %v3061 = vrot.slane %v3054, %v3060
        %v3062 = vcombine.low %v2984, %v2991
        %v3064 = vunpack.c.l.s4 1983009808
        %v3065 = vunpack.c.0.s8 %v3064
        %v3066 = vlaneseq
        %v3067 = vshrl.u32 %v3066, 7
        %v3068 = vsub.s32 %v3065, %v3067
        %v3069 = vrot.slane %v3062, %v3068
        %v3070 = vcombine.low %v2994, %v2995
        %v3072 = vunpack.c.l.s4 1983009808
        %v3073 = vunpack.c.0.s8 %v3072
        %v3074 = vlaneseq
        %v3075 = vshrl.u32 %v3074, 7
        %v3076 = vsub.s32 %v3073, %v3075
        %v3077 = vrot.slane %v3070, %v3076
        %v3078 = vcombine.low %v3053, %v3061
        %v3080 = vunpack.c.l.s4 1934713408
        %v3081 = vunpack.c.0.s8 %v3080
        %v3082 = vlaneseq
        %v3083 = vshrl.u32 %v3082, 7
        %v3084 = vsub.s32 %v3081, %v3083
        %v3085 = vrot.slane %v3078, %v3084
        %v3086 = vcombine.low %v3069, %v3077
        %v3088 = vunpack.c.l.s4 1934713408
        %v3089 = vunpack.c.0.s8 %v3088
        %v3090 = vlaneseq
        %v3091 = vshrl.u32 %v3090, 7
        %v3092 = vsub.s32 %v3089, %v3091
        %v3093 = vrot.slane %v3086, %v3092
        %v3094 = vcombine.low %v3085, %v3093
        %v3095 = vcombine.high %v3085, %v3093
        %v3098 = vpack.i.b16 %v3094, %v3044
        %v3099 = vshrl.u32 %v3044, 16
        %v3100 = vshrl.u32 %v3094, 16
        %v3101 = vpack.i.b16 %v3100, %v3099
        %v3104 = vpack.i.b16 %v3095, %v3045
        %v3105 = vshrl.u32 %v3045, 16
        %v3106 = vshrl.u32 %v3095, 16
        %v3107 = vpack.i.b16 %v3106, %v3105
        %3108 = vrot.lane.b32.xlu0 %v998, 64
        %v3109 = vpop.permute.xlu0 %3108
        %3110 = vrot.lane.b32.xlu0 %v2575, 64
        %v3111 = vpop.permute.xlu0 %3110
        %3112 = vrot.lane.b32.xlu0 %v2577, 64
        %v3113 = vpop.permute.xlu0 %3112
        %3114 = vrot.lane.b32.xlu0 %v2579, 64
        %v3115 = vpop.permute.xlu0 %3114
        %v3118 = vpack.i.b16 %v3111, %v3109
        %v3120 = vshrl.u32 %v3109, 16
        %v3121 = vshrl.u32 %v3111, 16
        %v3122 = vpack.i.b16 %v3121, %v3120
        %v3126 = vpack.i.b16 %v3115, %v3113
        %v3128 = vshrl.u32 %v3113, 16
        %v3129 = vshrl.u32 %v3115, 16
        %v3130 = vpack.i.b16 %v3129, %v3128
        %v3132 = vcombine.high %v3118, %v1023
        %v3134 = vunpack.c.l.s4 1983009808
        %v3135 = vunpack.c.0.s8 %v3134
        %v3136 = vlaneseq
        %v3137 = vshrl.u32 %v3136, 7
        %v3138 = vsub.s32 %v3135, %v3137
        %v3139 = vrot.slane %v3118, %v3138
        %v3141 = vunpack.c.l.s4 1983009808
        %v3142 = vunpack.c.0.s8 %v3141
        %v3143 = vlaneseq
        %v3144 = vshrl.u32 %v3143, 7
        %v3145 = vsub.s32 %v3142, %v3144
        %v3146 = vrot.slane %v3132, %v3145
        %v3147 = vcombine.high %v3126, %v1023
        %v3149 = vunpack.c.l.s4 1983009808
        %v3150 = vunpack.c.0.s8 %v3149
        %v3151 = vlaneseq
        %v3152 = vshrl.u32 %v3151, 7
        %v3153 = vsub.s32 %v3150, %v3152
        %v3154 = vrot.slane %v3126, %v3153
        %v3156 = vunpack.c.l.s4 1983009808
        %v3157 = vunpack.c.0.s8 %v3156
        %v3158 = vlaneseq
        %v3159 = vshrl.u32 %v3158, 7
        %v3160 = vsub.s32 %v3157, %v3159
        %v3161 = vrot.slane %v3147, %v3160
        %v3162 = vcombine.low %v3139, %v3154
        %v3163 = vcombine.high %v3139, %v3154
        %v3165 = vunpack.c.l.s4 1934713408
        %v3166 = vunpack.c.0.s8 %v3165
        %v3167 = vlaneseq
        %v3168 = vshrl.u32 %v3167, 7
        %v3169 = vsub.s32 %v3166, %v3168
        %v3170 = vrot.slane %v3162, %v3169
        %v3172 = vunpack.c.l.s4 1934713408
        %v3173 = vunpack.c.0.s8 %v3172
        %v3174 = vlaneseq
        %v3175 = vshrl.u32 %v3174, 7
        %v3176 = vsub.s32 %v3173, %v3175
        %v3177 = vrot.slane %v3163, %v3176
        %v3178 = vcombine.low %v3146, %v3161
        %v3179 = vcombine.high %v3146, %v3161
        %v3181 = vunpack.c.l.s4 1934713408
        %v3182 = vunpack.c.0.s8 %v3181
        %v3183 = vlaneseq
        %v3184 = vshrl.u32 %v3183, 7
        %v3185 = vsub.s32 %v3182, %v3184
        %v3186 = vrot.slane %v3178, %v3185
        %v3188 = vunpack.c.l.s4 1934713408
        %v3189 = vunpack.c.0.s8 %v3188
        %v3190 = vlaneseq
        %v3191 = vshrl.u32 %v3190, 7
        %v3192 = vsub.s32 %v3189, %v3191
        %v3193 = vrot.slane %v3179, %v3192
        %v3194 = vcombine.high %v3170, 0
        %v3195 = vcombine.high %v3177, 0
        %v3196 = vcombine.high %v3186, 0
        %v3197 = vcombine.high %v3193, 0
        %v3198 = vcombine.high %v3122, %v1026
        %v3200 = vunpack.c.l.s4 1983009808
        %v3201 = vunpack.c.0.s8 %v3200
        %v3202 = vlaneseq
        %v3203 = vshrl.u32 %v3202, 7
        %v3204 = vsub.s32 %v3201, %v3203
        %v3205 = vrot.slane %v3122, %v3204
        %v3207 = vunpack.c.l.s4 1983009808
        %v3208 = vunpack.c.0.s8 %v3207
        %v3209 = vlaneseq
        %v3210 = vshrl.u32 %v3209, 7
        %v3211 = vsub.s32 %v3208, %v3210
        %v3212 = vrot.slane %v3198, %v3211
        %v3213 = vcombine.high %v3130, %v1026
        %v3215 = vunpack.c.l.s4 1983009808
        %v3216 = vunpack.c.0.s8 %v3215
        %v3217 = vlaneseq
        %v3218 = vshrl.u32 %v3217, 7
        %v3219 = vsub.s32 %v3216, %v3218
        %v3220 = vrot.slane %v3130, %v3219
        %v3222 = vunpack.c.l.s4 1983009808
        %v3223 = vunpack.c.0.s8 %v3222
        %v3224 = vlaneseq
        %v3225 = vshrl.u32 %v3224, 7
        %v3226 = vsub.s32 %v3223, %v3225
        %v3227 = vrot.slane %v3213, %v3226
        %v3228 = vcombine.low %v3205, %v3220
        %v3229 = vcombine.high %v3205, %v3220
        %v3231 = vunpack.c.l.s4 1934713408
        %v3232 = vunpack.c.0.s8 %v3231
        %v3233 = vlaneseq
        %v3234 = vshrl.u32 %v3233, 7
        %v3235 = vsub.s32 %v3232, %v3234
        %v3236 = vrot.slane %v3228, %v3235
        %v3238 = vunpack.c.l.s4 1934713408
        %v3239 = vunpack.c.0.s8 %v3238
        %v3240 = vlaneseq
        %v3241 = vshrl.u32 %v3240, 7
        %v3242 = vsub.s32 %v3239, %v3241
        %v3243 = vrot.slane %v3229, %v3242
        %v3244 = vcombine.low %v3212, %v3227
        %v3245 = vcombine.high %v3212, %v3227
        %v3247 = vunpack.c.l.s4 1934713408
        %v3248 = vunpack.c.0.s8 %v3247
        %v3249 = vlaneseq
        %v3250 = vshrl.u32 %v3249, 7
        %v3251 = vsub.s32 %v3248, %v3250
        %v3252 = vrot.slane %v3244, %v3251
        %v3254 = vunpack.c.l.s4 1934713408
        %v3255 = vunpack.c.0.s8 %v3254
        %v3256 = vlaneseq
        %v3257 = vshrl.u32 %v3256, 7
        %v3258 = vsub.s32 %v3255, %v3257
        %v3259 = vrot.slane %v3245, %v3258
        %v3260 = vcombine.high %v3236, 0
        %v3261 = vcombine.high %v3243, 0
        %v3262 = vcombine.high %v3252, 0
        %v3263 = vcombine.high %v3259, 0
        %v3264 = vcombine.low %v3170, %v3177
        %v3266 = vunpack.c.l.s4 1983009808
        %v3267 = vunpack.c.0.s8 %v3266
        %v3268 = vlaneseq
        %v3269 = vshrl.u32 %v3268, 7
        %v3270 = vsub.s32 %v3267, %v3269
        %v3271 = vrot.slane %v3264, %v3270
        %v3272 = vcombine.low %v3194, %v3195
        %v3274 = vunpack.c.l.s4 1983009808
        %v3275 = vunpack.c.0.s8 %v3274
        %v3276 = vlaneseq
        %v3277 = vshrl.u32 %v3276, 7
        %v3278 = vsub.s32 %v3275, %v3277
        %v3279 = vrot.slane %v3272, %v3278
        %v3280 = vcombine.low %v3186, %v3193
        %v3282 = vunpack.c.l.s4 1983009808
        %v3283 = vunpack.c.0.s8 %v3282
        %v3284 = vlaneseq
        %v3285 = vshrl.u32 %v3284, 7
        %v3286 = vsub.s32 %v3283, %v3285
        %v3287 = vrot.slane %v3280, %v3286
        %v3288 = vcombine.low %v3196, %v3197
        %v3290 = vunpack.c.l.s4 1983009808
        %v3291 = vunpack.c.0.s8 %v3290
        %v3292 = vlaneseq
        %v3293 = vshrl.u32 %v3292, 7
        %v3294 = vsub.s32 %v3291, %v3293
        %v3295 = vrot.slane %v3288, %v3294
        %v3296 = vcombine.low %v3271, %v3279
        %v3298 = vunpack.c.l.s4 1934713408
        %v3299 = vunpack.c.0.s8 %v3298
        %v3300 = vlaneseq
        %v3301 = vshrl.u32 %v3300, 7
        %v3302 = vsub.s32 %v3299, %v3301
        %v3303 = vrot.slane %v3296, %v3302
        %v3304 = vcombine.low %v3287, %v3295
        %v3306 = vunpack.c.l.s4 1934713408
        %v3307 = vunpack.c.0.s8 %v3306
        %v3308 = vlaneseq
        %v3309 = vshrl.u32 %v3308, 7
        %v3310 = vsub.s32 %v3307, %v3309
        %v3311 = vrot.slane %v3304, %v3310
        %v3312 = vcombine.low %v3303, %v3311
        %v3313 = vcombine.high %v3303, %v3311
        %v3314 = vcombine.low %v3236, %v3243
        %v3316 = vunpack.c.l.s4 1983009808
        %v3317 = vunpack.c.0.s8 %v3316
        %v3318 = vlaneseq
        %v3319 = vshrl.u32 %v3318, 7
        %v3320 = vsub.s32 %v3317, %v3319
        %v3321 = vrot.slane %v3314, %v3320
        %v3322 = vcombine.low %v3260, %v3261
        %v3324 = vunpack.c.l.s4 1983009808
        %v3325 = vunpack.c.0.s8 %v3324
        %v3326 = vlaneseq
        %v3327 = vshrl.u32 %v3326, 7
        %v3328 = vsub.s32 %v3325, %v3327
        %v3329 = vrot.slane %v3322, %v3328
        %v3330 = vcombine.low %v3252, %v3259
        %v3332 = vunpack.c.l.s4 1983009808
        %v3333 = vunpack.c.0.s8 %v3332
        %v3334 = vlaneseq
        %v3335 = vshrl.u32 %v3334, 7
        %v3336 = vsub.s32 %v3333, %v3335
        %v3337 = vrot.slane %v3330, %v3336
        %v3338 = vcombine.low %v3262, %v3263
        %v3340 = vunpack.c.l.s4 1983009808
        %v3341 = vunpack.c.0.s8 %v3340
        %v3342 = vlaneseq
        %v3343 = vshrl.u32 %v3342, 7
        %v3344 = vsub.s32 %v3341, %v3343
        %v3345 = vrot.slane %v3338, %v3344
        %v3346 = vcombine.low %v3321, %v3329
        %v3348 = vunpack.c.l.s4 1934713408
        %v3349 = vunpack.c.0.s8 %v3348
        %v3350 = vlaneseq
        %v3351 = vshrl.u32 %v3350, 7
        %v3352 = vsub.s32 %v3349, %v3351
        %v3353 = vrot.slane %v3346, %v3352
        %v3354 = vcombine.low %v3337, %v3345
        %v3356 = vunpack.c.l.s4 1934713408
        %v3357 = vunpack.c.0.s8 %v3356
        %v3358 = vlaneseq
        %v3359 = vshrl.u32 %v3358, 7
        %v3360 = vsub.s32 %v3357, %v3359
        %v3361 = vrot.slane %v3354, %v3360
        %v3362 = vcombine.low %v3353, %v3361
        %v3363 = vcombine.high %v3353, %v3361
        %v3366 = vpack.i.b16 %v3362, %v3312
        %v3368 = vshrl.u32 %v3312, 16
        %v3369 = vshrl.u32 %v3362, 16
        %v3370 = vpack.i.b16 %v3369, %v3368
        %v3374 = vpack.i.b16 %v3363, %v3313
        %v3376 = vshrl.u32 %v3313, 16
        %v3377 = vshrl.u32 %v3363, 16
        %v3378 = vpack.i.b16 %v3377, %v3376
        %v3381 = vsel %vm1812, %v2830, 0
        %v3384 = vsel %vm1812, %v3098, 0
        %3386 = vmatprep.subr.bf16.mxu0 0
        %3387 = vmatpush1.bf16.xpose.msra.mxu0 %v3384
        %3388 = vmatprep.subr.bf16.mxu0 0
        %3389 = vmatpush1.bf16.xpose.msra.mxu0 0
        %3390 = vmatprep.subr.bf16.mxu0 0
        %3391 = vmatpush1.bf16.xpose.msra.mxu0 0
        %3392 = vmatprep.subr.bf16.mxu0 0
        %3393 = vmatpush1.bf16.xpose.msra.mxu0 0
        %3394 = vmatprep.subr.bf16.mxu0 0
        %3395 = vmatpush1.bf16.xpose.msra.mxu0 0
        %3396 = vmatprep.subr.bf16.mxu0 0
        %3397 = vmatpush1.bf16.xpose.msra.mxu0 0
        %3398 = vmatprep.subr.bf16.mxu0 0
        %3399 = vmatpush1.bf16.xpose.msra.mxu0 0
        %3400 = vmatprep.subr.bf16.mxu0 0
        %3401 = vmatpush1.bf16.xpose.msra.mxu0 0
        %3402 = vmatprep.subr.bf16.mxu0 0
        %3403 = vmatpush1.bf16.xpose.msra.mxu0 0
        %3404 = vmatprep.subr.bf16.mxu0 0
        %3405 = vmatpush1.bf16.xpose.msra.mxu0 0
        %3406 = vmatprep.subr.bf16.mxu0 0
        %3407 = vmatpush1.bf16.xpose.msra.mxu0 0
        %3408 = vmatprep.subr.bf16.mxu0 0
        %3409 = vmatpush1.bf16.xpose.msra.mxu0 0
        %3410 = vmatprep.subr.bf16.mxu0 0
        %3411 = vmatpush1.bf16.xpose.msra.mxu0 0
        %3412 = vmatprep.subr.bf16.mxu0 0
        %3413 = vmatpush1.bf16.xpose.msra.mxu0 0
        %3414 = vmatprep.subr.bf16.mxu0 0
        %3415 = vmatpush1.bf16.xpose.msra.mxu0 0
        %3416 = vmatprep.subr.bf16.mxu0 0
        %3417 = vmatpush1.bf16.xpose.msra.mxu0 0
        %3418 = vmatprep.mubr.bf16.mxu0 0
        %3419 = vmatmul.mubr.bf16.gmra.mrb[0].mxu0 %v3381
        %v3420 = vpop.f32.mrb[0].mxu0
        %v3421 = vadd.f32 0.0, %v3420
        %v3422 = vpop.f32.mrb[0].mxu0
        %v3423 = vpop.f32.mrb[0].mxu0
        %v3424 = vadd.f32 0.0, %v3423
        %v3425 = vpop.f32.mrb[0].mxu0
        %3426 = vdwg.mxu0
        %v3428 = vsel %vm1812, %v2833, 0
        %v3431 = vsel %vm1812, %v3101, 0
        %3433 = vmatprep.subr.bf16.mxu0 0
        %3434 = vmatpush1.bf16.xpose.msra.mxu0 %v3431
        %3435 = vmatprep.subr.bf16.mxu0 0
        %3436 = vmatpush1.bf16.xpose.msra.mxu0 0
        %3437 = vmatprep.subr.bf16.mxu0 0
        %3438 = vmatpush1.bf16.xpose.msra.mxu0 0
        %3439 = vmatprep.subr.bf16.mxu0 0
        %3440 = vmatpush1.bf16.xpose.msra.mxu0 0
        %3441 = vmatprep.subr.bf16.mxu0 0
        %3442 = vmatpush1.bf16.xpose.msra.mxu0 0
        %3443 = vmatprep.subr.bf16.mxu0 0
        %3444 = vmatpush1.bf16.xpose.msra.mxu0 0
        %3445 = vmatprep.subr.bf16.mxu0 0
        %3446 = vmatpush1.bf16.xpose.msra.mxu0 0
        %3447 = vmatprep.subr.bf16.mxu0 0
        %3448 = vmatpush1.bf16.xpose.msra.mxu0 0
        %3449 = vmatprep.subr.bf16.mxu0 0
        %3450 = vmatpush1.bf16.xpose.msra.mxu0 0
        %3451 = vmatprep.subr.bf16.mxu0 0
        %3452 = vmatpush1.bf16.xpose.msra.mxu0 0
        %3453 = vmatprep.subr.bf16.mxu0 0
        %3454 = vmatpush1.bf16.xpose.msra.mxu0 0
        %3455 = vmatprep.subr.bf16.mxu0 0
        %3456 = vmatpush1.bf16.xpose.msra.mxu0 0
        %3457 = vmatprep.subr.bf16.mxu0 0
        %3458 = vmatpush1.bf16.xpose.msra.mxu0 0
        %3459 = vmatprep.subr.bf16.mxu0 0
        %3460 = vmatpush1.bf16.xpose.msra.mxu0 0
        %3461 = vmatprep.subr.bf16.mxu0 0
        %3462 = vmatpush1.bf16.xpose.msra.mxu0 0
        %3463 = vmatprep.subr.bf16.mxu0 0
        %3464 = vmatpush1.bf16.xpose.msra.mxu0 0
        %3465 = vmatprep.mubr.bf16.mxu0 0
        %3466 = vmatmul.mubr.bf16.gmra.mrb[0].mxu0 %v3428
        %v3467 = vpop.f32.mrb[0].mxu0
        %v3468 = vadd.f32 0.0, %v3467
        %v3469 = vpop.f32.mrb[0].mxu0
        %v3470 = vpop.f32.mrb[0].mxu0
        %v3471 = vadd.f32 0.0, %v3470
        %v3472 = vpop.f32.mrb[0].mxu0
        %3473 = vdwg.mxu0
        %v3475 = vsel %vm1812, %v2836, 0
        %v3478 = vsel %vm1812, %v3104, 0
        %3480 = vmatprep.subr.bf16.mxu0 0
        %3481 = vmatpush1.bf16.xpose.msra.mxu0 %v3478
        %3482 = vmatprep.subr.bf16.mxu0 0
        %3483 = vmatpush1.bf16.xpose.msra.mxu0 0
        %3484 = vmatprep.subr.bf16.mxu0 0
        %3485 = vmatpush1.bf16.xpose.msra.mxu0 0
        %3486 = vmatprep.subr.bf16.mxu0 0
        %3487 = vmatpush1.bf16.xpose.msra.mxu0 0
        %3488 = vmatprep.subr.bf16.mxu0 0
        %3489 = vmatpush1.bf16.xpose.msra.mxu0 0
        %3490 = vmatprep.subr.bf16.mxu0 0
        %3491 = vmatpush1.bf16.xpose.msra.mxu0 0
        %3492 = vmatprep.subr.bf16.mxu0 0
        %3493 = vmatpush1.bf16.xpose.msra.mxu0 0
        %3494 = vmatprep.subr.bf16.mxu0 0
        %3495 = vmatpush1.bf16.xpose.msra.mxu0 0
        %3496 = vmatprep.subr.bf16.mxu0 0
        %3497 = vmatpush1.bf16.xpose.msra.mxu0 0
        %3498 = vmatprep.subr.bf16.mxu0 0
        %3499 = vmatpush1.bf16.xpose.msra.mxu0 0
        %3500 = vmatprep.subr.bf16.mxu0 0
        %3501 = vmatpush1.bf16.xpose.msra.mxu0 0
        %3502 = vmatprep.subr.bf16.mxu0 0
        %3503 = vmatpush1.bf16.xpose.msra.mxu0 0
        %3504 = vmatprep.subr.bf16.mxu0 0
        %3505 = vmatpush1.bf16.xpose.msra.mxu0 0
        %3506 = vmatprep.subr.bf16.mxu0 0
        %3507 = vmatpush1.bf16.xpose.msra.mxu0 0
        %3508 = vmatprep.subr.bf16.mxu0 0
        %3509 = vmatpush1.bf16.xpose.msra.mxu0 0
        %3510 = vmatprep.subr.bf16.mxu0 0
        %3511 = vmatpush1.bf16.xpose.msra.mxu0 0
        %3512 = vmatprep.mubr.bf16.mxu0 0
        %3513 = vmatmul.mubr.bf16.gmra.mrb[0].mxu0 %v3475
        %v3514 = vpop.f32.mrb[0].mxu0
        %v3515 = vadd.f32 0.0, %v3514
        %v3516 = vpop.f32.mrb[0].mxu0
        %v3517 = vpop.f32.mrb[0].mxu0
        %v3518 = vadd.f32 0.0, %v3517
        %v3519 = vpop.f32.mrb[0].mxu0
        %3520 = vdwg.mxu0
        %v3522 = vsel %vm1812, %v2839, 0
        %v3525 = vsel %vm1812, %v3107, 0
        %3527 = vmatprep.subr.bf16.mxu0 0
        %3528 = vmatpush1.bf16.xpose.msra.mxu0 %v3525
        %3529 = vmatprep.subr.bf16.mxu0 0
        %3530 = vmatpush1.bf16.xpose.msra.mxu0 0
        %3531 = vmatprep.subr.bf16.mxu0 0
        %3532 = vmatpush1.bf16.xpose.msra.mxu0 0
        %3533 = vmatprep.subr.bf16.mxu0 0
        %3534 = vmatpush1.bf16.xpose.msra.mxu0 0
        %3535 = vmatprep.subr.bf16.mxu0 0
        %3536 = vmatpush1.bf16.xpose.msra.mxu0 0
        %3537 = vmatprep.subr.bf16.mxu0 0
        %3538 = vmatpush1.bf16.xpose.msra.mxu0 0
        %3539 = vmatprep.subr.bf16.mxu0 0
        %3540 = vmatpush1.bf16.xpose.msra.mxu0 0
        %3541 = vmatprep.subr.bf16.mxu0 0
        %3542 = vmatpush1.bf16.xpose.msra.mxu0 0
        %3543 = vmatprep.subr.bf16.mxu0 0
        %3544 = vmatpush1.bf16.xpose.msra.mxu0 0
        %3545 = vmatprep.subr.bf16.mxu0 0
        %3546 = vmatpush1.bf16.xpose.msra.mxu0 0
        %3547 = vmatprep.subr.bf16.mxu0 0
        %3548 = vmatpush1.bf16.xpose.msra.mxu0 0
        %3549 = vmatprep.subr.bf16.mxu0 0
        %3550 = vmatpush1.bf16.xpose.msra.mxu0 0
        %3551 = vmatprep.subr.bf16.mxu0 0
        %3552 = vmatpush1.bf16.xpose.msra.mxu0 0
        %3553 = vmatprep.subr.bf16.mxu0 0
        %3554 = vmatpush1.bf16.xpose.msra.mxu0 0
        %3555 = vmatprep.subr.bf16.mxu0 0
        %3556 = vmatpush1.bf16.xpose.msra.mxu0 0
        %3557 = vmatprep.subr.bf16.mxu0 0
        %3558 = vmatpush1.bf16.xpose.msra.mxu0 0
        %3559 = vmatprep.mubr.bf16.mxu0 0
        %3560 = vmatmul.mubr.bf16.gmra.mrb[0].mxu0 %v3522
        %v3561 = vpop.f32.mrb[0].mxu0
        %v3562 = vadd.f32 0.0, %v3561
        %v3563 = vpop.f32.mrb[0].mxu0
        %v3564 = vpop.f32.mrb[0].mxu0
        %v3565 = vadd.f32 0.0, %v3564
        %v3566 = vpop.f32.mrb[0].mxu0
        %3567 = vdwg.mxu0
        %v3568 = vsel %vm2001, %v3421, -inf
        %3569 = vmax.xlane.f32.xlu0 %v3568
        %v3570 = vpop.xlane.xlu0 %3569
        %v3571 = vsel %vm2001, %v3424, -inf
        %3572 = vmax.xlane.f32.xlu0 %v3571
        %v3573 = vpop.xlane.xlu0 %3572
        %v3574 = vsel %vm2001, %v3468, -inf
        %3575 = vmax.xlane.f32.xlu0 %v3574
        %v3576 = vpop.xlane.xlu0 %3575
        %v3577 = vsel %vm2001, %v3471, -inf
        %3578 = vmax.xlane.f32.xlu0 %v3577
        %v3579 = vpop.xlane.xlu0 %3578
        %v3580 = vsel %vm2001, %v3515, -inf
        %3581 = vmax.xlane.f32.xlu0 %v3580
        %v3582 = vpop.xlane.xlu0 %3581
        %v3583 = vsel %vm2001, %v3518, -inf
        %3584 = vmax.xlane.f32.xlu0 %v3583
        %v3585 = vpop.xlane.xlu0 %3584
        %v3586 = vsel %vm2001, %v3562, -inf
        %3587 = vmax.xlane.f32.xlu0 %v3586
        %v3588 = vpop.xlane.xlu0 %3587
        %v3589 = vsel %vm2001, %v3565, -inf
        %3590 = vmax.xlane.f32.xlu0 %v3589
        %v3591 = vpop.xlane.xlu0 %3590
        %v3592 = vsub.f32 %v3421, %v3570
        %v3593 = vsub.f32 %v3424, %v3573
        %v3594 = vsub.f32 %v3468, %v3576
        %v3595 = vsub.f32 %v3471, %v3579
        %v3596 = vsub.f32 %v3515, %v3582
        %v3597 = vsub.f32 %v3518, %v3585
        %v3598 = vsub.f32 %v3562, %v3588
        %v3599 = vsub.f32 %v3565, %v3591
        %v3600 = vmul.f32 %v3592, 1.442695
        %v3601 = vpow.pop %v3600
        %v3602 = vmul.f32 %v3593, 1.442695
        %v3603 = vpow.pop %v3602
        %v3604 = vmul.f32 %v3594, 1.442695
        %v3605 = vpow.pop %v3604
        %v3606 = vmul.f32 %v3595, 1.442695
        %v3607 = vpow.pop %v3606
        %v3608 = vmul.f32 %v3596, 1.442695
        %v3609 = vpow.pop %v3608
        %v3610 = vmul.f32 %v3597, 1.442695
        %v3611 = vpow.pop %v3610
        %v3612 = vmul.f32 %v3598, 1.442695
        %v3613 = vpow.pop %v3612
        %v3614 = vmul.f32 %v3599, 1.442695
        %v3615 = vpow.pop %v3614
        %v3616 = vsel %vm2001, %v3601, 0.0
        %3617 = vadd.xlane.f32.xlu0 %v3616
        %v3618 = vpop.xlane.xlu0 %3617
        %v3619 = vsel %vm2001, %v3603, 0.0
        %3620 = vadd.xlane.f32.xlu0 %v3619
        %v3621 = vpop.xlane.xlu0 %3620
        %v3622 = vsel %vm2001, %v3605, 0.0
        %3623 = vadd.xlane.f32.xlu0 %v3622
        %v3624 = vpop.xlane.xlu0 %3623
        %v3625 = vsel %vm2001, %v3607, 0.0
        %3626 = vadd.xlane.f32.xlu0 %v3625
        %v3627 = vpop.xlane.xlu0 %3626
        %v3628 = vsel %vm2001, %v3609, 0.0
        %3629 = vadd.xlane.f32.xlu0 %v3628
        %v3630 = vpop.xlane.xlu0 %3629
        %v3631 = vsel %vm2001, %v3611, 0.0
        %3632 = vadd.xlane.f32.xlu0 %v3631
        %v3633 = vpop.xlane.xlu0 %3632
        %v3634 = vsel %vm2001, %v3613, 0.0
        %3635 = vadd.xlane.f32.xlu0 %v3634
        %v3636 = vpop.xlane.xlu0 %3635
        %v3637 = vsel %vm2001, %v3615, 0.0
        %3638 = vadd.xlane.f32.xlu0 %v3637
        %v3639 = vpop.xlane.xlu0 %3638
        %v3640 = vrcp.pop %v3618
        %v3641 = vrcp.pop %v3621
        %v3642 = vrcp.pop %v3624
        %v3643 = vrcp.pop %v3627
        %v3644 = vrcp.pop %v3630
        %v3645 = vrcp.pop %v3633
        %v3646 = vrcp.pop %v3636
        %v3647 = vrcp.pop %v3639
        %v3648 = vmul.f32 %v3601, %v3640
        %v3649 = vmul.f32 %v3603, %v3641
        %v3650 = vmul.f32 %v3605, %v3642
        %v3651 = vmul.f32 %v3607, %v3643
        %v3652 = vmul.f32 %v3609, %v3644
        %v3653 = vmul.f32 %v3611, %v3645
        %v3654 = vmul.f32 %v3613, %v3646
        %v3655 = vmul.f32 %v3615, %v3647
        %v3656 = vpack.c.bf16 %v3649, %v3648
        %v3657 = vpack.c.bf16 %v3651, %v3650
        %v3658 = vpack.c.bf16 %v3653, %v3652
        %v3659 = vpack.c.bf16 %v3655, %v3654
        %v3661 = vsel %vm2001, %v3656, 0
        %3663 = vmatprep.subr.bf16.mxu0 0
        %3664 = vmatpush1.bf16.msra.mxu0 %v3366
        %3665 = vmatprep.subr.bf16.mxu0 0
        %3666 = vmatpush1.bf16.msra.mxu0 0
        %3667 = vmatprep.subr.bf16.mxu0 0
        %3668 = vmatpush1.bf16.msra.mxu0 0
        %3669 = vmatprep.subr.bf16.mxu0 0
        %3670 = vmatpush1.bf16.msra.mxu0 0
        %3671 = vmatprep.subr.bf16.mxu0 0
        %3672 = vmatpush1.bf16.msra.mxu0 0
        %3673 = vmatprep.subr.bf16.mxu0 0
        %3674 = vmatpush1.bf16.msra.mxu0 0
        %3675 = vmatprep.subr.bf16.mxu0 0
        %3676 = vmatpush1.bf16.msra.mxu0 0
        %3677 = vmatprep.subr.bf16.mxu0 0
        %3678 = vmatpush1.bf16.msra.mxu0 0
        %3679 = vmatprep.subr.bf16.mxu0 0
        %3680 = vmatpush1.bf16.msra.mxu0 0
        %3681 = vmatprep.subr.bf16.mxu0 0
        %3682 = vmatpush1.bf16.msra.mxu0 0
        %3683 = vmatprep.subr.bf16.mxu0 0
        %3684 = vmatpush1.bf16.msra.mxu0 0
        %3685 = vmatprep.subr.bf16.mxu0 0
        %3686 = vmatpush1.bf16.msra.mxu0 0
        %3687 = vmatprep.subr.bf16.mxu0 0
        %3688 = vmatpush1.bf16.msra.mxu0 0
        %3689 = vmatprep.subr.bf16.mxu0 0
        %3690 = vmatpush1.bf16.msra.mxu0 0
        %3691 = vmatprep.subr.bf16.mxu0 0
        %3692 = vmatpush1.bf16.msra.mxu0 0
        %3693 = vmatprep.subr.bf16.mxu0 0
        %3694 = vmatpush1.bf16.msra.mxu0 0
        %3695 = vmatprep.mubr.bf16.mxu0 0
        %3696 = vmatmul.mubr.bf16.gmra.mrb[0].mxu0 %v3661
        %v3697 = vpop.f32.mrb[0].mxu0
        %v3698 = vadd.f32 0.0, %v3697
        %v3699 = vpop.f32.mrb[0].mxu0
        %v3700 = vpop.f32.mrb[0].mxu0
        %v3701 = vadd.f32 0.0, %v3700
        %v3702 = vpop.f32.mrb[0].mxu0
        %3703 = vdwg.mxu0
        %v3705 = vsel %vm2001, %v3657, 0
        %3707 = vmatprep.subr.bf16.mxu0 0
        %3708 = vmatpush1.bf16.msra.mxu0 %v3370
        %3709 = vmatprep.subr.bf16.mxu0 0
        %3710 = vmatpush1.bf16.msra.mxu0 0
        %3711 = vmatprep.subr.bf16.mxu0 0
        %3712 = vmatpush1.bf16.msra.mxu0 0
        %3713 = vmatprep.subr.bf16.mxu0 0
        %3714 = vmatpush1.bf16.msra.mxu0 0
        %3715 = vmatprep.subr.bf16.mxu0 0
        %3716 = vmatpush1.bf16.msra.mxu0 0
        %3717 = vmatprep.subr.bf16.mxu0 0
        %3718 = vmatpush1.bf16.msra.mxu0 0
        %3719 = vmatprep.subr.bf16.mxu0 0
        %3720 = vmatpush1.bf16.msra.mxu0 0
        %3721 = vmatprep.subr.bf16.mxu0 0
        %3722 = vmatpush1.bf16.msra.mxu0 0
        %3723 = vmatprep.subr.bf16.mxu0 0
        %3724 = vmatpush1.bf16.msra.mxu0 0
        %3725 = vmatprep.subr.bf16.mxu0 0
        %3726 = vmatpush1.bf16.msra.mxu0 0
        %3727 = vmatprep.subr.bf16.mxu0 0
        %3728 = vmatpush1.bf16.msra.mxu0 0
        %3729 = vmatprep.subr.bf16.mxu0 0
        %3730 = vmatpush1.bf16.msra.mxu0 0
        %3731 = vmatprep.subr.bf16.mxu0 0
        %3732 = vmatpush1.bf16.msra.mxu0 0
        %3733 = vmatprep.subr.bf16.mxu0 0
        %3734 = vmatpush1.bf16.msra.mxu0 0
        %3735 = vmatprep.subr.bf16.mxu0 0
        %3736 = vmatpush1.bf16.msra.mxu0 0
        %3737 = vmatprep.subr.bf16.mxu0 0
        %3738 = vmatpush1.bf16.msra.mxu0 0
        %3739 = vmatprep.mubr.bf16.mxu0 0
        %3740 = vmatmul.mubr.bf16.gmra.mrb[0].mxu0 %v3705
        %v3741 = vpop.f32.mrb[0].mxu0
        %v3742 = vadd.f32 0.0, %v3741
        %v3743 = vpop.f32.mrb[0].mxu0
        %v3744 = vpop.f32.mrb[0].mxu0
        %v3745 = vadd.f32 0.0, %v3744
        %v3746 = vpop.f32.mrb[0].mxu0
        %3747 = vdwg.mxu0
        %v3749 = vsel %vm2001, %v3658, 0
        %3751 = vmatprep.subr.bf16.mxu0 0
        %3752 = vmatpush1.bf16.msra.mxu0 %v3374
        %3753 = vmatprep.subr.bf16.mxu0 0
        %3754 = vmatpush1.bf16.msra.mxu0 0
        %3755 = vmatprep.subr.bf16.mxu0 0
        %3756 = vmatpush1.bf16.msra.mxu0 0
        %3757 = vmatprep.subr.bf16.mxu0 0
        %3758 = vmatpush1.bf16.msra.mxu0 0
        %3759 = vmatprep.subr.bf16.mxu0 0
        %3760 = vmatpush1.bf16.msra.mxu0 0
        %3761 = vmatprep.subr.bf16.mxu0 0
        %3762 = vmatpush1.bf16.msra.mxu0 0
        %3763 = vmatprep.subr.bf16.mxu0 0
        %3764 = vmatpush1.bf16.msra.mxu0 0
        %3765 = vmatprep.subr.bf16.mxu0 0
        %3766 = vmatpush1.bf16.msra.mxu0 0
        %3767 = vmatprep.subr.bf16.mxu0 0
        %3768 = vmatpush1.bf16.msra.mxu0 0
        %3769 = vmatprep.subr.bf16.mxu0 0
        %3770 = vmatpush1.bf16.msra.mxu0 0
        %3771 = vmatprep.subr.bf16.mxu0 0
        %3772 = vmatpush1.bf16.msra.mxu0 0
        %3773 = vmatprep.subr.bf16.mxu0 0
        %3774 = vmatpush1.bf16.msra.mxu0 0
        %3775 = vmatprep.subr.bf16.mxu0 0
        %3776 = vmatpush1.bf16.msra.mxu0 0
        %3777 = vmatprep.subr.bf16.mxu0 0
        %3778 = vmatpush1.bf16.msra.mxu0 0
        %3779 = vmatprep.subr.bf16.mxu0 0
        %3780 = vmatpush1.bf16.msra.mxu0 0
        %3781 = vmatprep.subr.bf16.mxu0 0
        %3782 = vmatpush1.bf16.msra.mxu0 0
        %3783 = vmatprep.mubr.bf16.mxu0 0
        %3784 = vmatmul.mubr.bf16.gmra.mrb[0].mxu0 %v3749
        %v3785 = vpop.f32.mrb[0].mxu0
        %v3786 = vadd.f32 0.0, %v3785
        %v3787 = vpop.f32.mrb[0].mxu0
        %v3788 = vpop.f32.mrb[0].mxu0
        %v3789 = vadd.f32 0.0, %v3788
        %v3790 = vpop.f32.mrb[0].mxu0
        %3791 = vdwg.mxu0
        %v3793 = vsel %vm2001, %v3659, 0
        %3795 = vmatprep.subr.bf16.mxu0 0
        %3796 = vmatpush1.bf16.msra.mxu0 %v3378
        %3797 = vmatprep.subr.bf16.mxu0 0
        %3798 = vmatpush1.bf16.msra.mxu0 0
        %3799 = vmatprep.subr.bf16.mxu0 0
        %3800 = vmatpush1.bf16.msra.mxu0 0
        %3801 = vmatprep.subr.bf16.mxu0 0
        %3802 = vmatpush1.bf16.msra.mxu0 0
        %3803 = vmatprep.subr.bf16.mxu0 0
        %3804 = vmatpush1.bf16.msra.mxu0 0
        %3805 = vmatprep.subr.bf16.mxu0 0
        %3806 = vmatpush1.bf16.msra.mxu0 0
        %3807 = vmatprep.subr.bf16.mxu0 0
        %3808 = vmatpush1.bf16.msra.mxu0 0
        %3809 = vmatprep.subr.bf16.mxu0 0
        %3810 = vmatpush1.bf16.msra.mxu0 0
        %3811 = vmatprep.subr.bf16.mxu0 0
        %3812 = vmatpush1.bf16.msra.mxu0 0
        %3813 = vmatprep.subr.bf16.mxu0 0
        %3814 = vmatpush1.bf16.msra.mxu0 0
        %3815 = vmatprep.subr.bf16.mxu0 0
        %3816 = vmatpush1.bf16.msra.mxu0 0
        %3817 = vmatprep.subr.bf16.mxu0 0
        %3818 = vmatpush1.bf16.msra.mxu0 0
        %3819 = vmatprep.subr.bf16.mxu0 0
        %3820 = vmatpush1.bf16.msra.mxu0 0
        %3821 = vmatprep.subr.bf16.mxu0 0
        %3822 = vmatpush1.bf16.msra.mxu0 0
        %3823 = vmatprep.subr.bf16.mxu0 0
        %3824 = vmatpush1.bf16.msra.mxu0 0
        %3825 = vmatprep.subr.bf16.mxu0 0
        %3826 = vmatpush1.bf16.msra.mxu0 0
        %3827 = vmatprep.mubr.bf16.mxu0 0
        %3828 = vmatmul.mubr.bf16.gmra.mrb[0].mxu0 %v3793
        %v3829 = vpop.f32.mrb[0].mxu0
        %v3830 = vadd.f32 0.0, %v3829
        %v3831 = vpop.f32.mrb[0].mxu0
        %v3832 = vpop.f32.mrb[0].mxu0
        %v3833 = vadd.f32 0.0, %v3832
        %v3834 = vpop.f32.mrb[0].mxu0
        %3835 = vdwg.mxu0
        %v3836 = vcombine.low %v3698, %v3786
        %v3837 = vcombine.high %v3698, %v3786
        %v3839 = vunpack.c.l.s4 1983009808
        %v3840 = vunpack.c.0.s8 %v3839
        %v3841 = vlaneseq
        %v3842 = vshrl.u32 %v3841, 7
        %v3843 = vsub.s32 %v3840, %v3842
        %v3844 = vrot.slane %v3836, %v3843
        %v3846 = vunpack.c.l.s4 1983009808
        %v3847 = vunpack.c.0.s8 %v3846
        %v3848 = vlaneseq
        %v3849 = vshrl.u32 %v3848, 7
        %v3850 = vsub.s32 %v3847, %v3849
        %v3851 = vrot.slane %v3837, %v3850
        %v3852 = vcombine.low %v3742, %v3830
        %v3853 = vcombine.high %v3742, %v3830
        %v3855 = vunpack.c.l.s4 1983009808
        %v3856 = vunpack.c.0.s8 %v3855
        %v3857 = vlaneseq
        %v3858 = vshrl.u32 %v3857, 7
        %v3859 = vsub.s32 %v3856, %v3858
        %v3860 = vrot.slane %v3852, %v3859
        %v3862 = vunpack.c.l.s4 1983009808
        %v3863 = vunpack.c.0.s8 %v3862
        %v3864 = vlaneseq
        %v3865 = vshrl.u32 %v3864, 7
        %v3866 = vsub.s32 %v3863, %v3865
        %v3867 = vrot.slane %v3853, %v3866
        %v3868 = vcombine.low %v3844, %v3860
        %v3869 = vcombine.high %v3844, %v3860
        %v3871 = vunpack.c.l.s4 1934713408
        %v3872 = vunpack.c.0.s8 %v3871
        %v3873 = vlaneseq
        %v3874 = vshrl.u32 %v3873, 7
        %v3875 = vsub.s32 %v3872, %v3874
        %v3876 = vrot.slane %v3868, %v3875
        %v3878 = vunpack.c.l.s4 1934713408
        %v3879 = vunpack.c.0.s8 %v3878
        %v3880 = vlaneseq
        %v3881 = vshrl.u32 %v3880, 7
        %v3882 = vsub.s32 %v3879, %v3881
        %v3883 = vrot.slane %v3869, %v3882
        %v3884 = vcombine.low %v3851, %v3867
        %v3885 = vcombine.high %v3851, %v3867
        %v3887 = vunpack.c.l.s4 1934713408
        %v3888 = vunpack.c.0.s8 %v3887
        %v3889 = vlaneseq
        %v3890 = vshrl.u32 %v3889, 7
        %v3891 = vsub.s32 %v3888, %v3890
        %v3892 = vrot.slane %v3884, %v3891
        %v3894 = vunpack.c.l.s4 1934713408
        %v3895 = vunpack.c.0.s8 %v3894
        %v3896 = vlaneseq
        %v3897 = vshrl.u32 %v3896, 7
        %v3898 = vsub.s32 %v3895, %v3897
        %v3899 = vrot.slane %v3885, %v3898
        %v3900 = vcombine.high %v3876, 0.0
        %v3901 = vcombine.high %v3883, 0.0
        %v3902 = vcombine.high %v3892, 0.0
        %v3903 = vcombine.high %v3899, 0.0
        %v3904 = vcombine.low %v3701, %v3789
        %v3905 = vcombine.high %v3701, %v3789
        %v3907 = vunpack.c.l.s4 1983009808
        %v3908 = vunpack.c.0.s8 %v3907
        %v3909 = vlaneseq
        %v3910 = vshrl.u32 %v3909, 7
        %v3911 = vsub.s32 %v3908, %v3910
        %v3912 = vrot.slane %v3904, %v3911
        %v3914 = vunpack.c.l.s4 1983009808
        %v3915 = vunpack.c.0.s8 %v3914
        %v3916 = vlaneseq
        %v3917 = vshrl.u32 %v3916, 7
        %v3918 = vsub.s32 %v3915, %v3917
        %v3919 = vrot.slane %v3905, %v3918
        %v3920 = vcombine.low %v3745, %v3833
        %v3921 = vcombine.high %v3745, %v3833
        %v3923 = vunpack.c.l.s4 1983009808
        %v3924 = vunpack.c.0.s8 %v3923
        %v3925 = vlaneseq
        %v3926 = vshrl.u32 %v3925, 7
        %v3927 = vsub.s32 %v3924, %v3926
        %v3928 = vrot.slane %v3920, %v3927
        %v3930 = vunpack.c.l.s4 1983009808
        %v3931 = vunpack.c.0.s8 %v3930
        %v3932 = vlaneseq
        %v3933 = vshrl.u32 %v3932, 7
        %v3934 = vsub.s32 %v3931, %v3933
        %v3935 = vrot.slane %v3921, %v3934
        %v3936 = vcombine.low %v3912, %v3928
        %v3937 = vcombine.high %v3912, %v3928
        %v3939 = vunpack.c.l.s4 1934713408
        %v3940 = vunpack.c.0.s8 %v3939
        %v3941 = vlaneseq
        %v3942 = vshrl.u32 %v3941, 7
        %v3943 = vsub.s32 %v3940, %v3942
        %v3944 = vrot.slane %v3936, %v3943
        %v3946 = vunpack.c.l.s4 1934713408
        %v3947 = vunpack.c.0.s8 %v3946
        %v3948 = vlaneseq
        %v3949 = vshrl.u32 %v3948, 7
        %v3950 = vsub.s32 %v3947, %v3949
        %v3951 = vrot.slane %v3937, %v3950
        %v3952 = vcombine.low %v3919, %v3935
        %v3953 = vcombine.high %v3919, %v3935
        %v3955 = vunpack.c.l.s4 1934713408
        %v3956 = vunpack.c.0.s8 %v3955
        %v3957 = vlaneseq
        %v3958 = vshrl.u32 %v3957, 7
        %v3959 = vsub.s32 %v3956, %v3958
        %v3960 = vrot.slane %v3952, %v3959
        %v3962 = vunpack.c.l.s4 1934713408
        %v3963 = vunpack.c.0.s8 %v3962
        %v3964 = vlaneseq
        %v3965 = vshrl.u32 %v3964, 7
        %v3966 = vsub.s32 %v3963, %v3965
        %v3967 = vrot.slane %v3953, %v3966
        %v3968 = vcombine.high %v3944, 0.0
        %v3969 = vcombine.high %v3951, 0.0
        %v3970 = vcombine.high %v3960, 0.0
        %v3971 = vcombine.high %v3967, 0.0
        %v3972 = vcombine.low %v3876, %v3883
        %v3974 = vunpack.c.l.s4 1983009808
        %v3975 = vunpack.c.0.s8 %v3974
        %v3976 = vlaneseq
        %v3977 = vshrl.u32 %v3976, 7
        %v3978 = vsub.s32 %v3975, %v3977
        %v3979 = vrot.slane %v3972, %v3978
        %v3980 = vcombine.low %v3900, %v3901
        %v3982 = vunpack.c.l.s4 1983009808
        %v3983 = vunpack.c.0.s8 %v3982
        %v3984 = vlaneseq
        %v3985 = vshrl.u32 %v3984, 7
        %v3986 = vsub.s32 %v3983, %v3985
        %v3987 = vrot.slane %v3980, %v3986
        %v3988 = vcombine.low %v3892, %v3899
        %v3990 = vunpack.c.l.s4 1983009808
        %v3991 = vunpack.c.0.s8 %v3990
        %v3992 = vlaneseq
        %v3993 = vshrl.u32 %v3992, 7
        %v3994 = vsub.s32 %v3991, %v3993
        %v3995 = vrot.slane %v3988, %v3994
        %v3996 = vcombine.low %v3902, %v3903
        %v3998 = vunpack.c.l.s4 1983009808
        %v3999 = vunpack.c.0.s8 %v3998
        %v4000 = vlaneseq
        %v4001 = vshrl.u32 %v4000, 7
        %v4002 = vsub.s32 %v3999, %v4001
        %v4003 = vrot.slane %v3996, %v4002
        %v4004 = vcombine.low %v3979, %v3987
        %v4005 = vcombine.high %v3979, %v3987
        %v4007 = vunpack.c.l.s4 1934713408
        %v4008 = vunpack.c.0.s8 %v4007
        %v4009 = vlaneseq
        %v4010 = vshrl.u32 %v4009, 7
        %v4011 = vsub.s32 %v4008, %v4010
        %v4012 = vrot.slane %v4004, %v4011
        %v4014 = vunpack.c.l.s4 1934713408
        %v4015 = vunpack.c.0.s8 %v4014
        %v4016 = vlaneseq
        %v4017 = vshrl.u32 %v4016, 7
        %v4018 = vsub.s32 %v4015, %v4017
        %v4019 = vrot.slane %v4005, %v4018
        %v4020 = vcombine.low %v3995, %v4003
        %v4021 = vcombine.high %v3995, %v4003
        %v4023 = vunpack.c.l.s4 1934713408
        %v4024 = vunpack.c.0.s8 %v4023
        %v4025 = vlaneseq
        %v4026 = vshrl.u32 %v4025, 7
        %v4027 = vsub.s32 %v4024, %v4026
        %v4028 = vrot.slane %v4020, %v4027
        %v4030 = vunpack.c.l.s4 1934713408
        %v4031 = vunpack.c.0.s8 %v4030
        %v4032 = vlaneseq
        %v4033 = vshrl.u32 %v4032, 7
        %v4034 = vsub.s32 %v4031, %v4033
        %v4035 = vrot.slane %v4021, %v4034
        %v4036 = vcombine.low %v4012, %v4028
        %v4037 = vcombine.high %v4012, %v4028
        %v4038 = vcombine.low %v4019, %v4035
        %v4039 = vcombine.high %v4019, %v4035
        %v4040 = vcombine.low %v3944, %v3951
        %v4042 = vunpack.c.l.s4 1983009808
        %v4043 = vunpack.c.0.s8 %v4042
        %v4044 = vlaneseq
        %v4045 = vshrl.u32 %v4044, 7
        %v4046 = vsub.s32 %v4043, %v4045
        %v4047 = vrot.slane %v4040, %v4046
        %v4048 = vcombine.low %v3968, %v3969
        %v4050 = vunpack.c.l.s4 1983009808
        %v4051 = vunpack.c.0.s8 %v4050
        %v4052 = vlaneseq
        %v4053 = vshrl.u32 %v4052, 7
        %v4054 = vsub.s32 %v4051, %v4053
        %v4055 = vrot.slane %v4048, %v4054
        %v4056 = vcombine.low %v3960, %v3967
        %v4058 = vunpack.c.l.s4 1983009808
        %v4059 = vunpack.c.0.s8 %v4058
        %v4060 = vlaneseq
        %v4061 = vshrl.u32 %v4060, 7
        %v4062 = vsub.s32 %v4059, %v4061
        %v4063 = vrot.slane %v4056, %v4062
        %v4064 = vcombine.low %v3970, %v3971
        %v4066 = vunpack.c.l.s4 1983009808
        %v4067 = vunpack.c.0.s8 %v4066
        %v4068 = vlaneseq
        %v4069 = vshrl.u32 %v4068, 7
        %v4070 = vsub.s32 %v4067, %v4069
        %v4071 = vrot.slane %v4064, %v4070
        %v4072 = vcombine.low %v4047, %v4055
        %v4073 = vcombine.high %v4047, %v4055
        %v4075 = vunpack.c.l.s4 1934713408
        %v4076 = vunpack.c.0.s8 %v4075
        %v4077 = vlaneseq
        %v4078 = vshrl.u32 %v4077, 7
        %v4079 = vsub.s32 %v4076, %v4078
        %v4080 = vrot.slane %v4072, %v4079
        %v4082 = vunpack.c.l.s4 1934713408
        %v4083 = vunpack.c.0.s8 %v4082
        %v4084 = vlaneseq
        %v4085 = vshrl.u32 %v4084, 7
        %v4086 = vsub.s32 %v4083, %v4085
        %v4087 = vrot.slane %v4073, %v4086
        %v4088 = vcombine.low %v4063, %v4071
        %v4089 = vcombine.high %v4063, %v4071
        %v4091 = vunpack.c.l.s4 1934713408
        %v4092 = vunpack.c.0.s8 %v4091
        %v4093 = vlaneseq
        %v4094 = vshrl.u32 %v4093, 7
        %v4095 = vsub.s32 %v4092, %v4094
        %v4096 = vrot.slane %v4088, %v4095
        %v4098 = vunpack.c.l.s4 1934713408
        %v4099 = vunpack.c.0.s8 %v4098
        %v4100 = vlaneseq
        %v4101 = vshrl.u32 %v4100, 7
        %v4102 = vsub.s32 %v4099, %v4101
        %v4103 = vrot.slane %v4089, %v4102
        %v4104 = vcombine.low %v4080, %v4096
        %v4105 = vcombine.high %v4080, %v4096
        %v4106 = vcombine.low %v4087, %v4103
        %v4107 = vcombine.high %v4087, %v4103
        %4110 = vrot.lane.b32.xlu0 %v4037, 8
        %v4111 = vpop.permute.xlu0 %4110
        %4112 = vrot.lane.b32.xlu0 %v4105, 8
        %v4113 = vpop.permute.xlu0 %4112
        %4118 = vrot.lane.b32.xlu0 %v4038, 16
        %v4119 = vpop.permute.xlu0 %4118
        %4120 = vrot.lane.b32.xlu0 %v4106, 16
        %v4121 = vpop.permute.xlu0 %4120
        %4126 = vrot.lane.b32.xlu0 %v4039, 24
        %v4127 = vpop.permute.xlu0 %4126
        %4128 = vrot.lane.b32.xlu0 %v4107, 24
        %v4129 = vpop.permute.xlu0 %4128
        %v4132 = vsel %vm1812, %v4036, %v4111
        %v4133 = vsel %vm1812, %v4104, %v4113
        %v4134 = vsel %vm2001, %v4132, %v4119
        %v4135 = vsel %vm2001, %v4133, %v4121
        %v4136 = vsel %vm2570, %v4134, %v4127
        %v4137 = vsel %vm2570, %v4135, %v4129
        %v4138 = vpack.c.bf16 %v2572, %v2571
        %v4139 = vpack.c.bf16 %v4137, %v4136
        %v4140 = vld [vmem:[%s681] sm:$0xf]
        %v4141 = vld [vmem:[%s681 + $0x4] sm:$0xf]
        %v4142 = vld [vmem:[%s681 + $0x8] sm:$0xf]
        %v4143 = vld [vmem:[%s681 + $0xc] sm:$0xf]
        %v4144 = vld [vmem:[%s689] sm:$0x1]
        %v4146 = vlaneseq
        %v4147 = vshrl.u32 %v4146, 7
        %v4148 = vsub.s32 0, %v4147
        %v4149 = vrot.slane %v4144, %v4148
        %v4155 = vunpack.c.l.b16 %v4140
        %v4156 = vunpack.c.l.b16 %v4141
        %v4157 = vunpack.c.l.b16 %v4142
        %v4158 = vunpack.c.l.b16 %v4143
        %v4159 = vpack.c.b16 %v4156, %v4155
        %v4160 = vpack.c.b16 %v4158, %v4157
        %v4164 = vsel %vm850, %v4138, 0
        %v4167 = vsel %vm850, %v4139, 0
        %4169 = vmatprep.subr.bf16.mxu0 0
        %4170 = vmatpush1.bf16.msra.mxu0 %v4159
        %4171 = vmatprep.subr.bf16.mxu0 0
        %4172 = vmatpush1.bf16.msra.mxu0 %v4160
        %4173 = vmatprep.subr.bf16.mxu0 0
        %4174 = vmatpush1.bf16.msra.mxu0 0
        %4175 = vmatprep.subr.bf16.mxu0 0
        %4176 = vmatpush1.bf16.msra.mxu0 0
        %4177 = vmatprep.subr.bf16.mxu0 0
        %4178 = vmatpush1.bf16.msra.mxu0 0
        %4179 = vmatprep.subr.bf16.mxu0 0
        %4180 = vmatpush1.bf16.msra.mxu0 0
        %4181 = vmatprep.subr.bf16.mxu0 0
        %4182 = vmatpush1.bf16.msra.mxu0 0
        %4183 = vmatprep.subr.bf16.mxu0 0
        %4184 = vmatpush1.bf16.msra.mxu0 0
        %4185 = vmatprep.subr.bf16.mxu0 0
        %4186 = vmatpush1.bf16.msra.mxu0 0
        %4187 = vmatprep.subr.bf16.mxu0 0
        %4188 = vmatpush1.bf16.msra.mxu0 0
        %4189 = vmatprep.subr.bf16.mxu0 0
        %4190 = vmatpush1.bf16.msra.mxu0 0
        %4191 = vmatprep.subr.bf16.mxu0 0
        %4192 = vmatpush1.bf16.msra.mxu0 0
        %4193 = vmatprep.subr.bf16.mxu0 0
        %4194 = vmatpush1.bf16.msra.mxu0 0
        %4195 = vmatprep.subr.bf16.mxu0 0
        %4196 = vmatpush1.bf16.msra.mxu0 0
        %4197 = vmatprep.subr.bf16.mxu0 0
        %4198 = vmatpush1.bf16.msra.mxu0 0
        %4199 = vmatprep.subr.bf16.mxu0 0
        %4200 = vmatpush1.bf16.msra.mxu0 0
        %4201 = vmatprep.mubr.bf16.mxu0 0
        %4202 = vmatmul.mubr.bf16.gmra.mrb[0].mxu0 %v4164
        %v4203 = vpop.f32.mrb[0].mxu0
        %v4204 = vadd.f32 %v4149, %v4203
        %v4205 = vpop.f32.mrb[0].mxu0
        %v4206 = vpop.f32.mrb[0].mxu0
        %v4207 = vadd.f32 %v4149, %v4206
        %v4208 = vpop.f32.mrb[0].mxu0
        %4209 = vmatprep.mubr.bf16.mxu0 0
        %4210 = vmatmul.mubr.bf16.gmra.mrb[0].mxu0 %v4167
        %v4211 = vpop.f32.mrb[0].mxu0
        %v4212 = vadd.f32 %v4149, %v4211
        %v4213 = vpop.f32.mrb[0].mxu0
        %v4214 = vpop.f32.mrb[0].mxu0
        %v4215 = vadd.f32 %v4149, %v4214
        %v4216 = vpop.f32.mrb[0].mxu0
        %4217 = vdwg.mxu0
        %v4218 = vadd.f32 %v844, %v4204
        %v4219 = vadd.f32 %v845, %v4207
        %v4220 = vadd.f32 %v846, %v4212
        %v4221 = vadd.f32 %v847, %v4215
        %v4222 = vld [vmem:[%s697] sm:$0x1]
        %v4223 = vld [vmem:[%s705] sm:$0x1]
        %v4224 = vsel %vm850, %v4218, 0.0
        %4225 = vadd.xlane.f32.xlu0 %v4224
        %v4226 = vpop.xlane.xlu0 %4225
        %v4227 = vsel %vm850, %v4219, 0.0
        %4228 = vadd.xlane.f32.xlu0 %v4227
        %v4229 = vpop.xlane.xlu0 %4228
        %v4230 = vsel %vm850, %v4220, 0.0
        %4231 = vadd.xlane.f32.xlu0 %v4230
        %v4232 = vpop.xlane.xlu0 %4231
        %v4233 = vsel %vm850, %v4221, 0.0
        %4234 = vadd.xlane.f32.xlu0 %v4233
        %v4235 = vpop.xlane.xlu0 %4234
        %v4236 = vmul.f32 %v4226, %v863
        %v4237 = vmul.f32 %v4229, %v863
        %v4238 = vmul.f32 %v4232, %v863
        %v4239 = vmul.f32 %v4235, %v863
        %v4240 = vsub.f32 %v4218, %v4236
        %v4241 = vsub.f32 %v4219, %v4237
        %v4242 = vsub.f32 %v4220, %v4238
        %v4243 = vsub.f32 %v4221, %v4239
        %v4244 = vmul.f32 %v4240, %v4240
        %v4245 = vmul.f32 %v4241, %v4241
        %v4246 = vmul.f32 %v4242, %v4242
        %v4247 = vmul.f32 %v4243, %v4243
        %v4248 = vsel %vm850, %v4244, 0.0
        %4249 = vadd.xlane.f32.xlu0 %v4248
        %v4250 = vpop.xlane.xlu0 %4249
        %v4251 = vsel %vm850, %v4245, 0.0
        %4252 = vadd.xlane.f32.xlu0 %v4251
        %v4253 = vpop.xlane.xlu0 %4252
        %v4254 = vsel %vm850, %v4246, 0.0
        %4255 = vadd.xlane.f32.xlu0 %v4254
        %v4256 = vpop.xlane.xlu0 %4255
        %v4257 = vsel %vm850, %v4247, 0.0
        %4258 = vadd.xlane.f32.xlu0 %v4257
        %v4259 = vpop.xlane.xlu0 %4258
        %v4260 = vmul.f32 %v4250, %v863
        %v4261 = vmul.f32 %v4253, %v863
        %v4262 = vmul.f32 %v4256, %v863
        %v4263 = vmul.f32 %v4259, %v863
        %v4264 = vadd.f32 %v4260, 1e-05
        %v4265 = vadd.f32 %v4261, 1e-05
        %v4266 = vadd.f32 %v4262, 1e-05
        %v4267 = vadd.f32 %v4263, 1e-05
        %v4268 = vrsqrt.pop %v4264
        %v4269 = vrsqrt.pop %v4265
        %v4270 = vrsqrt.pop %v4266
        %v4271 = vrsqrt.pop %v4267
        %v4272 = vmul.f32 %v4240, %v4268
        %v4273 = vmul.f32 %v4241, %v4269
        %v4274 = vmul.f32 %v4242, %v4270
        %v4275 = vmul.f32 %v4243, %v4271
        %v4277 = vlaneseq
        %v4278 = vshrl.u32 %v4277, 7
        %v4279 = vsub.s32 0, %v4278
        %v4280 = vrot.slane %v4222, %v4279
        %v4282 = vmul.f32 %v4272, %v4280
        %v4283 = vmul.f32 %v4273, %v4280
        %v4284 = vmul.f32 %v4274, %v4280
        %v4285 = vmul.f32 %v4275, %v4280
        %v4287 = vlaneseq
        %v4288 = vshrl.u32 %v4287, 7
        %v4289 = vsub.s32 0, %v4288
        %v4290 = vrot.slane %v4223, %v4289
        %v4292 = vadd.f32 %v4282, %v4290
        %v4293 = vadd.f32 %v4283, %v4290
        %v4294 = vadd.f32 %v4284, %v4290
        %v4295 = vadd.f32 %v4285, %v4290
        %v4296 = vpack.c.bf16 %v4293, %v4292
        %v4297 = vpack.c.bf16 %v4295, %v4294
        %v4298 = vld [vmem:[%s714] sm:$0xf]
        %v4299 = vld [vmem:[%s714 + $0x4] sm:$0xf]
        %v4300 = vld [vmem:[%s714 + $0x8] sm:$0xf]
        %v4301 = vld [vmem:[%s714 + $0xc] sm:$0xf]
        %v4302 = vld [vmem:[%s722] sm:$0x1]
        %v4304 = vlaneseq
        %v4305 = vshrl.u32 %v4304, 7
        %v4306 = vsub.s32 0, %v4305
        %v4307 = vrot.slane %v4302, %v4306
        %v4313 = vunpack.c.l.b16 %v4298
        %v4314 = vunpack.c.l.b16 %v4299
        %v4315 = vunpack.c.l.b16 %v4300
        %v4316 = vunpack.c.l.b16 %v4301
        %v4317 = vpack.c.b16 %v4314, %v4313
        %v4318 = vpack.c.b16 %v4316, %v4315
        %v4322 = vsel %vm850, %v4296, 0
        %v4325 = vsel %vm850, %v4297, 0
        %4327 = vmatprep.subr.bf16.mxu0 0
        %4328 = vmatpush1.bf16.msra.mxu0 %v4317
        %4329 = vmatprep.subr.bf16.mxu0 0
        %4330 = vmatpush1.bf16.msra.mxu0 %v4318
        %4331 = vmatprep.subr.bf16.mxu0 0
        %4332 = vmatpush1.bf16.msra.mxu0 0
        %4333 = vmatprep.subr.bf16.mxu0 0
        %4334 = vmatpush1.bf16.msra.mxu0 0
        %4335 = vmatprep.subr.bf16.mxu0 0
        %4336 = vmatpush1.bf16.msra.mxu0 0
        %4337 = vmatprep.subr.bf16.mxu0 0
        %4338 = vmatpush1.bf16.msra.mxu0 0
        %4339 = vmatprep.subr.bf16.mxu0 0
        %4340 = vmatpush1.bf16.msra.mxu0 0
        %4341 = vmatprep.subr.bf16.mxu0 0
        %4342 = vmatpush1.bf16.msra.mxu0 0
        %4343 = vmatprep.subr.bf16.mxu0 0
        %4344 = vmatpush1.bf16.msra.mxu0 0
        %4345 = vmatprep.subr.bf16.mxu0 0
        %4346 = vmatpush1.bf16.msra.mxu0 0
        %4347 = vmatprep.subr.bf16.mxu0 0
        %4348 = vmatpush1.bf16.msra.mxu0 0
        %4349 = vmatprep.subr.bf16.mxu0 0
        %4350 = vmatpush1.bf16.msra.mxu0 0
        %4351 = vmatprep.subr.bf16.mxu0 0
        %4352 = vmatpush1.bf16.msra.mxu0 0
        %4353 = vmatprep.subr.bf16.mxu0 0
        %4354 = vmatpush1.bf16.msra.mxu0 0
        %4355 = vmatprep.subr.bf16.mxu0 0
        %4356 = vmatpush1.bf16.msra.mxu0 0
        %4357 = vmatprep.subr.bf16.mxu0 0
        %4358 = vmatpush1.bf16.msra.mxu0 0
        %4359 = vmatprep.mubr.bf16.mxu0 0
        %4360 = vmatmul.mubr.bf16.gmra.mrb[0].mxu0 %v4322
        %v4361 = vpop.f32.mrb[0].mxu0
        %v4362 = vadd.f32 %v4307, %v4361
        %v4363 = vpop.f32.mrb[0].mxu0
        %v4364 = vpop.f32.mrb[0].mxu0
        %v4365 = vadd.f32 %v4307, %v4364
        %v4366 = vpop.f32.mrb[0].mxu0
        %4367 = vmatprep.mubr.bf16.mxu0 0
        %4368 = vmatmul.mubr.bf16.gmra.mrb[0].mxu0 %v4325
        %v4369 = vpop.f32.mrb[0].mxu0
        %v4370 = vadd.f32 %v4307, %v4369
        %v4371 = vpop.f32.mrb[0].mxu0
        %v4372 = vpop.f32.mrb[0].mxu0
        %v4373 = vadd.f32 %v4307, %v4372
        %v4374 = vpop.f32.mrb[0].mxu0
        %4375 = vdwg.mxu0
        %v4376 = vmul.f32 %v4362, %v4362
        %v4377 = vmul.f32 %v4365, %v4365
        %v4378 = vmul.f32 %v4370, %v4370
        %v4379 = vmul.f32 %v4373, %v4373
        %v4380 = vmul.f32 %v4362, %v4376
        %v4381 = vmul.f32 %v4365, %v4377
        %v4382 = vmul.f32 %v4370, %v4378
        %v4383 = vmul.f32 %v4373, %v4379
        %v4384 = vmul.f32 %v4380, 0.044715
        %v4385 = vmul.f32 %v4381, 0.044715
        %v4386 = vmul.f32 %v4382, 0.044715
        %v4387 = vmul.f32 %v4383, 0.044715
        %v4388 = vadd.f32 %v4362, %v4384
        %v4389 = vadd.f32 %v4365, %v4385
        %v4390 = vadd.f32 %v4370, %v4386
        %v4391 = vadd.f32 %v4373, %v4387
        %v4392 = vmul.f32 %v4388, 0.7978846
        %v4393 = vmul.f32 %v4389, 0.7978846
        %v4394 = vmul.f32 %v4390, 0.7978846
        %v4395 = vmul.f32 %v4391, 0.7978846
        %v4396 = vtanh.pop %v4392
        %v4397 = vtanh.pop %v4393
        %v4398 = vtanh.pop %v4394
        %v4399 = vtanh.pop %v4395
        %v4400 = vadd.f32 %v4396, 1.0
        %v4401 = vadd.f32 %v4397, 1.0
        %v4402 = vadd.f32 %v4398, 1.0
        %v4403 = vadd.f32 %v4399, 1.0
        %v4404 = vmul.f32 %v4400, 0.5
        %v4405 = vmul.f32 %v4401, 0.5
        %v4406 = vmul.f32 %v4402, 0.5
        %v4407 = vmul.f32 %v4403, 0.5
        %v4408 = vmul.f32 %v4362, %v4404
        %v4409 = vmul.f32 %v4365, %v4405
        %v4410 = vmul.f32 %v4370, %v4406
        %v4411 = vmul.f32 %v4373, %v4407
        %v4412 = vpack.c.bf16 %v4409, %v4408
        %v4413 = vpack.c.bf16 %v4411, %v4410
        %v4414 = vld [vmem:[%s731] sm:$0xf]
        %v4415 = vld [vmem:[%s731 + $0x4] sm:$0xf]
        %v4416 = vld [vmem:[%s731 + $0x8] sm:$0xf]
        %v4417 = vld [vmem:[%s731 + $0xc] sm:$0xf]
        %v4418 = vld [vmem:[%s731 + $0x10] sm:$0xf]
        %v4419 = vld [vmem:[%s731 + $0x14] sm:$0xf]
        %v4420 = vld [vmem:[%s731 + $0x18] sm:$0xf]
        %v4421 = vld [vmem:[%s731 + $0x1c] sm:$0xf]
        %v4422 = vld [vmem:[%s731 + $0x20] sm:$0xf]
        %v4423 = vld [vmem:[%s731 + $0x24] sm:$0xf]
        %v4424 = vld [vmem:[%s731 + $0x28] sm:$0xf]
        %v4425 = vld [vmem:[%s731 + $0x2c] sm:$0xf]
        %v4426 = vld [vmem:[%s731 + $0x30] sm:$0xf]
        %v4427 = vld [vmem:[%s731 + $0x34] sm:$0xf]
        %v4428 = vld [vmem:[%s731 + $0x38] sm:$0xf]
        %v4429 = vld [vmem:[%s731 + $0x3c] sm:$0xf]
        %v4430 = vld [vmem:[%s739] sm:$0x1]
        %v4432 = vlaneseq
        %v4433 = vshrl.u32 %v4432, 7
        %v4434 = vsub.s32 0, %v4433
        %v4435 = vrot.slane %v4430, %v4434
        %v4453 = vunpack.c.l.b16 %v4414
        %v4454 = vunpack.c.l.b16 %v4415
        %v4455 = vunpack.c.l.b16 %v4416
        %v4456 = vunpack.c.l.b16 %v4417
        %v4457 = vunpack.c.l.b16 %v4418
        %v4458 = vunpack.c.l.b16 %v4419
        %v4459 = vunpack.c.l.b16 %v4420
        %v4460 = vunpack.c.l.b16 %v4421
        %v4461 = vunpack.c.l.b16 %v4422
        %v4462 = vunpack.c.l.b16 %v4423
        %v4463 = vunpack.c.l.b16 %v4424
        %v4464 = vunpack.c.l.b16 %v4425
        %v4465 = vunpack.c.l.b16 %v4426
        %v4466 = vunpack.c.l.b16 %v4427
        %v4467 = vunpack.c.l.b16 %v4428
        %v4468 = vunpack.c.l.b16 %v4429
        %v4469 = vpack.c.b16 %v4454, %v4453
        %v4470 = vpack.c.b16 %v4456, %v4455
        %v4471 = vpack.c.b16 %v4458, %v4457
        %v4472 = vpack.c.b16 %v4460, %v4459
        %v4473 = vpack.c.b16 %v4462, %v4461
        %v4474 = vpack.c.b16 %v4464, %v4463
        %v4475 = vpack.c.b16 %v4466, %v4465
        %v4476 = vpack.c.b16 %v4468, %v4467
        %4485 = vmatprep.subr.bf16.mxu0 0
        %4486 = vmatpush1.bf16.msra.mxu0 %v4469
        %4487 = vmatprep.subr.bf16.mxu0 0
        %4488 = vmatpush1.bf16.msra.mxu0 %v4470
        %4489 = vmatprep.subr.bf16.mxu0 0
        %4490 = vmatpush1.bf16.msra.mxu0 %v4471
        %4491 = vmatprep.subr.bf16.mxu0 0
        %4492 = vmatpush1.bf16.msra.mxu0 %v4472
        %4493 = vmatprep.subr.bf16.mxu0 0
        %4494 = vmatpush1.bf16.msra.mxu0 %v4473
        %4495 = vmatprep.subr.bf16.mxu0 0
        %4496 = vmatpush1.bf16.msra.mxu0 %v4474
        %4497 = vmatprep.subr.bf16.mxu0 0
        %4498 = vmatpush1.bf16.msra.mxu0 %v4475
        %4499 = vmatprep.subr.bf16.mxu0 0
        %4500 = vmatpush1.bf16.msra.mxu0 %v4476
        %4501 = vmatprep.subr.bf16.mxu0 0
        %4502 = vmatpush1.bf16.msra.mxu0 0
        %4503 = vmatprep.subr.bf16.mxu0 0
        %4504 = vmatpush1.bf16.msra.mxu0 0
        %4505 = vmatprep.subr.bf16.mxu0 0
        %4506 = vmatpush1.bf16.msra.mxu0 0
        %4507 = vmatprep.subr.bf16.mxu0 0
        %4508 = vmatpush1.bf16.msra.mxu0 0
        %4509 = vmatprep.subr.bf16.mxu0 0
        %4510 = vmatpush1.bf16.msra.mxu0 0
        %4511 = vmatprep.subr.bf16.mxu0 0
        %4512 = vmatpush1.bf16.msra.mxu0 0
        %4513 = vmatprep.subr.bf16.mxu0 0
        %4514 = vmatpush1.bf16.msra.mxu0 0
        %4515 = vmatprep.subr.bf16.mxu0 0
        %4516 = vmatpush1.bf16.msra.mxu0 0
        %4517 = vmatprep.mubr.bf16.mxu0 0
        %4518 = vmatmul.mubr.bf16.gmra.mrb[0].mxu0 %v4412
        %v4519 = vpop.f32.mrb[0].mxu0
        %v4520 = vadd.f32 %v4435, %v4519
        %v4521 = vpop.f32.mrb[0].mxu0
        %v4522 = vpop.f32.mrb[0].mxu0
        %v4523 = vadd.f32 %v4435, %v4522
        %v4524 = vpop.f32.mrb[0].mxu0
        %4525 = vmatprep.mubr.bf16.mxu0 0
        %4526 = vmatmul.mubr.bf16.gmra.mrb[0].mxu0 %v4413
        %v4527 = vpop.f32.mrb[0].mxu0
        %v4528 = vadd.f32 %v4435, %v4527
        %v4529 = vpop.f32.mrb[0].mxu0
        %v4530 = vpop.f32.mrb[0].mxu0
        %v4531 = vadd.f32 %v4435, %v4530
        %v4532 = vpop.f32.mrb[0].mxu0
        %4533 = vdwg.mxu0
        %v4534 = vadd.f32 %v4218, %v4520
        %v4535 = vadd.f32 %v4219, %v4523
        %v4536 = vadd.f32 %v4220, %v4528
        %v4537 = vadd.f32 %v4221, %v4531
        %4538 = vst.msk [vmem:[#allocation2] sm:$0xff] %vm850, %v4534
        %4539 = vst.msk [vmem:[#allocation2 + $0x8] sm:$0xff] %vm850, %v4535
        %4540 = vst.msk [vmem:[#allocation2 + $0x10] sm:$0xff] %vm850, %v4536
        %4541 = vst.msk [vmem:[#allocation2 + $0x18] sm:$0xff] %vm850, %v4537
        %p4542 = scmp.eq.s32.totalorder %s52, 1
        // Predicated region
        $region121: #{tpu_custom_call.1} parent=67 // pred_check
          %p4543 = pneg %p4542
        $region122: #{tpu_custom_call.1} parent=67 // pred_check_branch
          %4545 = sbr.rel (%p4543) target = $region124
        $region123: #{tpu_custom_call.1} parent=67 // pred_region
          %4546 = vst.msk [vmem:[%s827] sm:$0xff] %vm850, %v4535
          %4547 = vst.msk [vmem:[%s827 + $0x8] sm:$0xff] %vm850, %v4537
        $region124: #{tpu_custom_call.1} parent=67 // pred_fallthru
          _
        %s4548 = sand.u32 %s379, 1
        %s4549 = scalar_lea.sflag [#allocation5], %s4548
        %s4550 = sand.u32 %s379, 1
        %s4551 = smul.addr %s4550, 16
        %s4552 = scalar_lea.vmem [#allocation23], %s4551
        // Predicated region
        $region125: #{tpu_custom_call.1} parent=67 // pred_check
          %p4553 = pneg %p389
        $region126: #{tpu_custom_call.1} parent=67 // pred_check_branch
          %4555 = sbr.rel (%p4553) target = $region128
        $region127: #{tpu_custom_call.1} parent=67 // pred_region
          %s4556 = smul.u32 2, %s51
          %s4558 = ssub.s32 256, 256
          %4559 = vsyncadd %s4549, %s4558
          %s4560 = smul.addr %s4556, 128
          %s4561 = scalar_lea.hbm %s12, %s4560
          %s4562 = sshll.u32 %s4552, 4
          %s4563 = int_to_ptr.vmem [resolvable:$true] %s4562
          %4568 = dma.vmem_to_hbm [thread:$0]  %s4563, 256, %s4561, %s4549, 128, 128, 8
        $region128: #{tpu_custom_call.1} parent=67 // pred_fallthru
          _
      $region68: #{tpu_custom_call.1} parent=5 // pred_fallthru
        _
      %p4569 = scmp.le.s32.totalorder 2, %s42
      // Predicated region
      $region129: #{tpu_custom_call.1} parent=5 // pred_check
        %p4570 = pneg %p4569
      $region130: #{tpu_custom_call.1} parent=5 // pred_check_branch
        %4572 = sbr.rel (%p4570) target = $region132
      $region131: #{tpu_custom_call.1} parent=5 // pred_region
        %s4573 = ssub.s32 %s42, 2
        // Predicated region
        $region133: #{tpu_custom_call.1} parent=131 // pred_check
          %p4574 = pneg %p395
        $region134: #{tpu_custom_call.1} parent=131 // pred_check_branch
          %4576 = sbr.rel (%p4574) target = $region136
        $region135: #{tpu_custom_call.1} parent=131 // pred_region
          %s4577 = sand.u32 %s380, 1
          %s4578 = scalar_lea.sflag [#allocation5], %s4577
          %s4579 = sand.u32 %s380, 1
          %s4580 = smul.addr %s4579, 16
          %s4581 = scalar_lea.vmem [#allocation23], %s4580
          %4582 = dma.done %s4578, 256
        $region136: #{tpu_custom_call.1} parent=131 // pred_fallthru
          _
      $region132: #{tpu_custom_call.1} parent=5 // pred_fallthru
        _
    $region6: #{tpu_custom_call.1} parent=1 // loop_footer
      %s46 = sadd.s32 1, %s42
    $region7: #{tpu_custom_call.1} parent=1 // loop_footer_branch
      %41 = sbr.rel target = $region3
    $region8: #{tpu_custom_call.1} parent=1 // loop_exit
      _
    %4583 = vsyncpa [#allocation4], 1
    %s4584 = scalar_lea.sflag [#allocation4], 1
    %4585 = vsyncpa %s4584, 1
    %4586 = vsyncpa [#allocation7], 1
    %s4587 = scalar_lea.sflag [#allocation7], 1
    %4588 = vsyncpa %s4587, 1
    %4589 = vsyncpa [#allocation10], 1
    %s4590 = scalar_lea.sflag [#allocation10], 1
    %4591 = vsyncpa %s4590, 1
    %4592 = vsyncpa [#allocation13], 1
    %s4593 = scalar_lea.sflag [#allocation13], 1
    %4594 = vsyncpa %s4593, 1
    %4595 = vsyncpa [#allocation16], 1
    %s4596 = scalar_lea.sflag [#allocation16], 1
    %4597 = vsyncpa %s4596, 1
    %4598 = vsyncpa [#allocation19], 1
    %s4599 = scalar_lea.sflag [#allocation19], 1
    %4600 = vsyncpa %s4599, 1
    %4601 = vsyncpa [#allocation22], 1
    %s4602 = scalar_lea.sflag [#allocation22], 1
    %4603 = vsyncpa %s4602, 1
    %4604 = vsyncpa [#allocation5], 1
    %s4605 = scalar_lea.sflag [#allocation5], 1
    %4606 = vsyncpa %s4605, 1

</llo_original>
